<compile_context>
chip_gen: v6e
topology: v6e:2x2x1
jax: 0.10.0
libtpu: 0.0.40
codegen_flags: <defaults>
</compile_context>

<pallas_src>
import functools

import jax
import jax.numpy as jnp
import numpy as np
from jax import lax
from jax.experimental import pallas as pl
from jax.experimental.pallas import tpu as pltpu


def _inception_res_c_kernel(
    x_ref,
    w01_ref, s01_ref, c01_ref,                    # fused branch_0 / branch_1-conv1 (1x1)
    w2l_ref, w2m_ref, w2r_ref, s2_ref, c2_ref,    # branch_1 conv2 : (1,3), pad (0,1)
    w3u_ref, w3m_ref, w3d_ref, s3_ref, c3_ref,    # branch_1 conv3 : (3,1), pad (1,0)
    wa0_ref, wa1_ref, sa_ref, ca_ref,             # branch_all : 1x1 split over the concat
    o_ref,
    *, height, width, res_scale, c_pad):
    f32 = jnp.float32
    bf16 = jnp.bfloat16
    hw = height * width
    tm = x_ref.shape[0]          # rows in this tile (multiple of hw)

    def mm(a, b_ref):
        return jnp.dot(a, b_ref[...], preferred_element_type=f32)

    def bn_relu(y, s_ref, c_ref):
        # folded BatchNorm (scale/bias) + ReLU, in f32
        return jnp.maximum(y * s_ref[...] + c_ref[...], 0.0)

    # relu(x) only in bf16 for the MXU; the f32 copy is recomputed at the end
    # so it is not held live across the whole matmul chain.
    xb = jnp.maximum(x_ref[...], 0.0).astype(bf16)                 # (TM, C)

    # fused branch_0 / branch_1-conv1 : single K=C matmul, split on lane 128
    b01 = bn_relu(mm(xb, w01_ref), s01_ref, c01_ref)               # (TM, 2*c_pad)
    b0 = b01[:, :c_pad].astype(bf16)
    b1f = b01[:, c_pad:]                                           # f32, rolled below
    b1 = b1f.astype(bf16)

    # row index within the tile (tiles always start on an image boundary)
    r = lax.broadcasted_iota(jnp.int32, (tm, 1), 0)

    # branch_1 conv2 : (1,3) conv, padding (0,1) -> shifts along w
    #   left tap reads in[h, w-1]  -> roll down by 1, zero where w == 0
    #   right tap reads in[h, w+1] -> roll up by 1 (shift tm-1), zero at w == W-1
    left = jnp.where(r % width == 0, 0.0,
                     pltpu.roll(b1f, 1, 0)).astype(bf16)
    right = jnp.where(r % width == width - 1, 0.0,
                      pltpu.roll(b1f, tm - 1, 0)).astype(bf16)
    y2 = mm(left, w2l_ref) + mm(b1, w2m_ref) + mm(right, w2r_ref)
    b2f = bn_relu(y2, s2_ref, c2_ref)                              # (TM, c_pad)
    b2 = b2f.astype(bf16)

    # branch_1 conv3 : (3,1) conv, padding (1,0) -> shifts along h
    #   up tap reads in[h-1, w]   -> roll down by W, zero where h == 0
    #   down tap reads in[h+1, w] -> roll up by W (shift tm-W), zero at h == H-1
    up = jnp.where(r % hw < width, 0.0,
                   pltpu.roll(b2f, width, 0)).astype(bf16)
    down = jnp.where(r % hw >= hw - width, 0.0,
                     pltpu.roll(b2f, tm - width, 0)).astype(bf16)
    y3 = mm(up, w3u_ref) + mm(b2, w3m_ref) + mm(down, w3d_ref)
    b3 = bn_relu(y3, s3_ref, c3_ref).astype(bf16)                  # (TM, c_pad)

    # branch_all : 1x1 conv over concat([b0, b3], channel) == split matmul
    x_new = bn_relu(mm(b0, wa0_ref) + mm(b3, wa1_ref), sa_ref, ca_ref)  # (TM, C)

    # TODO(synk): the reference forward computes `out = self.se(x_new)` but then
    # discards it (it returns x + x_new * scale), so the SE layer has no effect
    # on the output and is intentionally not computed here.

    o_ref[...] = (jnp.maximum(x_ref[...], 0.0)
                  + x_new * res_scale).astype(o_ref.dtype)


def _bn_fold(gamma, beta, mean, var, eps=1e-3):
    scale = gamma / jnp.sqrt(var + eps)
    bias = beta - mean * scale
    return (scale.reshape(1, -1).astype(jnp.float32),
            bias.reshape(1, -1).astype(jnp.float32))


def _pad2(a, rows, cols):
    r, c = a.shape
    return jnp.pad(a, ((0, rows - r), (0, cols - c)))


def init_params(key, planes=576):
    """Deterministic synthetic parameters (conv weights stored HWIO)."""
    c8, c7, c6 = planes // 8, planes // 7, planes // 6

    def basic(k, kh, kw, cin, cout):
        kw_, kg, kb, km, kv = jax.random.split(k, 5)
        return dict(
            w=jax.random.normal(kw_, (kh, kw, cin, cout), jnp.float32) * 0.05,
            gamma=jax.random.uniform(kg, (cout,), jnp.float32, 0.5, 1.5),
            beta=jax.random.normal(kb, (cout,), jnp.float32) * 0.1,
            mean=jax.random.normal(km, (cout,), jnp.float32) * 0.1,
            var=jax.random.uniform(kv, (cout,), jnp.float32, 0.5, 1.5),
        )

    k0, k1a, k1b, k1c, ka = jax.random.split(key, 5)
    return dict(
        b0=basic(k0, 1, 1, planes, c8),
        b1a=basic(k1a, 1, 1, planes, c8),
        b1b=basic(k1b, 1, 3, c8, c7),
        b1c=basic(k1c, 3, 1, c7, c6),
        ball=basic(ka, 1, 1, c8 + c6, planes),
    )


def inception_res_c(x_nchw, params, scale=1.0):
    x = jnp.transpose(x_nchw, (0, 2, 3, 1)).astype(jnp.float32)   # -> NHWC
    n, h, w, c = x.shape
    hw = h * w
    assert hw % 8 == 0, "H*W must be a multiple of 8 for the sublane tiling"
    x2 = x.reshape(n * hw, c)

    c8 = params["b0"]["w"].shape[-1]
    c7 = params["b1b"]["w"].shape[-1]
    c6 = params["b1c"]["w"].shape[-1]
    # pad every intermediate channel width to a 128-lane boundary
    c_pad = ((max(c8, c7, c6) + 127) // 128) * 128

    def fold(p):
        return _bn_fold(p["gamma"], p["beta"], p["mean"], p["var"])

    s0, c0 = fold(params["b0"])
    s1, c1 = fold(params["b1a"])
    s2, c2 = fold(params["b1b"])
    s3, c3 = fold(params["b1c"])
    sa, ca = fold(params["ball"])

    bf16 = jnp.bfloat16

    # fused branch_0 / branch_1-conv1 weights, each output padded to c_pad lanes
    w0 = _pad2(params["b0"]["w"][0, 0], c, c_pad)
    w1 = _pad2(params["b1a"]["w"][0, 0], c, c_pad)
    w01 = jnp.concatenate([w0, w1], axis=1).astype(bf16)           # (C, 2*c_pad)
    s01 = jnp.concatenate([_pad2(s0, 1, c_pad), _pad2(s1, 1, c_pad)], axis=1)
    c01 = jnp.concatenate([_pad2(c0, 1, c_pad), _pad2(c1, 1, c_pad)], axis=1)

    # (1,3) taps, padded to (c_pad, c_pad)
    w2l = _pad2(params["b1b"]["w"][0, 0], c_pad, c_pad).astype(bf16)
    w2m = _pad2(params["b1b"]["w"][0, 1], c_pad, c_pad).astype(bf16)
    w2r = _pad2(params["b1b"]["w"][0, 2], c_pad, c_pad).astype(bf16)
    s2p, c2p = _pad2(s2, 1, c_pad), _pad2(c2, 1, c_pad)

    # (3,1) taps, padded to (c_pad, c_pad)
    w3u = _pad2(params["b1c"]["w"][0, 0], c_pad, c_pad).astype(bf16)
    w3m = _pad2(params["b1c"]["w"][1, 0], c_pad, c_pad).astype(bf16)
    w3d = _pad2(params["b1c"]["w"][2, 0], c_pad, c_pad).astype(bf16)
    s3p, c3p = _pad2(s3, 1, c_pad), _pad2(c3, 1, c_pad)

    # branch_all, split over the channel concat; rows padded to c_pad
    wa = params["ball"]["w"][0, 0]                                 # (c8 + c6, C)
    wa0 = _pad2(wa[:c8], c_pad, c).astype(bf16)
    wa1 = _pad2(wa[c8:], c_pad, c).astype(bf16)

    flat = [w01, s01, c01,
            w2l, w2m, w2r, s2p, c2p,
            w3u, w3m, w3d, s3p, c3p,
            wa0, wa1, sa, ca]

    # Tile: whole images per grid step; M rows up to ~256 to fill the MXU.
    ipt = max(1, min(n, 256 // hw))
    while n % ipt:
        ipt -= 1
    tm = ipt * hw
    grid = (n // ipt,)

    kernel = functools.partial(_inception_res_c_kernel,
                               height=h, width=w, res_scale=scale, c_pad=c_pad)

    out2 = pl.pallas_call(
        kernel,
        out_shape=jax.ShapeDtypeStruct((n * hw, c), jnp.float32),
        grid_spec=pltpu.PrefetchScalarGridSpec(
            num_scalar_prefetch=0,
            grid=grid,
            in_specs=[pl.BlockSpec((tm, c), lambda i: (i, 0))]
                     + [pl.BlockSpec(a.shape, lambda i: (0, 0)) for a in flat],
            out_specs=pl.BlockSpec((tm, c), lambda i: (i, 0)),
        ),
        compiler_params=pltpu.CompilerParams(
            dimension_semantics=("parallel",)),
    )(x2, *flat)

    out = out2.reshape(n, h, w, c)
    return jnp.transpose(out, (0, 3, 1, 2))       # back to NCHW


# ---------------- pure-JAX reference (for correctness check) ----------------
def _basic_conv_ref(x, p, padding):
    y = lax.conv_general_dilated(
        x, p["w"], (1, 1), padding,
        dimension_numbers=("NHWC", "HWIO", "NHWC"),
        precision=lax.Precision.HIGHEST)
    y = (y - p["mean"]) / jnp.sqrt(p["var"] + 1e-3) * p["gamma"] + p["beta"]
    return jnp.maximum(y, 0.0)


def inception_res_c_ref(x_nchw, params, scale=1.0):
    x = jnp.transpose(x_nchw, (0, 2, 3, 1)).astype(jnp.float32)
    x = jnp.maximum(x, 0.0)
    b0 = _basic_conv_ref(x, params["b0"], [(0, 0), (0, 0)])
    b1 = _basic_conv_ref(x, params["b1a"], [(0, 0), (0, 0)])
    b1 = _basic_conv_ref(b1, params["b1b"], [(0, 0), (1, 1)])
    b1 = _basic_conv_ref(b1, params["b1c"], [(1, 1), (0, 0)])
    cat = jnp.concatenate([b0, b1], axis=-1)
    x_new = _basic_conv_ref(cat, params["ball"], [(0, 0), (0, 0)])
    out = x + x_new * scale
    return jnp.transpose(out, (0, 3, 1, 2))


if __name__ == "__main__":
    planes, H, W, N = 576, 8, 8, 2              # matches "input 8*8*576", batch 2
    key = jax.random.PRNGKey(0)
    kx, kp = jax.random.split(key)
    x = jax.random.normal(kx, (N, planes, H, W), jnp.float32)   # NCHW like PyTorch
    params = init_params(kp, planes)

    out = jax.block_until_ready(inception_res_c(x, params, scale=1.0))
    ref = jax.block_until_ready(inception_res_c_ref(x, params, scale=1.0))
    # Tolerance is loosened because the kernel feeds bf16 operands to the MXU
    # (f32 accumulate) while the reference runs pure-f32 HIGHEST-precision convs.
    np.testing.assert_allclose(np.asarray(out), np.asarray(ref), rtol=4e-2, atol=4e-2)
    print("KERNEL_OK")
</pallas_src>

<mosaic_0001>
module attributes {stable_mosaic.version = 11 : i64} {
  func.func @_inception_res_c_kernel(%arg0: i32, %arg1: memref<128x576xf32, #tpu.memory_space<vmem>>, %arg2: memref<576x256xbf16, #tpu.memory_space<vmem>>, %arg3: memref<1x256xf32, #tpu.memory_space<vmem>>, %arg4: memref<1x256xf32, #tpu.memory_space<vmem>>, %arg5: memref<128x128xbf16, #tpu.memory_space<vmem>>, %arg6: memref<128x128xbf16, #tpu.memory_space<vmem>>, %arg7: memref<128x128xbf16, #tpu.memory_space<vmem>>, %arg8: memref<1x128xf32, #tpu.memory_space<vmem>>, %arg9: memref<1x128xf32, #tpu.memory_space<vmem>>, %arg10: memref<128x128xbf16, #tpu.memory_space<vmem>>, %arg11: memref<128x128xbf16, #tpu.memory_space<vmem>>, %arg12: memref<128x128xbf16, #tpu.memory_space<vmem>>, %arg13: memref<1x128xf32, #tpu.memory_space<vmem>>, %arg14: memref<1x128xf32, #tpu.memory_space<vmem>>, %arg15: memref<128x576xbf16, #tpu.memory_space<vmem>>, %arg16: memref<128x576xbf16, #tpu.memory_space<vmem>>, %arg17: memref<1x576xf32, #tpu.memory_space<vmem>>, %arg18: memref<1x576xf32, #tpu.memory_space<vmem>>, %arg19: memref<128x576xf32, #tpu.memory_space<vmem>>) attributes {dimension_semantics = [#tpu.dimension_semantics<parallel>], iteration_bounds = array<i64: 1>, scalar_prefetch = 0 : i64, scratch_operands = 0 : i64, tpu.core_type = #tpu.core_type<tc>, window_params = [{transform_indices = @transform_0, window_bounds = array<i64: 128, 576>}, {pipeline_mode = #tpu.pipeline_mode<synchronous>, transform_indices = @transform_1, window_bounds = array<i64: 576, 256>}, {pipeline_mode = #tpu.pipeline_mode<synchronous>, transform_indices = @transform_2, window_bounds = array<i64: 1, 256>}, {pipeline_mode = #tpu.pipeline_mode<synchronous>, transform_indices = @transform_3, window_bounds = array<i64: 1, 256>}, {pipeline_mode = #tpu.pipeline_mode<synchronous>, transform_indices = @transform_4, window_bounds = array<i64: 128, 128>}, {pipeline_mode = #tpu.pipeline_mode<synchronous>, transform_indices = @transform_5, window_bounds = array<i64: 128, 128>}, {pipeline_mode = #tpu.pipeline_mode<synchronous>, transform_indices = @transform_6, window_bounds = array<i64: 128, 128>}, {pipeline_mode = #tpu.pipeline_mode<synchronous>, transform_indices = @transform_7, window_bounds = array<i64: 1, 128>}, {pipeline_mode = #tpu.pipeline_mode<synchronous>, transform_indices = @transform_8, window_bounds = array<i64: 1, 128>}, {pipeline_mode = #tpu.pipeline_mode<synchronous>, transform_indices = @transform_9, window_bounds = array<i64: 128, 128>}, {pipeline_mode = #tpu.pipeline_mode<synchronous>, transform_indices = @transform_10, window_bounds = array<i64: 128, 128>}, {pipeline_mode = #tpu.pipeline_mode<synchronous>, transform_indices = @transform_11, window_bounds = array<i64: 128, 128>}, {pipeline_mode = #tpu.pipeline_mode<synchronous>, transform_indices = @transform_12, window_bounds = array<i64: 1, 128>}, {pipeline_mode = #tpu.pipeline_mode<synchronous>, transform_indices = @transform_13, window_bounds = array<i64: 1, 128>}, {pipeline_mode = #tpu.pipeline_mode<synchronous>, transform_indices = @transform_14, window_bounds = array<i64: 128, 576>}, {pipeline_mode = #tpu.pipeline_mode<synchronous>, transform_indices = @transform_15, window_bounds = array<i64: 128, 576>}, {pipeline_mode = #tpu.pipeline_mode<synchronous>, transform_indices = @transform_16, window_bounds = array<i64: 1, 576>}, {pipeline_mode = #tpu.pipeline_mode<synchronous>, transform_indices = @transform_17, window_bounds = array<i64: 1, 576>}, {transform_indices = @transform_18, window_bounds = array<i64: 128, 576>}]} {
    %c0 = arith.constant 0 : index
    %c0_0 = arith.constant 0 : index
    %0 = vector.load %arg1[%c0, %c0_0] : memref<128x576xf32, #tpu.memory_space<vmem>>, vector<128x576xf32>
    %cst = arith.constant 0.000000e+00 : f32
    %1 = vector.broadcast %cst : f32 to vector<128x576xf32>
    %2 = arith.maximumf %0, %1 : vector<128x576xf32>
    %3 = arith.truncf %2 : vector<128x576xf32> to vector<128x576xbf16>
    %c0_1 = arith.constant 0 : index
    %c0_2 = arith.constant 0 : index
    %4 = vector.load %arg2[%c0_1, %c0_2] : memref<576x256xbf16, #tpu.memory_space<vmem>>, vector<576x256xbf16>
    %cst_3 = arith.constant dense<0.000000e+00> : vector<128x256xf32>
    %5 = tpu.matmul %3, %4, %cst_3 {dimension_numbers = #tpu.dot_dimension_numbers<[1], [0], [0], [1], [0, 0, 1, 1], [], []>} : vector<128x576xbf16>, vector<576x256xbf16>, vector<128x256xf32> -> vector<128x256xf32>
    %c0_4 = arith.constant 0 : index
    %c0_5 = arith.constant 0 : index
    %6 = vector.load %arg3[%c0_4, %c0_5] : memref<1x256xf32, #tpu.memory_space<vmem>>, vector<1x256xf32>
    %7 = vector.broadcast %6 : vector<1x256xf32> to vector<128x256xf32>
    %8 = arith.mulf %5, %7 : vector<128x256xf32>
    %c0_6 = arith.constant 0 : index
    %c0_7 = arith.constant 0 : index
    %9 = vector.load %arg4[%c0_6, %c0_7] : memref<1x256xf32, #tpu.memory_space<vmem>>, vector<1x256xf32>
    %10 = vector.broadcast %9 : vector<1x256xf32> to vector<128x256xf32>
    %11 = arith.addf %8, %10 : vector<128x256xf32>
    %cst_8 = arith.constant 0.000000e+00 : f32
    %12 = vector.broadcast %cst_8 : f32 to vector<128x256xf32>
    %13 = arith.maximumf %11, %12 : vector<128x256xf32>
    %14 = vector.extract_strided_slice %13 {offsets = [0, 0], sizes = [128, 128], strides = [1, 1]} : vector<128x256xf32> to vector<128x128xf32>
    %15 = arith.truncf %14 : vector<128x128xf32> to vector<128x128xbf16>
    %16 = vector.extract_strided_slice %13 {offsets = [0, 128], sizes = [128, 128], strides = [1, 1]} : vector<128x256xf32> to vector<128x128xf32>
    %17 = arith.truncf %16 : vector<128x128xf32> to vector<128x128xbf16>
    %18 = tpu.iota {dimensions = array<i32: 0>} : vector<128x1xi32>
    %c8_i32 = arith.constant 8 : i32
    %c0_i32 = arith.constant 0 : i32
    %19 = arith.cmpi eq, %c8_i32, %c0_i32 : i32
    %c1_i32 = arith.constant 1 : i32
    %20 = arith.select %19, %c1_i32, %c8_i32 : i32
    %21 = vector.broadcast %20 : i32 to vector<128x1xi32>
    %22 = arith.remsi %18, %21 : vector<128x1xi32>
    %c0_i32_9 = arith.constant 0 : i32
    %23 = vector.broadcast %c0_i32_9 : i32 to vector<128x1xi32>
    %24 = arith.cmpi ne, %22, %23 : vector<128x1xi32>
    %c0_i32_10 = arith.constant 0 : i32
    %25 = vector.broadcast %c0_i32_10 : i32 to vector<128x1xi32>
    %26 = arith.cmpi slt, %22, %25 : vector<128x1xi32>
    %c0_i32_11 = arith.constant 0 : i32
    %27 = arith.cmpi slt, %20, %c0_i32_11 : i32
    %28 = vector.broadcast %27 : i1 to vector<128x1xi1>
    %29 = vector.broadcast %28 : vector<128x1xi1> to vector<128x1xi1>
    %30 = arith.xori %26, %29 : vector<128x1xi1>
    %31 = arith.andi %30, %24 : vector<128x1xi1>
    %32 = vector.broadcast %20 : i32 to vector<128x1xi32>
    %33 = arith.addi %22, %32 : vector<128x1xi32>
    %34 = arith.select %31, %33, %22 : vector<128x1xi1>, vector<128x1xi32>
    %c0_i32_12 = arith.constant 0 : i32
    %35 = vector.broadcast %c0_i32_12 : i32 to vector<128x1xi32>
    %36 = arith.cmpi eq, %34, %35 : vector<128x1xi32>
    %c1_i32_13 = arith.constant 1 : i32
    %37 = tpu.dynamic_rotate %16 by %c1_i32_13 dim 0 : vector<128x128xf32>, i32 -> vector<128x128xf32>
    %cst_14 = arith.constant 0.000000e+00 : f32
    %38 = vector.shape_cast %36 : vector<128x1xi1> to vector<128x1xi1>
    %39 = vector.broadcast %38 : vector<128x1xi1> to vector<128x128xi1>
    %40 = vector.broadcast %cst_14 : f32 to vector<128x128xf32>
    %41 = arith.select %39, %40, %37 : vector<128x128xi1>, vector<128x128xf32>
    %42 = arith.truncf %41 : vector<128x128xf32> to vector<128x128xbf16>
    %c8_i32_15 = arith.constant 8 : i32
    %c0_i32_16 = arith.constant 0 : i32
    %43 = arith.cmpi eq, %c8_i32_15, %c0_i32_16 : i32
    %c1_i32_17 = arith.constant 1 : i32
    %44 = arith.select %43, %c1_i32_17, %c8_i32_15 : i32
    %45 = vector.broadcast %44 : i32 to vector<128x1xi32>
    %46 = arith.remsi %18, %45 : vector<128x1xi32>
    %c0_i32_18 = arith.constant 0 : i32
    %47 = vector.broadcast %c0_i32_18 : i32 to vector<128x1xi32>
    %48 = arith.cmpi ne, %46, %47 : vector<128x1xi32>
    %c0_i32_19 = arith.constant 0 : i32
    %49 = vector.broadcast %c0_i32_19 : i32 to vector<128x1xi32>
    %50 = arith.cmpi slt, %46, %49 : vector<128x1xi32>
    %c0_i32_20 = arith.constant 0 : i32
    %51 = arith.cmpi slt, %44, %c0_i32_20 : i32
    %52 = vector.broadcast %51 : i1 to vector<128x1xi1>
    %53 = vector.broadcast %52 : vector<128x1xi1> to vector<128x1xi1>
    %54 = arith.xori %50, %53 : vector<128x1xi1>
    %55 = arith.andi %54, %48 : vector<128x1xi1>
    %56 = vector.broadcast %44 : i32 to vector<128x1xi32>
    %57 = arith.addi %46, %56 : vector<128x1xi32>
    %58 = arith.select %55, %57, %46 : vector<128x1xi1>, vector<128x1xi32>
    %c7_i32 = arith.constant 7 : i32
    %59 = vector.broadcast %c7_i32 : i32 to vector<128x1xi32>
    %60 = arith.cmpi eq, %58, %59 : vector<128x1xi32>
    %c127_i32 = arith.constant 127 : i32
    %61 = tpu.dynamic_rotate %16 by %c127_i32 dim 0 : vector<128x128xf32>, i32 -> vector<128x128xf32>
    %cst_21 = arith.constant 0.000000e+00 : f32
    %62 = vector.shape_cast %60 : vector<128x1xi1> to vector<128x1xi1>
    %63 = vector.broadcast %62 : vector<128x1xi1> to vector<128x128xi1>
    %64 = vector.broadcast %cst_21 : f32 to vector<128x128xf32>
    %65 = arith.select %63, %64, %61 : vector<128x128xi1>, vector<128x128xf32>
    %66 = arith.truncf %65 : vector<128x128xf32> to vector<128x128xbf16>
    %c0_22 = arith.constant 0 : index
    %c0_23 = arith.constant 0 : index
    %67 = vector.load %arg5[%c0_22, %c0_23] : memref<128x128xbf16, #tpu.memory_space<vmem>>, vector<128x128xbf16>
    %cst_24 = arith.constant dense<0.000000e+00> : vector<128x128xf32>
    %68 = tpu.matmul %42, %67, %cst_24 {dimension_numbers = #tpu.dot_dimension_numbers<[1], [0], [0], [1], [0, 0, 1, 1], [], []>} : vector<128x128xbf16>, vector<128x128xbf16>, vector<128x128xf32> -> vector<128x128xf32>
    %c0_25 = arith.constant 0 : index
    %c0_26 = arith.constant 0 : index
    %69 = vector.load %arg6[%c0_25, %c0_26] : memref<128x128xbf16, #tpu.memory_space<vmem>>, vector<128x128xbf16>
    %cst_27 = arith.constant dense<0.000000e+00> : vector<128x128xf32>
    %70 = tpu.matmul %17, %69, %cst_27 {dimension_numbers = #tpu.dot_dimension_numbers<[1], [0], [0], [1], [0, 0, 1, 1], [], []>} : vector<128x128xbf16>, vector<128x128xbf16>, vector<128x128xf32> -> vector<128x128xf32>
    %71 = arith.addf %68, %70 : vector<128x128xf32>
    %c0_28 = arith.constant 0 : index
    %c0_29 = arith.constant 0 : index
    %72 = vector.load %arg7[%c0_28, %c0_29] : memref<128x128xbf16, #tpu.memory_space<vmem>>, vector<128x128xbf16>
    %cst_30 = arith.constant dense<0.000000e+00> : vector<128x128xf32>
    %73 = tpu.matmul %66, %72, %cst_30 {dimension_numbers = #tpu.dot_dimension_numbers<[1], [0], [0], [1], [0, 0, 1, 1], [], []>} : vector<128x128xbf16>, vector<128x128xbf16>, vector<128x128xf32> -> vector<128x128xf32>
    %74 = arith.addf %71, %73 : vector<128x128xf32>
    %c0_31 = arith.constant 0 : index
    %c0_32 = arith.constant 0 : index
    %75 = vector.load %arg8[%c0_31, %c0_32] : memref<1x128xf32, #tpu.memory_space<vmem>>, vector<1x128xf32>
    %76 = vector.broadcast %75 : vector<1x128xf32> to vector<128x128xf32>
    %77 = arith.mulf %74, %76 : vector<128x128xf32>
    %c0_33 = arith.constant 0 : index
    %c0_34 = arith.constant 0 : index
    %78 = vector.load %arg9[%c0_33, %c0_34] : memref<1x128xf32, #tpu.memory_space<vmem>>, vector<1x128xf32>
    %79 = vector.broadcast %78 : vector<1x128xf32> to vector<128x128xf32>
    %80 = arith.addf %77, %79 : vector<128x128xf32>
    %cst_35 = arith.constant 0.000000e+00 : f32
    %81 = vector.broadcast %cst_35 : f32 to vector<128x128xf32>
    %82 = arith.maximumf %80, %81 : vector<128x128xf32>
    %83 = arith.truncf %82 : vector<128x128xf32> to vector<128x128xbf16>
    %c64_i32 = arith.constant 64 : i32
    %c0_i32_36 = arith.constant 0 : i32
    %84 = arith.cmpi eq, %c64_i32, %c0_i32_36 : i32
    %c1_i32_37 = arith.constant 1 : i32
    %85 = arith.select %84, %c1_i32_37, %c64_i32 : i32
    %86 = vector.broadcast %85 : i32 to vector<128x1xi32>
    %87 = arith.remsi %18, %86 : vector<128x1xi32>
    %c0_i32_38 = arith.constant 0 : i32
    %88 = vector.broadcast %c0_i32_38 : i32 to vector<128x1xi32>
    %89 = arith.cmpi ne, %87, %88 : vector<128x1xi32>
    %c0_i32_39 = arith.constant 0 : i32
    %90 = vector.broadcast %c0_i32_39 : i32 to vector<128x1xi32>
    %91 = arith.cmpi slt, %87, %90 : vector<128x1xi32>
    %c0_i32_40 = arith.constant 0 : i32
    %92 = arith.cmpi slt, %85, %c0_i32_40 : i32
    %93 = vector.broadcast %92 : i1 to vector<128x1xi1>
    %94 = vector.broadcast %93 : vector<128x1xi1> to vector<128x1xi1>
    %95 = arith.xori %91, %94 : vector<128x1xi1>
    %96 = arith.andi %95, %89 : vector<128x1xi1>
    %97 = vector.broadcast %85 : i32 to vector<128x1xi32>
    %98 = arith.addi %87, %97 : vector<128x1xi32>
    %99 = arith.select %96, %98, %87 : vector<128x1xi1>, vector<128x1xi32>
    %c8_i32_41 = arith.constant 8 : i32
    %100 = vector.broadcast %c8_i32_41 : i32 to vector<128x1xi32>
    %101 = arith.cmpi slt, %99, %100 : vector<128x1xi32>
    %c8_i32_42 = arith.constant 8 : i32
    %102 = tpu.dynamic_rotate %82 by %c8_i32_42 dim 0 : vector<128x128xf32>, i32 -> vector<128x128xf32>
    %cst_43 = arith.constant 0.000000e+00 : f32
    %103 = vector.shape_cast %101 : vector<128x1xi1> to vector<128x1xi1>
    %104 = vector.broadcast %103 : vector<128x1xi1> to vector<128x128xi1>
    %105 = vector.broadcast %cst_43 : f32 to vector<128x128xf32>
    %106 = arith.select %104, %105, %102 : vector<128x128xi1>, vector<128x128xf32>
    %107 = arith.truncf %106 : vector<128x128xf32> to vector<128x128xbf16>
    %c64_i32_44 = arith.constant 64 : i32
    %c0_i32_45 = arith.constant 0 : i32
    %108 = arith.cmpi eq, %c64_i32_44, %c0_i32_45 : i32
    %c1_i32_46 = arith.constant 1 : i32
    %109 = arith.select %108, %c1_i32_46, %c64_i32_44 : i32
    %110 = vector.broadcast %109 : i32 to vector<128x1xi32>
    %111 = arith.remsi %18, %110 : vector<128x1xi32>
    %c0_i32_47 = arith.constant 0 : i32
    %112 = vector.broadcast %c0_i32_47 : i32 to vector<128x1xi32>
    %113 = arith.cmpi ne, %111, %112 : vector<128x1xi32>
    %c0_i32_48 = arith.constant 0 : i32
    %114 = vector.broadcast %c0_i32_48 : i32 to vector<128x1xi32>
    %115 = arith.cmpi slt, %111, %114 : vector<128x1xi32>
    %c0_i32_49 = arith.constant 0 : i32
    %116 = arith.cmpi slt, %109, %c0_i32_49 : i32
    %117 = vector.broadcast %116 : i1 to vector<128x1xi1>
    %118 = vector.broadcast %117 : vector<128x1xi1> to vector<128x1xi1>
    %119 = arith.xori %115, %118 : vector<128x1xi1>
    %120 = arith.andi %119, %113 : vector<128x1xi1>
    %121 = vector.broadcast %109 : i32 to vector<128x1xi32>
    %122 = arith.addi %111, %121 : vector<128x1xi32>
    %123 = arith.select %120, %122, %111 : vector<128x1xi1>, vector<128x1xi32>
    %c56_i32 = arith.constant 56 : i32
    %124 = vector.broadcast %c56_i32 : i32 to vector<128x1xi32>
    %125 = arith.cmpi sge, %123, %124 : vector<128x1xi32>
    %c120_i32 = arith.constant 120 : i32
    %126 = tpu.dynamic_rotate %82 by %c120_i32 dim 0 : vector<128x128xf32>, i32 -> vector<128x128xf32>
    %cst_50 = arith.constant 0.000000e+00 : f32
    %127 = vector.shape_cast %125 : vector<128x1xi1> to vector<128x1xi1>
    %128 = vector.broadcast %127 : vector<128x1xi1> to vector<128x128xi1>
    %129 = vector.broadcast %cst_50 : f32 to vector<128x128xf32>
    %130 = arith.select %128, %129, %126 : vector<128x128xi1>, vector<128x128xf32>
    %131 = arith.truncf %130 : vector<128x128xf32> to vector<128x128xbf16>
    %c0_51 = arith.constant 0 : index
    %c0_52 = arith.constant 0 : index
    %132 = vector.load %arg10[%c0_51, %c0_52] : memref<128x128xbf16, #tpu.memory_space<vmem>>, vector<128x128xbf16>
    %cst_53 = arith.constant dense<0.000000e+00> : vector<128x128xf32>
    %133 = tpu.matmul %107, %132, %cst_53 {dimension_numbers = #tpu.dot_dimension_numbers<[1], [0], [0], [1], [0, 0, 1, 1], [], []>} : vector<128x128xbf16>, vector<128x128xbf16>, vector<128x128xf32> -> vector<128x128xf32>
    %c0_54 = arith.constant 0 : index
    %c0_55 = arith.constant 0 : index
    %134 = vector.load %arg11[%c0_54, %c0_55] : memref<128x128xbf16, #tpu.memory_space<vmem>>, vector<128x128xbf16>
    %cst_56 = arith.constant dense<0.000000e+00> : vector<128x128xf32>
    %135 = tpu.matmul %83, %134, %cst_56 {dimension_numbers = #tpu.dot_dimension_numbers<[1], [0], [0], [1], [0, 0, 1, 1], [], []>} : vector<128x128xbf16>, vector<128x128xbf16>, vector<128x128xf32> -> vector<128x128xf32>
    %136 = arith.addf %133, %135 : vector<128x128xf32>
    %c0_57 = arith.constant 0 : index
    %c0_58 = arith.constant 0 : index
    %137 = vector.load %arg12[%c0_57, %c0_58] : memref<128x128xbf16, #tpu.memory_space<vmem>>, vector<128x128xbf16>
    %cst_59 = arith.constant dense<0.000000e+00> : vector<128x128xf32>
    %138 = tpu.matmul %131, %137, %cst_59 {dimension_numbers = #tpu.dot_dimension_numbers<[1], [0], [0], [1], [0, 0, 1, 1], [], []>} : vector<128x128xbf16>, vector<128x128xbf16>, vector<128x128xf32> -> vector<128x128xf32>
    %139 = arith.addf %136, %138 : vector<128x128xf32>
    %c0_60 = arith.constant 0 : index
    %c0_61 = arith.constant 0 : index
    %140 = vector.load %arg13[%c0_60, %c0_61] : memref<1x128xf32, #tpu.memory_space<vmem>>, vector<1x128xf32>
    %141 = vector.broadcast %140 : vector<1x128xf32> to vector<128x128xf32>
    %142 = arith.mulf %139, %141 : vector<128x128xf32>
    %c0_62 = arith.constant 0 : index
    %c0_63 = arith.constant 0 : index
    %143 = vector.load %arg14[%c0_62, %c0_63] : memref<1x128xf32, #tpu.memory_space<vmem>>, vector<1x128xf32>
    %144 = vector.broadcast %143 : vector<1x128xf32> to vector<128x128xf32>
    %145 = arith.addf %142, %144 : vector<128x128xf32>
    %cst_64 = arith.constant 0.000000e+00 : f32
    %146 = vector.broadcast %cst_64 : f32 to vector<128x128xf32>
    %147 = arith.maximumf %145, %146 : vector<128x128xf32>
    %148 = arith.truncf %147 : vector<128x128xf32> to vector<128x128xbf16>
    %c0_65 = arith.constant 0 : index
    %c0_66 = arith.constant 0 : index
    %149 = vector.load %arg15[%c0_65, %c0_66] : memref<128x576xbf16, #tpu.memory_space<vmem>>, vector<128x576xbf16>
    %cst_67 = arith.constant dense<0.000000e+00> : vector<128x576xf32>
    %150 = tpu.matmul %15, %149, %cst_67 {dimension_numbers = #tpu.dot_dimension_numbers<[1], [0], [0], [1], [0, 0, 1, 1], [], []>} : vector<128x128xbf16>, vector<128x576xbf16>, vector<128x576xf32> -> vector<128x576xf32>
    %c0_68 = arith.constant 0 : index
    %c0_69 = arith.constant 0 : index
    %151 = vector.load %arg16[%c0_68, %c0_69] : memref<128x576xbf16, #tpu.memory_space<vmem>>, vector<128x576xbf16>
    %cst_70 = arith.constant dense<0.000000e+00> : vector<128x576xf32>
    %152 = tpu.matmul %148, %151, %cst_70 {dimension_numbers = #tpu.dot_dimension_numbers<[1], [0], [0], [1], [0, 0, 1, 1], [], []>} : vector<128x128xbf16>, vector<128x576xbf16>, vector<128x576xf32> -> vector<128x576xf32>
    %153 = arith.addf %150, %152 : vector<128x576xf32>
    %c0_71 = arith.constant 0 : index
    %c0_72 = arith.constant 0 : index
    %154 = vector.load %arg17[%c0_71, %c0_72] : memref<1x576xf32, #tpu.memory_space<vmem>>, vector<1x576xf32>
    %155 = vector.broadcast %154 : vector<1x576xf32> to vector<128x576xf32>
    %156 = arith.mulf %153, %155 : vector<128x576xf32>
    %c0_73 = arith.constant 0 : index
    %c0_74 = arith.constant 0 : index
    %157 = vector.load %arg18[%c0_73, %c0_74] : memref<1x576xf32, #tpu.memory_space<vmem>>, vector<1x576xf32>
    %158 = vector.broadcast %157 : vector<1x576xf32> to vector<128x576xf32>
    %159 = arith.addf %156, %158 : vector<128x576xf32>
    %cst_75 = arith.constant 0.000000e+00 : f32
    %160 = vector.broadcast %cst_75 : f32 to vector<128x576xf32>
    %161 = arith.maximumf %159, %160 : vector<128x576xf32>
    %c0_76 = arith.constant 0 : index
    %c0_77 = arith.constant 0 : index
    %162 = vector.load %arg1[%c0_76, %c0_77] : memref<128x576xf32, #tpu.memory_space<vmem>>, vector<128x576xf32>
    %cst_78 = arith.constant 0.000000e+00 : f32
    %163 = vector.broadcast %cst_78 : f32 to vector<128x576xf32>
    %164 = arith.maximumf %162, %163 : vector<128x576xf32>
    %cst_79 = arith.constant 1.000000e+00 : f32
    %165 = vector.broadcast %cst_79 : f32 to vector<128x576xf32>
    %166 = arith.mulf %161, %165 : vector<128x576xf32>
    %167 = arith.addf %164, %166 : vector<128x576xf32>
    %c0_80 = arith.constant 0 : index
    %c0_81 = arith.constant 0 : index
    %168 = vector.load %arg19[%c0_80, %c0_81] : memref<128x576xf32, #tpu.memory_space<vmem>>, vector<128x576xf32>
    tpu.vector_store %arg19[%c0_80, %c0_81], %167 {strides = array<i32>} : memref<128x576xf32, #tpu.memory_space<vmem>>, vector<128x576xf32>,
    return
  }
  func.func @transform_0(%arg0: i32) -> (i32, i32) {
    %c0_i32 = arith.constant 0 : i32
    %c0_i32_0 = arith.constant 0 : i32
    return %arg0, %c0_i32 : i32, i32
  }
  func.func @transform_1(%arg0: i32) -> (i32, i32) {
    %c0_i32 = arith.constant 0 : i32
    %c0_i32_0 = arith.constant 0 : i32
    %c0_i32_1 = arith.constant 0 : i32
    return %c0_i32, %c0_i32_0 : i32, i32
  }
  func.func @transform_2(%arg0: i32) -> (i32, i32) {
    %c0_i32 = arith.constant 0 : i32
    %c0_i32_0 = arith.constant 0 : i32
    %c0_i32_1 = arith.constant 0 : i32
    return %c0_i32, %c0_i32_0 : i32, i32
  }
  func.func @transform_3(%arg0: i32) -> (i32, i32) {
    %c0_i32 = arith.constant 0 : i32
    %c0_i32_0 = arith.constant 0 : i32
    %c0_i32_1 = arith.constant 0 : i32
    return %c0_i32, %c0_i32_0 : i32, i32
  }
  func.func @transform_4(%arg0: i32) -> (i32, i32) {
    %c0_i32 = arith.constant 0 : i32
    %c0_i32_0 = arith.constant 0 : i32
    %c0_i32_1 = arith.constant 0 : i32
    return %c0_i32, %c0_i32_0 : i32, i32
  }
  func.func @transform_5(%arg0: i32) -> (i32, i32) {
    %c0_i32 = arith.constant 0 : i32
    %c0_i32_0 = arith.constant 0 : i32
    %c0_i32_1 = arith.constant 0 : i32
    return %c0_i32, %c0_i32_0 : i32, i32
  }
  func.func @transform_6(%arg0: i32) -> (i32, i32) {
    %c0_i32 = arith.constant 0 : i32
    %c0_i32_0 = arith.constant 0 : i32
    %c0_i32_1 = arith.constant 0 : i32
    return %c0_i32, %c0_i32_0 : i32, i32
  }
  func.func @transform_7(%arg0: i32) -> (i32, i32) {
    %c0_i32 = arith.constant 0 : i32
    %c0_i32_0 = arith.constant 0 : i32
    %c0_i32_1 = arith.constant 0 : i32
    return %c0_i32, %c0_i32_0 : i32, i32
  }
  func.func @transform_8(%arg0: i32) -> (i32, i32) {
    %c0_i32 = arith.constant 0 : i32
    %c0_i32_0 = arith.constant 0 : i32
    %c0_i32_1 = arith.constant 0 : i32
    return %c0_i32, %c0_i32_0 : i32, i32
  }
  func.func @transform_9(%arg0: i32) -> (i32, i32) {
    %c0_i32 = arith.constant 0 : i32
    %c0_i32_0 = arith.constant 0 : i32
    %c0_i32_1 = arith.constant 0 : i32
    return %c0_i32, %c0_i32_0 : i32, i32
  }
  func.func @transform_10(%arg0: i32) -> (i32, i32) {
    %c0_i32 = arith.constant 0 : i32
    %c0_i32_0 = arith.constant 0 : i32
    %c0_i32_1 = arith.constant 0 : i32
    return %c0_i32, %c0_i32_0 : i32, i32
  }
  func.func @transform_11(%arg0: i32) -> (i32, i32) {
    %c0_i32 = arith.constant 0 : i32
    %c0_i32_0 = arith.constant 0 : i32
    %c0_i32_1 = arith.constant 0 : i32
    return %c0_i32, %c0_i32_0 : i32, i32
  }
  func.func @transform_12(%arg0: i32) -> (i32, i32) {
    %c0_i32 = arith.constant 0 : i32
    %c0_i32_0 = arith.constant 0 : i32
    %c0_i32_1 = arith.constant 0 : i32
    return %c0_i32, %c0_i32_0 : i32, i32
  }
  func.func @transform_13(%arg0: i32) -> (i32, i32) {
    %c0_i32 = arith.constant 0 : i32
    %c0_i32_0 = arith.constant 0 : i32
    %c0_i32_1 = arith.constant 0 : i32
    return %c0_i32, %c0_i32_0 : i32, i32
  }
  func.func @transform_14(%arg0: i32) -> (i32, i32) {
    %c0_i32 = arith.constant 0 : i32
    %c0_i32_0 = arith.constant 0 : i32
    %c0_i32_1 = arith.constant 0 : i32
    return %c0_i32, %c0_i32_0 : i32, i32
  }
  func.func @transform_15(%arg0: i32) -> (i32, i32) {
    %c0_i32 = arith.constant 0 : i32
    %c0_i32_0 = arith.constant 0 : i32
    %c0_i32_1 = arith.constant 0 : i32
    return %c0_i32, %c0_i32_0 : i32, i32
  }
  func.func @transform_16(%arg0: i32) -> (i32, i32) {
    %c0_i32 = arith.constant 0 : i32
    %c0_i32_0 = arith.constant 0 : i32
    %c0_i32_1 = arith.constant 0 : i32
    return %c0_i32, %c0_i32_0 : i32, i32
  }
  func.func @transform_17(%arg0: i32) -> (i32, i32) {
    %c0_i32 = arith.constant 0 : i32
    %c0_i32_0 = arith.constant 0 : i32
    %c0_i32_1 = arith.constant 0 : i32
    return %c0_i32, %c0_i32_0 : i32, i32
  }
  func.func @transform_18(%arg0: i32) -> (i32, i32) {
    %c0_i32 = arith.constant 0 : i32
    %c0_i32_0 = arith.constant 0 : i32
    return %arg0, %c0_i32 : i32, i32
  }
}

</mosaic_0001>

<llo_original>
// kernel: tpu_custom_call.1
$region0: #{tpu_custom_call.1}
  #allocation0 [shape = 'u32[]', space=smem, size = 0x4, offset = 0x4, fixed_abs, tag = 'smem constant byte address 0x4 - core index']
  #allocation1 [shape = 'u32[144,128]{1,0:T(1,128)}', space=vmem, size = 0x12000, scoped, tag = 'internal scratch']
  %s0 = inlined_call_operand.vmem [shape: f32[128,576], index: 0, kind: input, shape index: {}]
  %s1 = inlined_call_operand.vmem [shape: bf16[576,256], index: 1, kind: input, shape index: {}]
  %s2 = inlined_call_operand.vmem [shape: f32[1,256], index: 2, kind: input, shape index: {}]
  %s3 = inlined_call_operand.vmem [shape: f32[1,256], index: 3, kind: input, shape index: {}]
  %s4 = inlined_call_operand.vmem [shape: bf16[128,128], index: 4, kind: input, shape index: {}]
  %s5 = inlined_call_operand.vmem [shape: bf16[128,128], index: 5, kind: input, shape index: {}]
  %s6 = inlined_call_operand.vmem [shape: bf16[128,128], index: 6, kind: input, shape index: {}]
  %s7 = inlined_call_operand.vmem [shape: f32[1,128], index: 7, kind: input, shape index: {}]
  %s8 = inlined_call_operand.vmem [shape: f32[1,128], index: 8, kind: input, shape index: {}]
  %s9 = inlined_call_operand.vmem [shape: bf16[128,128], index: 9, kind: input, shape index: {}]
  %s10 = inlined_call_operand.vmem [shape: bf16[128,128], index: 10, kind: input, shape index: {}]
  %s11 = inlined_call_operand.vmem [shape: bf16[128,128], index: 11, kind: input, shape index: {}]
  %s12 = inlined_call_operand.vmem [shape: f32[1,128], index: 12, kind: input, shape index: {}]
  %s13 = inlined_call_operand.vmem [shape: f32[1,128], index: 13, kind: input, shape index: {}]
  %s14 = inlined_call_operand.vmem [shape: bf16[128,576], index: 14, kind: input, shape index: {}]
  %s15 = inlined_call_operand.vmem [shape: bf16[128,576], index: 15, kind: input, shape index: {}]
  %s16 = inlined_call_operand.vmem [shape: f32[1,576], index: 16, kind: input, shape index: {}]
  %s17 = inlined_call_operand.vmem [shape: f32[1,576], index: 17, kind: input, shape index: {}]
  %s18 = inlined_call_operand.vmem [shape: f32[128,576], index: 18, kind: output, shape index: {}]
  %s19 = sld [smem:[#allocation0]]
  $region82: #{tpu_custom_call.1} parent=0
    _
  %s21 = ssub.s32 1, %s19
  %s22 = scalar_select 0, %s21, %s19
  // Predicated region
  $region2: #{tpu_custom_call.1} parent=0 // pred_check
    _
  $region3: #{tpu_custom_call.1} parent=0 // pred_check_branch
    %24 = sbr.rel (0) target = $region5
  $region4: #{tpu_custom_call.1} parent=0 // pred_region
    _
  $region5: #{tpu_custom_call.1} parent=0 // pred_fallthru
    _
  // Predicated region
  $region6: #{tpu_custom_call.1} parent=0 // pred_check
    _
  $region7: #{tpu_custom_call.1} parent=0 // pred_check_branch
    %26 = sbr.rel (0) target = $region9
  $region8: #{tpu_custom_call.1} parent=0 // pred_region
    _
  $region9: #{tpu_custom_call.1} parent=0 // pred_fallthru
    _
  // Predicated region
  $region10: #{tpu_custom_call.1} parent=0 // pred_check
    _
  $region11: #{tpu_custom_call.1} parent=0 // pred_check_branch
    %28 = sbr.rel (0) target = $region13
  $region12: #{tpu_custom_call.1} parent=0 // pred_region
    _
  $region13: #{tpu_custom_call.1} parent=0 // pred_fallthru
    _
  // Predicated region
  $region14: #{tpu_custom_call.1} parent=0 // pred_check
    _
  $region15: #{tpu_custom_call.1} parent=0 // pred_check_branch
    %30 = sbr.rel (0) target = $region17
  $region16: #{tpu_custom_call.1} parent=0 // pred_region
    _
  $region17: #{tpu_custom_call.1} parent=0 // pred_fallthru
    _
  // Predicated region
  $region18: #{tpu_custom_call.1} parent=0 // pred_check
    _
  $region19: #{tpu_custom_call.1} parent=0 // pred_check_branch
    %32 = sbr.rel (0) target = $region21
  $region20: #{tpu_custom_call.1} parent=0 // pred_region
    _
  $region21: #{tpu_custom_call.1} parent=0 // pred_fallthru
    _
  // Predicated region
  $region22: #{tpu_custom_call.1} parent=0 // pred_check
    _
  $region23: #{tpu_custom_call.1} parent=0 // pred_check_branch
    %34 = sbr.rel (0) target = $region25
  $region24: #{tpu_custom_call.1} parent=0 // pred_region
    _
  $region25: #{tpu_custom_call.1} parent=0 // pred_fallthru
    _
  // Predicated region
  $region26: #{tpu_custom_call.1} parent=0 // pred_check
    _
  $region27: #{tpu_custom_call.1} parent=0 // pred_check_branch
    %36 = sbr.rel (0) target = $region29
  $region28: #{tpu_custom_call.1} parent=0 // pred_region
    _
  $region29: #{tpu_custom_call.1} parent=0 // pred_fallthru
    _
  // Predicated region
  $region30: #{tpu_custom_call.1} parent=0 // pred_check
    _
  $region31: #{tpu_custom_call.1} parent=0 // pred_check_branch
    %38 = sbr.rel (0) target = $region33
  $region32: #{tpu_custom_call.1} parent=0 // pred_region
    _
  $region33: #{tpu_custom_call.1} parent=0 // pred_fallthru
    _
  // Predicated region
  $region34: #{tpu_custom_call.1} parent=0 // pred_check
    _
  $region35: #{tpu_custom_call.1} parent=0 // pred_check_branch
    %40 = sbr.rel (0) target = $region37
  $region36: #{tpu_custom_call.1} parent=0 // pred_region
    _
  $region37: #{tpu_custom_call.1} parent=0 // pred_fallthru
    _
  // Predicated region
  $region38: #{tpu_custom_call.1} parent=0 // pred_check
    _
  $region39: #{tpu_custom_call.1} parent=0 // pred_check_branch
    %42 = sbr.rel (0) target = $region41
  $region40: #{tpu_custom_call.1} parent=0 // pred_region
    _
  $region41: #{tpu_custom_call.1} parent=0 // pred_fallthru
    _
  // Predicated region
  $region42: #{tpu_custom_call.1} parent=0 // pred_check
    _
  $region43: #{tpu_custom_call.1} parent=0 // pred_check_branch
    %44 = sbr.rel (0) target = $region45
  $region44: #{tpu_custom_call.1} parent=0 // pred_region
    _
  $region45: #{tpu_custom_call.1} parent=0 // pred_fallthru
    _
  // Predicated region
  $region46: #{tpu_custom_call.1} parent=0 // pred_check
    _
  $region47: #{tpu_custom_call.1} parent=0 // pred_check_branch
    %46 = sbr.rel (0) target = $region49
  $region48: #{tpu_custom_call.1} parent=0 // pred_region
    _
  $region49: #{tpu_custom_call.1} parent=0 // pred_fallthru
    _
  // Predicated region
  $region50: #{tpu_custom_call.1} parent=0 // pred_check
    _
  $region51: #{tpu_custom_call.1} parent=0 // pred_check_branch
    %48 = sbr.rel (0) target = $region53
  $region52: #{tpu_custom_call.1} parent=0 // pred_region
    _
  $region53: #{tpu_custom_call.1} parent=0 // pred_fallthru
    _
  // Predicated region
  $region54: #{tpu_custom_call.1} parent=0 // pred_check
    _
  $region55: #{tpu_custom_call.1} parent=0 // pred_check_branch
    %50 = sbr.rel (0) target = $region57
  $region56: #{tpu_custom_call.1} parent=0 // pred_region
    _
  $region57: #{tpu_custom_call.1} parent=0 // pred_fallthru
    _
  // Predicated region
  $region58: #{tpu_custom_call.1} parent=0 // pred_check
    _
  $region59: #{tpu_custom_call.1} parent=0 // pred_check_branch
    %52 = sbr.rel (0) target = $region61
  $region60: #{tpu_custom_call.1} parent=0 // pred_region
    _
  $region61: #{tpu_custom_call.1} parent=0 // pred_fallthru
    _
  // Predicated region
  $region62: #{tpu_custom_call.1} parent=0 // pred_check
    _
  $region63: #{tpu_custom_call.1} parent=0 // pred_check_branch
    %54 = sbr.rel (0) target = $region65
  $region64: #{tpu_custom_call.1} parent=0 // pred_region
    _
  $region65: #{tpu_custom_call.1} parent=0 // pred_fallthru
    _
  // Predicated region
  $region66: #{tpu_custom_call.1} parent=0 // pred_check
    _
  $region67: #{tpu_custom_call.1} parent=0 // pred_check_branch
    %56 = sbr.rel (0) target = $region69
  $region68: #{tpu_custom_call.1} parent=0 // pred_region
    _
  $region69: #{tpu_custom_call.1} parent=0 // pred_fallthru
    _
  // Predicated region
  $region70: #{tpu_custom_call.1} parent=0 // pred_check
    _
  $region71: #{tpu_custom_call.1} parent=0 // pred_check_branch
    %58 = sbr.rel (0) target = $region73
  $region72: #{tpu_custom_call.1} parent=0 // pred_region
    _
  $region73: #{tpu_custom_call.1} parent=0 // pred_fallthru
    _
  %v60 = vld [vmem:[%s0] sm:$0xff]
  %v61 = vld [vmem:[%s0 + $0x8] sm:$0xff]
  %v62 = vld [vmem:[%s0 + $0x10] sm:$0xff]
  %v63 = vld [vmem:[%s0 + $0x18] sm:$0xff]
  %v64 = vld [vmem:[%s0 + $0x20] sm:$0xff]
  %v65 = vld [vmem:[%s0 + $0x28] sm:$0xff]
  %v66 = vld [vmem:[%s0 + $0x30] sm:$0xff]
  %v67 = vld [vmem:[%s0 + $0x38] sm:$0xff]
  %v68 = vld [vmem:[%s0 + $0x40] sm:$0xff]
  %v69 = vld [vmem:[%s0 + $0x48] sm:$0xff]
  %v70 = vld [vmem:[%s0 + $0x50] sm:$0xff]
  %v71 = vld [vmem:[%s0 + $0x58] sm:$0xff]
  %v72 = vld [vmem:[%s0 + $0x60] sm:$0xff]
  %v73 = vld [vmem:[%s0 + $0x68] sm:$0xff]
  %v74 = vld [vmem:[%s0 + $0x70] sm:$0xff]
  %v75 = vld [vmem:[%s0 + $0x78] sm:$0xff]
  %v76 = vld [vmem:[%s0 + $0x80] sm:$0xff]
  %v77 = vld [vmem:[%s0 + $0x88] sm:$0xff]
  %v78 = vld [vmem:[%s0 + $0x90] sm:$0xff]
  %v79 = vld [vmem:[%s0 + $0x98] sm:$0xff]
  %v80 = vld [vmem:[%s0 + $0xa0] sm:$0xff]
  %v81 = vld [vmem:[%s0 + $0xa8] sm:$0xff]
  %v82 = vld [vmem:[%s0 + $0xb0] sm:$0xff]
  %v83 = vld [vmem:[%s0 + $0xb8] sm:$0xff]
  %v84 = vld [vmem:[%s0 + $0xc0] sm:$0xff]
  %v85 = vld [vmem:[%s0 + $0xc8] sm:$0xff]
  %v86 = vld [vmem:[%s0 + $0xd0] sm:$0xff]
  %v87 = vld [vmem:[%s0 + $0xd8] sm:$0xff]
  %v88 = vld [vmem:[%s0 + $0xe0] sm:$0xff]
  %v89 = vld [vmem:[%s0 + $0xe8] sm:$0xff]
  %v90 = vld [vmem:[%s0 + $0xf0] sm:$0xff]
  %v91 = vld [vmem:[%s0 + $0xf8] sm:$0xff]
  %v92 = vld [vmem:[%s0 + $0x100] sm:$0xff]
  %v93 = vld [vmem:[%s0 + $0x108] sm:$0xff]
  %v94 = vld [vmem:[%s0 + $0x110] sm:$0xff]
  %v95 = vld [vmem:[%s0 + $0x118] sm:$0xff]
  %v96 = vld [vmem:[%s0 + $0x120] sm:$0xff]
  %v97 = vld [vmem:[%s0 + $0x128] sm:$0xff]
  %v98 = vld [vmem:[%s0 + $0x130] sm:$0xff]
  %v99 = vld [vmem:[%s0 + $0x138] sm:$0xff]
  %v100 = vld [vmem:[%s0 + $0x140] sm:$0xff]
  %v101 = vld [vmem:[%s0 + $0x148] sm:$0xff]
  %v102 = vld [vmem:[%s0 + $0x150] sm:$0xff]
  %v103 = vld [vmem:[%s0 + $0x158] sm:$0xff]
  %v104 = vld [vmem:[%s0 + $0x160] sm:$0xff]
  %v105 = vld [vmem:[%s0 + $0x168] sm:$0xff]
  %v106 = vld [vmem:[%s0 + $0x170] sm:$0xff]
  %v107 = vld [vmem:[%s0 + $0x178] sm:$0xff]
  %v108 = vld [vmem:[%s0 + $0x180] sm:$0xff]
  %v109 = vld [vmem:[%s0 + $0x188] sm:$0xff]
  %v110 = vld [vmem:[%s0 + $0x190] sm:$0xff]
  %v111 = vld [vmem:[%s0 + $0x198] sm:$0xff]
  %v112 = vld [vmem:[%s0 + $0x1a0] sm:$0xff]
  %v113 = vld [vmem:[%s0 + $0x1a8] sm:$0xff]
  %v114 = vld [vmem:[%s0 + $0x1b0] sm:$0xff]
  %v115 = vld [vmem:[%s0 + $0x1b8] sm:$0xff]
  %v116 = vld [vmem:[%s0 + $0x1c0] sm:$0xff]
  %v117 = vld [vmem:[%s0 + $0x1c8] sm:$0xff]
  %v118 = vld [vmem:[%s0 + $0x1d0] sm:$0xff]
  %v119 = vld [vmem:[%s0 + $0x1d8] sm:$0xff]
  %v120 = vld [vmem:[%s0 + $0x1e0] sm:$0xff]
  %v121 = vld [vmem:[%s0 + $0x1e8] sm:$0xff]
  %v122 = vld [vmem:[%s0 + $0x1f0] sm:$0xff]
  %v123 = vld [vmem:[%s0 + $0x1f8] sm:$0xff]
  %v124 = vld [vmem:[%s0 + $0x200] sm:$0xff]
  %v125 = vld [vmem:[%s0 + $0x208] sm:$0xff]
  %v126 = vld [vmem:[%s0 + $0x210] sm:$0xff]
  %v127 = vld [vmem:[%s0 + $0x218] sm:$0xff]
  %v128 = vld [vmem:[%s0 + $0x220] sm:$0xff]
  %v129 = vld [vmem:[%s0 + $0x228] sm:$0xff]
  %v130 = vld [vmem:[%s0 + $0x230] sm:$0xff]
  %v131 = vld [vmem:[%s0 + $0x238] sm:$0xff]
  %v132 = vld [vmem:[%s0 + $0x240] sm:$0xff]
  %v133 = vld [vmem:[%s0 + $0x248] sm:$0xff]
  %v134 = vld [vmem:[%s0 + $0x250] sm:$0xff]
  %v135 = vld [vmem:[%s0 + $0x258] sm:$0xff]
  %v136 = vld [vmem:[%s0 + $0x260] sm:$0xff]
  %v137 = vld [vmem:[%s0 + $0x268] sm:$0xff]
  %v138 = vld [vmem:[%s0 + $0x270] sm:$0xff]
  %v139 = vld [vmem:[%s0 + $0x278] sm:$0xff]
  %v140 = vmax.f32 %v60, 0.0
  %v141 = vmax.f32 %v61, 0.0
  %v142 = vmax.f32 %v62, 0.0
  %v143 = vmax.f32 %v63, 0.0
  %v144 = vmax.f32 %v64, 0.0
  %v145 = vmax.f32 %v65, 0.0
  %v146 = vmax.f32 %v66, 0.0
  %v147 = vmax.f32 %v67, 0.0
  %v148 = vmax.f32 %v68, 0.0
  %v149 = vmax.f32 %v69, 0.0
  %v150 = vmax.f32 %v70, 0.0
  %v151 = vmax.f32 %v71, 0.0
  %v152 = vmax.f32 %v72, 0.0
  %v153 = vmax.f32 %v73, 0.0
  %v154 = vmax.f32 %v74, 0.0
  %v155 = vmax.f32 %v75, 0.0
  %v156 = vmax.f32 %v76, 0.0
  %v157 = vmax.f32 %v77, 0.0
  %v158 = vmax.f32 %v78, 0.0
  %v159 = vmax.f32 %v79, 0.0
  %v160 = vmax.f32 %v80, 0.0
  %v161 = vmax.f32 %v81, 0.0
  %v162 = vmax.f32 %v82, 0.0
  %v163 = vmax.f32 %v83, 0.0
  %v164 = vmax.f32 %v84, 0.0
  %v165 = vmax.f32 %v85, 0.0
  %v166 = vmax.f32 %v86, 0.0
  %v167 = vmax.f32 %v87, 0.0
  %v168 = vmax.f32 %v88, 0.0
  %v169 = vmax.f32 %v89, 0.0
  %v170 = vmax.f32 %v90, 0.0
  %v171 = vmax.f32 %v91, 0.0
  %v172 = vmax.f32 %v92, 0.0
  %v173 = vmax.f32 %v93, 0.0
  %v174 = vmax.f32 %v94, 0.0
  %v175 = vmax.f32 %v95, 0.0
  %v176 = vmax.f32 %v96, 0.0
  %v177 = vmax.f32 %v97, 0.0
  %v178 = vmax.f32 %v98, 0.0
  %v179 = vmax.f32 %v99, 0.0
  %v180 = vmax.f32 %v100, 0.0
  %v181 = vmax.f32 %v101, 0.0
  %v182 = vmax.f32 %v102, 0.0
  %v183 = vmax.f32 %v103, 0.0
  %v184 = vmax.f32 %v104, 0.0
  %v185 = vmax.f32 %v105, 0.0
  %v186 = vmax.f32 %v106, 0.0
  %v187 = vmax.f32 %v107, 0.0
  %v188 = vmax.f32 %v108, 0.0
  %v189 = vmax.f32 %v109, 0.0
  %v190 = vmax.f32 %v110, 0.0
  %v191 = vmax.f32 %v111, 0.0
  %v192 = vmax.f32 %v112, 0.0
  %v193 = vmax.f32 %v113, 0.0
  %v194 = vmax.f32 %v114, 0.0
  %v195 = vmax.f32 %v115, 0.0
  %v196 = vmax.f32 %v116, 0.0
  %v197 = vmax.f32 %v117, 0.0
  %v198 = vmax.f32 %v118, 0.0
  %v199 = vmax.f32 %v119, 0.0
  %v200 = vmax.f32 %v120, 0.0
  %v201 = vmax.f32 %v121, 0.0
  %v202 = vmax.f32 %v122, 0.0
  %v203 = vmax.f32 %v123, 0.0
  %v204 = vmax.f32 %v124, 0.0
  %v205 = vmax.f32 %v125, 0.0
  %v206 = vmax.f32 %v126, 0.0
  %v207 = vmax.f32 %v127, 0.0
  %v208 = vmax.f32 %v128, 0.0
  %v209 = vmax.f32 %v129, 0.0
  %v210 = vmax.f32 %v130, 0.0
  %v211 = vmax.f32 %v131, 0.0
  %v212 = vmax.f32 %v132, 0.0
  %v213 = vmax.f32 %v133, 0.0
  %v214 = vmax.f32 %v134, 0.0
  %v215 = vmax.f32 %v135, 0.0
  %v216 = vmax.f32 %v136, 0.0
  %v217 = vmax.f32 %v137, 0.0
  %v218 = vmax.f32 %v138, 0.0
  %v219 = vmax.f32 %v139, 0.0
  %v220 = vpack.c.bf16 %v145, %v140
  %v221 = vpack.c.bf16 %v146, %v141
  %v222 = vpack.c.bf16 %v147, %v142
  %v223 = vpack.c.bf16 %v148, %v143
  %v224 = vpack.c.bf16 %v149, %v144
  %v225 = vpack.c.bf16 %v155, %v150
  %v226 = vpack.c.bf16 %v156, %v151
  %v227 = vpack.c.bf16 %v157, %v152
  %v228 = vpack.c.bf16 %v158, %v153
  %v229 = vpack.c.bf16 %v159, %v154
  %v230 = vpack.c.bf16 %v165, %v160
  %v231 = vpack.c.bf16 %v166, %v161
  %v232 = vpack.c.bf16 %v167, %v162
  %v233 = vpack.c.bf16 %v168, %v163
  %v234 = vpack.c.bf16 %v169, %v164
  %v235 = vpack.c.bf16 %v175, %v170
  %v236 = vpack.c.bf16 %v176, %v171
  %v237 = vpack.c.bf16 %v177, %v172
  %v238 = vpack.c.bf16 %v178, %v173
  %v239 = vpack.c.bf16 %v179, %v174
  %v240 = vpack.c.bf16 %v185, %v180
  %v241 = vpack.c.bf16 %v186, %v181
  %v242 = vpack.c.bf16 %v187, %v182
  %v243 = vpack.c.bf16 %v188, %v183
  %v244 = vpack.c.bf16 %v189, %v184
  %v245 = vpack.c.bf16 %v195, %v190
  %v246 = vpack.c.bf16 %v196, %v191
  %v247 = vpack.c.bf16 %v197, %v192
  %v248 = vpack.c.bf16 %v198, %v193
  %v249 = vpack.c.bf16 %v199, %v194
  %v250 = vpack.c.bf16 %v205, %v200
  %v251 = vpack.c.bf16 %v206, %v201
  %v252 = vpack.c.bf16 %v207, %v202
  %v253 = vpack.c.bf16 %v208, %v203
  %v254 = vpack.c.bf16 %v209, %v204
  %v255 = vpack.c.bf16 %v215, %v210
  %v256 = vpack.c.bf16 %v216, %v211
  %v257 = vpack.c.bf16 %v217, %v212
  %v258 = vpack.c.bf16 %v218, %v213
  %v259 = vpack.c.bf16 %v219, %v214
  %v260 = vld [vmem:[%s1] sm:$0xff]
  %v261 = vld [vmem:[%s1 + $0x8] sm:$0xff]
  %v262 = vld [vmem:[%s1 + $0x10] sm:$0xff]
  %v263 = vld [vmem:[%s1 + $0x18] sm:$0xff]
  %v264 = vld [vmem:[%s1 + $0x20] sm:$0xff]
  %v265 = vld [vmem:[%s1 + $0x28] sm:$0xff]
  %v266 = vld [vmem:[%s1 + $0x30] sm:$0xff]
  %v267 = vld [vmem:[%s1 + $0x38] sm:$0xff]
  %v268 = vld [vmem:[%s1 + $0x40] sm:$0xff]
  %v269 = vld [vmem:[%s1 + $0x48] sm:$0xff]
  %v270 = vld [vmem:[%s1 + $0x50] sm:$0xff]
  %v271 = vld [vmem:[%s1 + $0x58] sm:$0xff]
  %v272 = vld [vmem:[%s1 + $0x60] sm:$0xff]
  %v273 = vld [vmem:[%s1 + $0x68] sm:$0xff]
  %v274 = vld [vmem:[%s1 + $0x70] sm:$0xff]
  %v275 = vld [vmem:[%s1 + $0x78] sm:$0xff]
  %v276 = vld [vmem:[%s1 + $0x80] sm:$0xff]
  %v277 = vld [vmem:[%s1 + $0x88] sm:$0xff]
  %v278 = vld [vmem:[%s1 + $0x90] sm:$0xff]
  %v279 = vld [vmem:[%s1 + $0x98] sm:$0xff]
  %v280 = vld [vmem:[%s1 + $0xa0] sm:$0xff]
  %v281 = vld [vmem:[%s1 + $0xa8] sm:$0xff]
  %v282 = vld [vmem:[%s1 + $0xb0] sm:$0xff]
  %v283 = vld [vmem:[%s1 + $0xb8] sm:$0xff]
  %v284 = vld [vmem:[%s1 + $0xc0] sm:$0xff]
  %v285 = vld [vmem:[%s1 + $0xc8] sm:$0xff]
  %v286 = vld [vmem:[%s1 + $0xd0] sm:$0xff]
  %v287 = vld [vmem:[%s1 + $0xd8] sm:$0xff]
  %v288 = vld [vmem:[%s1 + $0xe0] sm:$0xff]
  %v289 = vld [vmem:[%s1 + $0xe8] sm:$0xff]
  %v290 = vld [vmem:[%s1 + $0xf0] sm:$0xff]
  %v291 = vld [vmem:[%s1 + $0xf8] sm:$0xff]
  %v292 = vld [vmem:[%s1 + $0x100] sm:$0xff]
  %v293 = vld [vmem:[%s1 + $0x108] sm:$0xff]
  %v294 = vld [vmem:[%s1 + $0x110] sm:$0xff]
  %v295 = vld [vmem:[%s1 + $0x118] sm:$0xff]
  %v296 = vld [vmem:[%s1 + $0x120] sm:$0xff]
  %v297 = vld [vmem:[%s1 + $0x128] sm:$0xff]
  %v298 = vld [vmem:[%s1 + $0x130] sm:$0xff]
  %v299 = vld [vmem:[%s1 + $0x138] sm:$0xff]
  %v300 = vld [vmem:[%s1 + $0x140] sm:$0xff]
  %v301 = vld [vmem:[%s1 + $0x148] sm:$0xff]
  %v302 = vld [vmem:[%s1 + $0x150] sm:$0xff]
  %v303 = vld [vmem:[%s1 + $0x158] sm:$0xff]
  %v304 = vld [vmem:[%s1 + $0x160] sm:$0xff]
  %v305 = vld [vmem:[%s1 + $0x168] sm:$0xff]
  %v306 = vld [vmem:[%s1 + $0x170] sm:$0xff]
  %v307 = vld [vmem:[%s1 + $0x178] sm:$0xff]
  %v308 = vld [vmem:[%s1 + $0x180] sm:$0xff]
  %v309 = vld [vmem:[%s1 + $0x188] sm:$0xff]
  %v310 = vld [vmem:[%s1 + $0x190] sm:$0xff]
  %v311 = vld [vmem:[%s1 + $0x198] sm:$0xff]
  %v312 = vld [vmem:[%s1 + $0x1a0] sm:$0xff]
  %v313 = vld [vmem:[%s1 + $0x1a8] sm:$0xff]
  %v314 = vld [vmem:[%s1 + $0x1b0] sm:$0xff]
  %v315 = vld [vmem:[%s1 + $0x1b8] sm:$0xff]
  %v316 = vld [vmem:[%s1 + $0x1c0] sm:$0xff]
  %v317 = vld [vmem:[%s1 + $0x1c8] sm:$0xff]
  %v318 = vld [vmem:[%s1 + $0x1d0] sm:$0xff]
  %v319 = vld [vmem:[%s1 + $0x1d8] sm:$0xff]
  %v320 = vld [vmem:[%s1 + $0x1e0] sm:$0xff]
  %v321 = vld [vmem:[%s1 + $0x1e8] sm:$0xff]
  %v322 = vld [vmem:[%s1 + $0x1f0] sm:$0xff]
  %v323 = vld [vmem:[%s1 + $0x1f8] sm:$0xff]
  %v324 = vld [vmem:[%s1 + $0x200] sm:$0xff]
  %v325 = vld [vmem:[%s1 + $0x208] sm:$0xff]
  %v326 = vld [vmem:[%s1 + $0x210] sm:$0xff]
  %v327 = vld [vmem:[%s1 + $0x218] sm:$0xff]
  %v328 = vld [vmem:[%s1 + $0x220] sm:$0xff]
  %v329 = vld [vmem:[%s1 + $0x228] sm:$0xff]
  %v330 = vld [vmem:[%s1 + $0x230] sm:$0xff]
  %v331 = vld [vmem:[%s1 + $0x238] sm:$0xff]
  %v404 = vunpack.c.l.b16 %v260
  %v405 = vunpack.c.h.b16 %v260
  %v406 = vunpack.c.l.b16 %v261
  %v407 = vunpack.c.h.b16 %v261
  %v408 = vunpack.c.l.b16 %v262
  %v409 = vunpack.c.h.b16 %v262
  %v410 = vunpack.c.l.b16 %v263
  %v411 = vunpack.c.h.b16 %v263
  %v412 = vunpack.c.l.b16 %v264
  %v413 = vunpack.c.h.b16 %v264
  %v414 = vunpack.c.l.b16 %v265
  %v415 = vunpack.c.h.b16 %v265
  %v416 = vunpack.c.l.b16 %v266
  %v417 = vunpack.c.h.b16 %v266
  %v418 = vunpack.c.l.b16 %v267
  %v419 = vunpack.c.h.b16 %v267
  %v420 = vunpack.c.l.b16 %v268
  %v421 = vunpack.c.h.b16 %v268
  %v422 = vunpack.c.l.b16 %v269
  %v423 = vunpack.c.h.b16 %v269
  %v424 = vunpack.c.l.b16 %v270
  %v425 = vunpack.c.h.b16 %v270
  %v426 = vunpack.c.l.b16 %v271
  %v427 = vunpack.c.h.b16 %v271
  %v428 = vunpack.c.l.b16 %v272
  %v429 = vunpack.c.h.b16 %v272
  %v430 = vunpack.c.l.b16 %v273
  %v431 = vunpack.c.h.b16 %v273
  %v432 = vunpack.c.l.b16 %v274
  %v433 = vunpack.c.h.b16 %v274
  %v434 = vunpack.c.l.b16 %v275
  %v435 = vunpack.c.h.b16 %v275
  %v436 = vunpack.c.l.b16 %v276
  %v437 = vunpack.c.h.b16 %v276
  %v438 = vunpack.c.l.b16 %v277
  %v439 = vunpack.c.h.b16 %v277
  %v440 = vunpack.c.l.b16 %v278
  %v441 = vunpack.c.h.b16 %v278
  %v442 = vunpack.c.l.b16 %v279
  %v443 = vunpack.c.h.b16 %v279
  %v444 = vunpack.c.l.b16 %v280
  %v445 = vunpack.c.h.b16 %v280
  %v446 = vunpack.c.l.b16 %v281
  %v447 = vunpack.c.h.b16 %v281
  %v448 = vunpack.c.l.b16 %v282
  %v449 = vunpack.c.h.b16 %v282
  %v450 = vunpack.c.l.b16 %v283
  %v451 = vunpack.c.h.b16 %v283
  %v452 = vunpack.c.l.b16 %v284
  %v453 = vunpack.c.h.b16 %v284
  %v454 = vunpack.c.l.b16 %v285
  %v455 = vunpack.c.h.b16 %v285
  %v456 = vunpack.c.l.b16 %v286
  %v457 = vunpack.c.h.b16 %v286
  %v458 = vunpack.c.l.b16 %v287
  %v459 = vunpack.c.h.b16 %v287
  %v460 = vunpack.c.l.b16 %v288
  %v461 = vunpack.c.h.b16 %v288
  %v462 = vunpack.c.l.b16 %v289
  %v463 = vunpack.c.h.b16 %v289
  %v464 = vunpack.c.l.b16 %v290
  %v465 = vunpack.c.h.b16 %v290
  %v466 = vunpack.c.l.b16 %v291
  %v467 = vunpack.c.h.b16 %v291
  %v468 = vunpack.c.l.b16 %v292
  %v469 = vunpack.c.h.b16 %v292
  %v470 = vunpack.c.l.b16 %v293
  %v471 = vunpack.c.h.b16 %v293
  %v472 = vunpack.c.l.b16 %v294
  %v473 = vunpack.c.h.b16 %v294
  %v474 = vunpack.c.l.b16 %v295
  %v475 = vunpack.c.h.b16 %v295
  %v476 = vunpack.c.l.b16 %v296
  %v477 = vunpack.c.h.b16 %v296
  %v478 = vunpack.c.l.b16 %v297
  %v479 = vunpack.c.h.b16 %v297
  %v480 = vunpack.c.l.b16 %v298
  %v481 = vunpack.c.h.b16 %v298
  %v482 = vunpack.c.l.b16 %v299
  %v483 = vunpack.c.h.b16 %v299
  %v484 = vunpack.c.l.b16 %v300
  %v485 = vunpack.c.h.b16 %v300
  %v486 = vunpack.c.l.b16 %v301
  %v487 = vunpack.c.h.b16 %v301
  %v488 = vunpack.c.l.b16 %v302
  %v489 = vunpack.c.h.b16 %v302
  %v490 = vunpack.c.l.b16 %v303
  %v491 = vunpack.c.h.b16 %v303
  %v492 = vunpack.c.l.b16 %v304
  %v493 = vunpack.c.h.b16 %v304
  %v494 = vunpack.c.l.b16 %v305
  %v495 = vunpack.c.h.b16 %v305
  %v496 = vunpack.c.l.b16 %v306
  %v497 = vunpack.c.h.b16 %v306
  %v498 = vunpack.c.l.b16 %v307
  %v499 = vunpack.c.h.b16 %v307
  %v500 = vunpack.c.l.b16 %v308
  %v501 = vunpack.c.h.b16 %v308
  %v502 = vunpack.c.l.b16 %v309
  %v503 = vunpack.c.h.b16 %v309
  %v504 = vunpack.c.l.b16 %v310
  %v505 = vunpack.c.h.b16 %v310
  %v506 = vunpack.c.l.b16 %v311
  %v507 = vunpack.c.h.b16 %v311
  %v508 = vunpack.c.l.b16 %v312
  %v509 = vunpack.c.h.b16 %v312
  %v510 = vunpack.c.l.b16 %v313
  %v511 = vunpack.c.h.b16 %v313
  %v512 = vunpack.c.l.b16 %v314
  %v513 = vunpack.c.h.b16 %v314
  %v514 = vunpack.c.l.b16 %v315
  %v515 = vunpack.c.h.b16 %v315
  %v516 = vunpack.c.l.b16 %v316
  %v517 = vunpack.c.h.b16 %v316
  %v518 = vunpack.c.l.b16 %v317
  %v519 = vunpack.c.h.b16 %v317
  %v520 = vunpack.c.l.b16 %v318
  %v521 = vunpack.c.h.b16 %v318
  %v522 = vunpack.c.l.b16 %v319
  %v523 = vunpack.c.h.b16 %v319
  %v524 = vunpack.c.l.b16 %v320
  %v525 = vunpack.c.h.b16 %v320
  %v526 = vunpack.c.l.b16 %v321
  %v527 = vunpack.c.h.b16 %v321
  %v528 = vunpack.c.l.b16 %v322
  %v529 = vunpack.c.h.b16 %v322
  %v530 = vunpack.c.l.b16 %v323
  %v531 = vunpack.c.h.b16 %v323
  %v532 = vunpack.c.l.b16 %v324
  %v533 = vunpack.c.h.b16 %v324
  %v534 = vunpack.c.l.b16 %v325
  %v535 = vunpack.c.h.b16 %v325
  %v536 = vunpack.c.l.b16 %v326
  %v537 = vunpack.c.h.b16 %v326
  %v538 = vunpack.c.l.b16 %v327
  %v539 = vunpack.c.h.b16 %v327
  %v540 = vunpack.c.l.b16 %v328
  %v541 = vunpack.c.h.b16 %v328
  %v542 = vunpack.c.l.b16 %v329
  %v543 = vunpack.c.h.b16 %v329
  %v544 = vunpack.c.l.b16 %v330
  %v545 = vunpack.c.h.b16 %v330
  %v546 = vunpack.c.l.b16 %v331
  %v547 = vunpack.c.h.b16 %v331
  %v548 = vpack.c.b16 %v406, %v404
  %v549 = vpack.c.b16 %v407, %v405
  %v550 = vpack.c.b16 %v410, %v408
  %v551 = vpack.c.b16 %v411, %v409
  %v552 = vpack.c.b16 %v414, %v412
  %v553 = vpack.c.b16 %v415, %v413
  %v554 = vpack.c.b16 %v418, %v416
  %v555 = vpack.c.b16 %v419, %v417
  %v556 = vpack.c.b16 %v422, %v420
  %v557 = vpack.c.b16 %v423, %v421
  %v558 = vpack.c.b16 %v426, %v424
  %v559 = vpack.c.b16 %v427, %v425
  %v560 = vpack.c.b16 %v430, %v428
  %v561 = vpack.c.b16 %v431, %v429
  %v562 = vpack.c.b16 %v434, %v432
  %v563 = vpack.c.b16 %v435, %v433
  %v564 = vpack.c.b16 %v438, %v436
  %v565 = vpack.c.b16 %v439, %v437
  %v566 = vpack.c.b16 %v442, %v440
  %v567 = vpack.c.b16 %v443, %v441
  %v568 = vpack.c.b16 %v446, %v444
  %v569 = vpack.c.b16 %v447, %v445
  %v570 = vpack.c.b16 %v450, %v448
  %v571 = vpack.c.b16 %v451, %v449
  %v572 = vpack.c.b16 %v454, %v452
  %v573 = vpack.c.b16 %v455, %v453
  %v574 = vpack.c.b16 %v458, %v456
  %v575 = vpack.c.b16 %v459, %v457
  %v576 = vpack.c.b16 %v462, %v460
  %v577 = vpack.c.b16 %v463, %v461
  %v578 = vpack.c.b16 %v466, %v464
  %v579 = vpack.c.b16 %v467, %v465
  %v580 = vpack.c.b16 %v470, %v468
  %v581 = vpack.c.b16 %v471, %v469
  %v582 = vpack.c.b16 %v474, %v472
  %v583 = vpack.c.b16 %v475, %v473
  %v584 = vpack.c.b16 %v478, %v476
  %v585 = vpack.c.b16 %v479, %v477
  %v586 = vpack.c.b16 %v482, %v480
  %v587 = vpack.c.b16 %v483, %v481
  %v588 = vpack.c.b16 %v486, %v484
  %v589 = vpack.c.b16 %v487, %v485
  %v590 = vpack.c.b16 %v490, %v488
  %v591 = vpack.c.b16 %v491, %v489
  %v592 = vpack.c.b16 %v494, %v492
  %v593 = vpack.c.b16 %v495, %v493
  %v594 = vpack.c.b16 %v498, %v496
  %v595 = vpack.c.b16 %v499, %v497
  %v596 = vpack.c.b16 %v502, %v500
  %v597 = vpack.c.b16 %v503, %v501
  %v598 = vpack.c.b16 %v506, %v504
  %v599 = vpack.c.b16 %v507, %v505
  %v600 = vpack.c.b16 %v510, %v508
  %v601 = vpack.c.b16 %v511, %v509
  %v602 = vpack.c.b16 %v514, %v512
  %v603 = vpack.c.b16 %v515, %v513
  %v604 = vpack.c.b16 %v518, %v516
  %v605 = vpack.c.b16 %v519, %v517
  %v606 = vpack.c.b16 %v522, %v520
  %v607 = vpack.c.b16 %v523, %v521
  %v608 = vpack.c.b16 %v526, %v524
  %v609 = vpack.c.b16 %v527, %v525
  %v610 = vpack.c.b16 %v530, %v528
  %v611 = vpack.c.b16 %v531, %v529
  %v612 = vpack.c.b16 %v534, %v532
  %v613 = vpack.c.b16 %v535, %v533
  %v614 = vpack.c.b16 %v538, %v536
  %v615 = vpack.c.b16 %v539, %v537
  %v616 = vpack.c.b16 %v542, %v540
  %v617 = vpack.c.b16 %v543, %v541
  %v618 = vpack.c.b16 %v546, %v544
  %v619 = vpack.c.b16 %v547, %v545
  %vm692 = vcmask 523264
  %v694 = vsel %vm692, %v224, 0
  %v697 = vsel %vm692, %v229, 0
  %v700 = vsel %vm692, %v234, 0
  %v703 = vsel %vm692, %v239, 0
  %v706 = vsel %vm692, %v244, 0
  %v709 = vsel %vm692, %v249, 0
  %v712 = vsel %vm692, %v254, 0
  %v715 = vsel %vm692, %v259, 0
  %717 = vmatprep.subr.bf16.mxu0 %v563
  %718 = vmatpush1.bf16.msra.mxu0 %v562
  %719 = vmatprep.subr.bf16.mxu0 %v561
  %720 = vmatpush1.bf16.msra.mxu0 %v560
  %721 = vmatprep.subr.bf16.mxu0 %v559
  %722 = vmatpush1.bf16.msra.mxu0 %v558
  %723 = vmatprep.subr.bf16.mxu0 %v557
  %724 = vmatpush1.bf16.msra.mxu0 %v556
  %725 = vmatprep.subr.bf16.mxu0 %v555
  %726 = vmatpush1.bf16.msra.mxu0 %v554
  %727 = vmatprep.subr.bf16.mxu0 %v553
  %728 = vmatpush1.bf16.msra.mxu0 %v552
  %729 = vmatprep.subr.bf16.mxu0 %v551
  %730 = vmatpush1.bf16.msra.mxu0 %v550
  %731 = vmatprep.subr.bf16.mxu0 %v549
  %732 = vmatpush1.bf16.msra.mxu0 %v548
  %733 = vmatprep.subr.bf16.mxu0 %v579
  %734 = vmatpush2.bf16.msra.mxu0 %v578
  %735 = vmatprep.subr.bf16.mxu0 %v577
  %736 = vmatpush2.bf16.msra.mxu0 %v576
  %737 = vmatprep.subr.bf16.mxu0 %v575
  %738 = vmatpush2.bf16.msra.mxu0 %v574
  %739 = vmatprep.subr.bf16.mxu0 %v573
  %740 = vmatpush2.bf16.msra.mxu0 %v572
  %741 = vmatprep.subr.bf16.mxu0 %v571
  %742 = vmatpush2.bf16.msra.mxu0 %v570
  %743 = vmatprep.subr.bf16.mxu0 %v569
  %744 = vmatpush2.bf16.msra.mxu0 %v568
  %745 = vmatprep.subr.bf16.mxu0 %v567
  %746 = vmatpush2.bf16.msra.mxu0 %v566
  %747 = vmatprep.subr.bf16.mxu0 %v565
  %748 = vmatpush2.bf16.msra.mxu0 %v564
  %749 = vmatprep.mubr.bf16.mxu0 %v221
  %750 = vmatmul.mubr.bf16.gmra.mxu0 %v220
  %v751 = vpop.f32.mrf.mxu0
  %v752 = vadd.f32 0.0, %v751
  %v753 = vpop.f32.mrf.mxu0
  %v754 = vadd.f32 0.0, %v753
  %v755 = vpop.f32.mrf.mxu0
  %v756 = vadd.f32 0.0, %v755
  %v757 = vpop.f32.mrf.mxu0
  %v758 = vadd.f32 0.0, %v757
  %759 = vmatprep.mubr.bf16.mxu0 %v226
  %760 = vmatmul.mubr.bf16.gmra.mxu0 %v225
  %v761 = vpop.f32.mrf.mxu0
  %v762 = vadd.f32 0.0, %v761
  %v763 = vpop.f32.mrf.mxu0
  %v764 = vadd.f32 0.0, %v763
  %v765 = vpop.f32.mrf.mxu0
  %v766 = vadd.f32 0.0, %v765
  %v767 = vpop.f32.mrf.mxu0
  %v768 = vadd.f32 0.0, %v767
  %769 = vmatprep.mubr.bf16.mxu0 %v231
  %770 = vmatmul.mubr.bf16.gmra.mxu0 %v230
  %v771 = vpop.f32.mrf.mxu0
  %v772 = vadd.f32 0.0, %v771
  %v773 = vpop.f32.mrf.mxu0
  %v774 = vadd.f32 0.0, %v773
  %v775 = vpop.f32.mrf.mxu0
  %v776 = vadd.f32 0.0, %v775
  %v777 = vpop.f32.mrf.mxu0
  %v778 = vadd.f32 0.0, %v777
  %779 = vmatprep.mubr.bf16.mxu0 %v236
  %780 = vmatmul.mubr.bf16.gmra.mxu0 %v235
  %v781 = vpop.f32.mrf.mxu0
  %v782 = vadd.f32 0.0, %v781
  %v783 = vpop.f32.mrf.mxu0
  %v784 = vadd.f32 0.0, %v783
  %v785 = vpop.f32.mrf.mxu0
  %v786 = vadd.f32 0.0, %v785
  %v787 = vpop.f32.mrf.mxu0
  %v788 = vadd.f32 0.0, %v787
  %789 = vmatprep.mubr.bf16.mxu0 %v241
  %790 = vmatmul.mubr.bf16.gmra.mxu0 %v240
  %v791 = vpop.f32.mrf.mxu0
  %v792 = vadd.f32 0.0, %v791
  %v793 = vpop.f32.mrf.mxu0
  %v794 = vadd.f32 0.0, %v793
  %v795 = vpop.f32.mrf.mxu0
  %v796 = vadd.f32 0.0, %v795
  %v797 = vpop.f32.mrf.mxu0
  %v798 = vadd.f32 0.0, %v797
  %799 = vmatprep.mubr.bf16.mxu0 %v246
  %800 = vmatmul.mubr.bf16.gmra.mxu0 %v245
  %v801 = vpop.f32.mrf.mxu0
  %v802 = vadd.f32 0.0, %v801
  %v803 = vpop.f32.mrf.mxu0
  %v804 = vadd.f32 0.0, %v803
  %v805 = vpop.f32.mrf.mxu0
  %v806 = vadd.f32 0.0, %v805
  %v807 = vpop.f32.mrf.mxu0
  %v808 = vadd.f32 0.0, %v807
  %809 = vmatprep.mubr.bf16.mxu0 %v251
  %810 = vmatmul.mubr.bf16.gmra.mxu0 %v250
  %v811 = vpop.f32.mrf.mxu0
  %v812 = vadd.f32 0.0, %v811
  %v813 = vpop.f32.mrf.mxu0
  %v814 = vadd.f32 0.0, %v813
  %v815 = vpop.f32.mrf.mxu0
  %v816 = vadd.f32 0.0, %v815
  %v817 = vpop.f32.mrf.mxu0
  %v818 = vadd.f32 0.0, %v817
  %819 = vmatprep.mubr.bf16.mxu0 %v256
  %820 = vmatmul.mubr.bf16.gmra.mxu0 %v255
  %v821 = vpop.f32.mrf.mxu0
  %v822 = vadd.f32 0.0, %v821
  %v823 = vpop.f32.mrf.mxu0
  %v824 = vadd.f32 0.0, %v823
  %v825 = vpop.f32.mrf.mxu0
  %v826 = vadd.f32 0.0, %v825
  %v827 = vpop.f32.mrf.mxu0
  %v828 = vadd.f32 0.0, %v827
  %829 = vdwg.mxu0
  %830 = vmatprep.subr.bf16.mxu0 %v595
  %831 = vmatpush1.bf16.msra.mxu0 %v594
  %832 = vmatprep.subr.bf16.mxu0 %v593
  %833 = vmatpush1.bf16.msra.mxu0 %v592
  %834 = vmatprep.subr.bf16.mxu0 %v591
  %835 = vmatpush1.bf16.msra.mxu0 %v590
  %836 = vmatprep.subr.bf16.mxu0 %v589
  %837 = vmatpush1.bf16.msra.mxu0 %v588
  %838 = vmatprep.subr.bf16.mxu0 %v587
  %839 = vmatpush1.bf16.msra.mxu0 %v586
  %840 = vmatprep.subr.bf16.mxu0 %v585
  %841 = vmatpush1.bf16.msra.mxu0 %v584
  %842 = vmatprep.subr.bf16.mxu0 %v583
  %843 = vmatpush1.bf16.msra.mxu0 %v582
  %844 = vmatprep.subr.bf16.mxu0 %v581
  %845 = vmatpush1.bf16.msra.mxu0 %v580
  %846 = vmatprep.subr.bf16.mxu0 %v611
  %847 = vmatpush2.bf16.msra.mxu0 %v610
  %848 = vmatprep.subr.bf16.mxu0 %v609
  %849 = vmatpush2.bf16.msra.mxu0 %v608
  %850 = vmatprep.subr.bf16.mxu0 %v607
  %851 = vmatpush2.bf16.msra.mxu0 %v606
  %852 = vmatprep.subr.bf16.mxu0 %v605
  %853 = vmatpush2.bf16.msra.mxu0 %v604
  %854 = vmatprep.subr.bf16.mxu0 %v603
  %855 = vmatpush2.bf16.msra.mxu0 %v602
  %856 = vmatprep.subr.bf16.mxu0 %v601
  %857 = vmatpush2.bf16.msra.mxu0 %v600
  %858 = vmatprep.subr.bf16.mxu0 %v599
  %859 = vmatpush2.bf16.msra.mxu0 %v598
  %860 = vmatprep.subr.bf16.mxu0 %v597
  %861 = vmatpush2.bf16.msra.mxu0 %v596
  %862 = vmatprep.mubr.bf16.mxu0 %v223
  %863 = vmatmul.mubr.bf16.gmra.mxu0 %v222
  %v864 = vpop.f32.mrf.mxu0
  %v865 = vadd.f32 %v752, %v864
  %v866 = vpop.f32.mrf.mxu0
  %v867 = vadd.f32 %v754, %v866
  %v868 = vpop.f32.mrf.mxu0
  %v869 = vadd.f32 %v756, %v868
  %v870 = vpop.f32.mrf.mxu0
  %v871 = vadd.f32 %v758, %v870
  %872 = vmatprep.mubr.bf16.mxu0 %v228
  %873 = vmatmul.mubr.bf16.gmra.mxu0 %v227
  %v874 = vpop.f32.mrf.mxu0
  %v875 = vadd.f32 %v762, %v874
  %v876 = vpop.f32.mrf.mxu0
  %v877 = vadd.f32 %v764, %v876
  %v878 = vpop.f32.mrf.mxu0
  %v879 = vadd.f32 %v766, %v878
  %v880 = vpop.f32.mrf.mxu0
  %v881 = vadd.f32 %v768, %v880
  %882 = vmatprep.mubr.bf16.mxu0 %v233
  %883 = vmatmul.mubr.bf16.gmra.mxu0 %v232
  %v884 = vpop.f32.mrf.mxu0
  %v885 = vadd.f32 %v772, %v884
  %v886 = vpop.f32.mrf.mxu0
  %v887 = vadd.f32 %v774, %v886
  %v888 = vpop.f32.mrf.mxu0
  %v889 = vadd.f32 %v776, %v888
  %v890 = vpop.f32.mrf.mxu0
  %v891 = vadd.f32 %v778, %v890
  %892 = vmatprep.mubr.bf16.mxu0 %v238
  %893 = vmatmul.mubr.bf16.gmra.mxu0 %v237
  %v894 = vpop.f32.mrf.mxu0
  %v895 = vadd.f32 %v782, %v894
  %v896 = vpop.f32.mrf.mxu0
  %v897 = vadd.f32 %v784, %v896
  %v898 = vpop.f32.mrf.mxu0
  %v899 = vadd.f32 %v786, %v898
  %v900 = vpop.f32.mrf.mxu0
  %v901 = vadd.f32 %v788, %v900
  %902 = vmatprep.mubr.bf16.mxu0 %v243
  %903 = vmatmul.mubr.bf16.gmra.mxu0 %v242
  %v904 = vpop.f32.mrf.mxu0
  %v905 = vadd.f32 %v792, %v904
  %v906 = vpop.f32.mrf.mxu0
  %v907 = vadd.f32 %v794, %v906
  %v908 = vpop.f32.mrf.mxu0
  %v909 = vadd.f32 %v796, %v908
  %v910 = vpop.f32.mrf.mxu0
  %v911 = vadd.f32 %v798, %v910
  %912 = vmatprep.mubr.bf16.mxu0 %v248
  %913 = vmatmul.mubr.bf16.gmra.mxu0 %v247
  %v914 = vpop.f32.mrf.mxu0
  %v915 = vadd.f32 %v802, %v914
  %v916 = vpop.f32.mrf.mxu0
  %v917 = vadd.f32 %v804, %v916
  %v918 = vpop.f32.mrf.mxu0
  %v919 = vadd.f32 %v806, %v918
  %v920 = vpop.f32.mrf.mxu0
  %v921 = vadd.f32 %v808, %v920
  %922 = vmatprep.mubr.bf16.mxu0 %v253
  %923 = vmatmul.mubr.bf16.gmra.mxu0 %v252
  %v924 = vpop.f32.mrf.mxu0
  %v925 = vadd.f32 %v812, %v924
  %v926 = vpop.f32.mrf.mxu0
  %v927 = vadd.f32 %v814, %v926
  %v928 = vpop.f32.mrf.mxu0
  %v929 = vadd.f32 %v816, %v928
  %v930 = vpop.f32.mrf.mxu0
  %v931 = vadd.f32 %v818, %v930
  %932 = vmatprep.mubr.bf16.mxu0 %v258
  %933 = vmatmul.mubr.bf16.gmra.mxu0 %v257
  %v934 = vpop.f32.mrf.mxu0
  %v935 = vadd.f32 %v822, %v934
  %v936 = vpop.f32.mrf.mxu0
  %v937 = vadd.f32 %v824, %v936
  %v938 = vpop.f32.mrf.mxu0
  %v939 = vadd.f32 %v826, %v938
  %v940 = vpop.f32.mrf.mxu0
  %v941 = vadd.f32 %v828, %v940
  %942 = vdwg.mxu0
  %943 = vmatprep.subr.bf16.mxu0 0
  %944 = vmatpush1.bf16.msra.mxu0 0
  %945 = vmatprep.subr.bf16.mxu0 0
  %946 = vmatpush1.bf16.msra.mxu0 0
  %947 = vmatprep.subr.bf16.mxu0 0
  %948 = vmatpush1.bf16.msra.mxu0 0
  %949 = vmatprep.subr.bf16.mxu0 0
  %950 = vmatpush1.bf16.msra.mxu0 0
  %951 = vmatprep.subr.bf16.mxu0 %v619
  %952 = vmatpush1.bf16.msra.mxu0 %v618
  %953 = vmatprep.subr.bf16.mxu0 %v617
  %954 = vmatpush1.bf16.msra.mxu0 %v616
  %955 = vmatprep.subr.bf16.mxu0 %v615
  %956 = vmatpush1.bf16.msra.mxu0 %v614
  %957 = vmatprep.subr.bf16.mxu0 %v613
  %958 = vmatpush1.bf16.msra.mxu0 %v612
  %959 = vmatprep.subr.bf16.mxu0 0
  %960 = vmatpush2.bf16.msra.mxu0 0
  %961 = vmatprep.subr.bf16.mxu0 0
  %962 = vmatpush2.bf16.msra.mxu0 0
  %963 = vmatprep.subr.bf16.mxu0 0
  %964 = vmatpush2.bf16.msra.mxu0 0
  %965 = vmatprep.subr.bf16.mxu0 0
  %966 = vmatpush2.bf16.msra.mxu0 0
  %967 = vmatprep.subr.bf16.mxu0 0
  %968 = vmatpush2.bf16.msra.mxu0 0
  %969 = vmatprep.subr.bf16.mxu0 0
  %970 = vmatpush2.bf16.msra.mxu0 0
  %971 = vmatprep.subr.bf16.mxu0 0
  %972 = vmatpush2.bf16.msra.mxu0 0
  %973 = vmatprep.subr.bf16.mxu0 0
  %974 = vmatpush2.bf16.msra.mxu0 0
  %975 = vmatprep.mubr.bf16.mxu0 0
  %976 = vmatmul.mubr.bf16.gmra.mxu0 %v694
  %v977 = vpop.f32.mrf.mxu0
  %v978 = vadd.f32 %v865, %v977
  %v979 = vpop.f32.mrf.mxu0
  %v980 = vadd.f32 %v867, %v979
  %v981 = vpop.f32.mrf.mxu0
  %v982 = vadd.f32 %v869, %v981
  %v983 = vpop.f32.mrf.mxu0
  %v984 = vadd.f32 %v871, %v983
  %985 = vmatprep.mubr.bf16.mxu0 0
  %986 = vmatmul.mubr.bf16.gmra.mxu0 %v697
  %v987 = vpop.f32.mrf.mxu0
  %v988 = vadd.f32 %v875, %v987
  %v989 = vpop.f32.mrf.mxu0
  %v990 = vadd.f32 %v877, %v989
  %v991 = vpop.f32.mrf.mxu0
  %v992 = vadd.f32 %v879, %v991
  %v993 = vpop.f32.mrf.mxu0
  %v994 = vadd.f32 %v881, %v993
  %995 = vmatprep.mubr.bf16.mxu0 0
  %996 = vmatmul.mubr.bf16.gmra.mxu0 %v700
  %v997 = vpop.f32.mrf.mxu0
  %v998 = vadd.f32 %v885, %v997
  %v999 = vpop.f32.mrf.mxu0
  %v1000 = vadd.f32 %v887, %v999
  %v1001 = vpop.f32.mrf.mxu0
  %v1002 = vadd.f32 %v889, %v1001
  %v1003 = vpop.f32.mrf.mxu0
  %v1004 = vadd.f32 %v891, %v1003
  %1005 = vmatprep.mubr.bf16.mxu0 0
  %1006 = vmatmul.mubr.bf16.gmra.mxu0 %v703
  %v1007 = vpop.f32.mrf.mxu0
  %v1008 = vadd.f32 %v895, %v1007
  %v1009 = vpop.f32.mrf.mxu0
  %v1010 = vadd.f32 %v897, %v1009
  %v1011 = vpop.f32.mrf.mxu0
  %v1012 = vadd.f32 %v899, %v1011
  %v1013 = vpop.f32.mrf.mxu0
  %v1014 = vadd.f32 %v901, %v1013
  %1015 = vmatprep.mubr.bf16.mxu0 0
  %1016 = vmatmul.mubr.bf16.gmra.mxu0 %v706
  %v1017 = vpop.f32.mrf.mxu0
  %v1018 = vadd.f32 %v905, %v1017
  %v1019 = vpop.f32.mrf.mxu0
  %v1020 = vadd.f32 %v907, %v1019
  %v1021 = vpop.f32.mrf.mxu0
  %v1022 = vadd.f32 %v909, %v1021
  %v1023 = vpop.f32.mrf.mxu0
  %v1024 = vadd.f32 %v911, %v1023
  %1025 = vmatprep.mubr.bf16.mxu0 0
  %1026 = vmatmul.mubr.bf16.gmra.mxu0 %v709
  %v1027 = vpop.f32.mrf.mxu0
  %v1028 = vadd.f32 %v915, %v1027
  %v1029 = vpop.f32.mrf.mxu0
  %v1030 = vadd.f32 %v917, %v1029
  %v1031 = vpop.f32.mrf.mxu0
  %v1032 = vadd.f32 %v919, %v1031
  %v1033 = vpop.f32.mrf.mxu0
  %v1034 = vadd.f32 %v921, %v1033
  %1035 = vmatprep.mubr.bf16.mxu0 0
  %1036 = vmatmul.mubr.bf16.gmra.mxu0 %v712
  %v1037 = vpop.f32.mrf.mxu0
  %v1038 = vadd.f32 %v925, %v1037
  %v1039 = vpop.f32.mrf.mxu0
  %v1040 = vadd.f32 %v927, %v1039
  %v1041 = vpop.f32.mrf.mxu0
  %v1042 = vadd.f32 %v929, %v1041
  %v1043 = vpop.f32.mrf.mxu0
  %v1044 = vadd.f32 %v931, %v1043
  %1045 = vmatprep.mubr.bf16.mxu0 0
  %1046 = vmatmul.mubr.bf16.gmra.mxu0 %v715
  %v1047 = vpop.f32.mrf.mxu0
  %v1048 = vadd.f32 %v935, %v1047
  %v1049 = vpop.f32.mrf.mxu0
  %v1050 = vadd.f32 %v937, %v1049
  %v1051 = vpop.f32.mrf.mxu0
  %v1052 = vadd.f32 %v939, %v1051
  %v1053 = vpop.f32.mrf.mxu0
  %v1054 = vadd.f32 %v941, %v1053
  %1055 = vdwg.mxu0
  %v1056 = vld [vmem:[%s2] sm:$0x3]
  %v1058 = vlaneseq
  %v1059 = vshrl.u32 %v1058, 7
  %v1060 = vsub.s32 0, %v1059
  %v1061 = vrot.slane %v1056, %v1060
  %v1062 = vlaneseq
  %v1063 = vshrl.u32 %v1062, 7
  %v1064 = vsub.s32 1, %v1063
  %v1065 = vrot.slane %v1056, %v1064
  %v1068 = vmul.f32 %v978, %v1061
  %v1069 = vmul.f32 %v980, %v1065
  %v1070 = vmul.f32 %v982, %v1061
  %v1071 = vmul.f32 %v984, %v1065
  %v1072 = vmul.f32 %v988, %v1061
  %v1073 = vmul.f32 %v990, %v1065
  %v1074 = vmul.f32 %v992, %v1061
  %v1075 = vmul.f32 %v994, %v1065
  %v1076 = vmul.f32 %v998, %v1061
  %v1077 = vmul.f32 %v1000, %v1065
  %v1078 = vmul.f32 %v1002, %v1061
  %v1079 = vmul.f32 %v1004, %v1065
  %v1080 = vmul.f32 %v1008, %v1061
  %v1081 = vmul.f32 %v1010, %v1065
  %v1082 = vmul.f32 %v1012, %v1061
  %v1083 = vmul.f32 %v1014, %v1065
  %v1084 = vmul.f32 %v1018, %v1061
  %v1085 = vmul.f32 %v1020, %v1065
  %v1086 = vmul.f32 %v1022, %v1061
  %v1087 = vmul.f32 %v1024, %v1065
  %v1088 = vmul.f32 %v1028, %v1061
  %v1089 = vmul.f32 %v1030, %v1065
  %v1090 = vmul.f32 %v1032, %v1061
  %v1091 = vmul.f32 %v1034, %v1065
  %v1092 = vmul.f32 %v1038, %v1061
  %v1093 = vmul.f32 %v1040, %v1065
  %v1094 = vmul.f32 %v1042, %v1061
  %v1095 = vmul.f32 %v1044, %v1065
  %v1096 = vmul.f32 %v1048, %v1061
  %v1097 = vmul.f32 %v1050, %v1065
  %v1098 = vmul.f32 %v1052, %v1061
  %v1099 = vmul.f32 %v1054, %v1065
  %v1100 = vld [vmem:[%s3] sm:$0x3]
  %v1102 = vlaneseq
  %v1103 = vshrl.u32 %v1102, 7
  %v1104 = vsub.s32 0, %v1103
  %v1105 = vrot.slane %v1100, %v1104
  %v1106 = vlaneseq
  %v1107 = vshrl.u32 %v1106, 7
  %v1108 = vsub.s32 1, %v1107
  %v1109 = vrot.slane %v1100, %v1108
  %v1112 = vadd.f32 %v1068, %v1105
  %v1113 = vadd.f32 %v1069, %v1109
  %v1114 = vadd.f32 %v1070, %v1105
  %v1115 = vadd.f32 %v1071, %v1109
  %v1116 = vadd.f32 %v1072, %v1105
  %v1117 = vadd.f32 %v1073, %v1109
  %v1118 = vadd.f32 %v1074, %v1105
  %v1119 = vadd.f32 %v1075, %v1109
  %v1120 = vadd.f32 %v1076, %v1105
  %v1121 = vadd.f32 %v1077, %v1109
  %v1122 = vadd.f32 %v1078, %v1105
  %v1123 = vadd.f32 %v1079, %v1109
  %v1124 = vadd.f32 %v1080, %v1105
  %v1125 = vadd.f32 %v1081, %v1109
  %v1126 = vadd.f32 %v1082, %v1105
  %v1127 = vadd.f32 %v1083, %v1109
  %v1128 = vadd.f32 %v1084, %v1105
  %v1129 = vadd.f32 %v1085, %v1109
  %v1130 = vadd.f32 %v1086, %v1105
  %v1131 = vadd.f32 %v1087, %v1109
  %v1132 = vadd.f32 %v1088, %v1105
  %v1133 = vadd.f32 %v1089, %v1109
  %v1134 = vadd.f32 %v1090, %v1105
  %v1135 = vadd.f32 %v1091, %v1109
  %v1136 = vadd.f32 %v1092, %v1105
  %v1137 = vadd.f32 %v1093, %v1109
  %v1138 = vadd.f32 %v1094, %v1105
  %v1139 = vadd.f32 %v1095, %v1109
  %v1140 = vadd.f32 %v1096, %v1105
  %v1141 = vadd.f32 %v1097, %v1109
  %v1142 = vadd.f32 %v1098, %v1105
  %v1143 = vadd.f32 %v1099, %v1109
  %v1144 = vmax.f32 %v1112, 0.0
  %v1145 = vmax.f32 %v1113, 0.0
  %v1146 = vmax.f32 %v1114, 0.0
  %v1147 = vmax.f32 %v1115, 0.0
  %v1148 = vmax.f32 %v1116, 0.0
  %v1149 = vmax.f32 %v1117, 0.0
  %v1150 = vmax.f32 %v1118, 0.0
  %v1151 = vmax.f32 %v1119, 0.0
  %v1152 = vmax.f32 %v1120, 0.0
  %v1153 = vmax.f32 %v1121, 0.0
  %v1154 = vmax.f32 %v1122, 0.0
  %v1155 = vmax.f32 %v1123, 0.0
  %v1156 = vmax.f32 %v1124, 0.0
  %v1157 = vmax.f32 %v1125, 0.0
  %v1158 = vmax.f32 %v1126, 0.0
  %v1159 = vmax.f32 %v1127, 0.0
  %v1160 = vmax.f32 %v1128, 0.0
  %v1161 = vmax.f32 %v1129, 0.0
  %v1162 = vmax.f32 %v1130, 0.0
  %v1163 = vmax.f32 %v1131, 0.0
  %v1164 = vmax.f32 %v1132, 0.0
  %v1165 = vmax.f32 %v1133, 0.0
  %v1166 = vmax.f32 %v1134, 0.0
  %v1167 = vmax.f32 %v1135, 0.0
  %v1168 = vmax.f32 %v1136, 0.0
  %v1169 = vmax.f32 %v1137, 0.0
  %v1170 = vmax.f32 %v1138, 0.0
  %v1171 = vmax.f32 %v1139, 0.0
  %v1172 = vmax.f32 %v1140, 0.0
  %v1173 = vmax.f32 %v1141, 0.0
  %v1174 = vmax.f32 %v1142, 0.0
  %v1175 = vmax.f32 %v1143, 0.0
  %v1176 = vpack.c.bf16 %v1146, %v1144
  %v1177 = vpack.c.bf16 %v1150, %v1148
  %v1178 = vpack.c.bf16 %v1154, %v1152
  %v1179 = vpack.c.bf16 %v1158, %v1156
  %v1180 = vpack.c.bf16 %v1162, %v1160
  %v1181 = vpack.c.bf16 %v1166, %v1164
  %v1182 = vpack.c.bf16 %v1170, %v1168
  %v1183 = vpack.c.bf16 %v1174, %v1172
  %v1184 = vpack.c.bf16 %v1147, %v1145
  %v1185 = vpack.c.bf16 %v1151, %v1149
  %v1186 = vpack.c.bf16 %v1155, %v1153
  %v1187 = vpack.c.bf16 %v1159, %v1157
  %v1188 = vpack.c.bf16 %v1163, %v1161
  %v1189 = vpack.c.bf16 %v1167, %v1165
  %v1190 = vpack.c.bf16 %v1171, %v1169
  %v1191 = vpack.c.bf16 %v1175, %v1173
  %v1192 = vlaneseq
  %v1193 = vshrl.u32 %v1192, 7
  %v1194 = vadd.s32 %v1193, 8
  %v1195 = vadd.s32 %v1193, 16
  %v1196 = vadd.s32 %v1193, 24
  %v1197 = vadd.s32 %v1193, 32
  %v1198 = vadd.s32 %v1193, 40
  %v1199 = vadd.s32 %v1193, 48
  %v1200 = vadd.s32 %v1193, 56
  %v1201 = vadd.s32 %v1193, 64
  %v1202 = vadd.s32 %v1193, 72
  %v1203 = vadd.s32 %v1193, 80
  %v1204 = vadd.s32 %v1193, 88
  %v1205 = vadd.s32 %v1193, 96
  %v1206 = vadd.s32 %v1193, 104
  %v1207 = vadd.s32 %v1193, 112
  %v1208 = vadd.s32 %v1193, 120
  %vm1209 = vcmp.lt.s32.totalorder %v1193, 0
  %v1210 = vsub.s32 0, %v1193
  %v1211 = vsel %vm1209, %v1210, %v1193
  %v1212 = vshrl.u32 %v1211, 3
  %v1213 = vand.u32 %v1211, 7
  %v1214 = vsub.s32 0, %v1213
  %v1215 = vsel %vm1209, %v1214, %v1213
  %vm1216 = vcmp.lt.s32.totalorder %v1194, 0
  %v1217 = vsub.s32 0, %v1194
  %v1218 = vsel %vm1216, %v1217, %v1194
  %v1219 = vshrl.u32 %v1218, 3
  %v1220 = vand.u32 %v1218, 7
  %v1221 = vsub.s32 0, %v1220
  %v1222 = vsel %vm1216, %v1221, %v1220
  %vm1223 = vcmp.lt.s32.totalorder %v1195, 0
  %v1224 = vsub.s32 0, %v1195
  %v1225 = vsel %vm1223, %v1224, %v1195
  %v1226 = vshrl.u32 %v1225, 3
  %v1227 = vand.u32 %v1225, 7
  %v1228 = vsub.s32 0, %v1227
  %v1229 = vsel %vm1223, %v1228, %v1227
  %vm1230 = vcmp.lt.s32.totalorder %v1196, 0
  %v1231 = vsub.s32 0, %v1196
  %v1232 = vsel %vm1230, %v1231, %v1196
  %v1233 = vshrl.u32 %v1232, 3
  %v1234 = vand.u32 %v1232, 7
  %v1235 = vsub.s32 0, %v1234
  %v1236 = vsel %vm1230, %v1235, %v1234
  %vm1237 = vcmp.lt.s32.totalorder %v1197, 0
  %v1238 = vsub.s32 0, %v1197
  %v1239 = vsel %vm1237, %v1238, %v1197
  %v1240 = vshrl.u32 %v1239, 3
  %v1241 = vand.u32 %v1239, 7
  %v1242 = vsub.s32 0, %v1241
  %v1243 = vsel %vm1237, %v1242, %v1241
  %vm1244 = vcmp.lt.s32.totalorder %v1198, 0
  %v1245 = vsub.s32 0, %v1198
  %v1246 = vsel %vm1244, %v1245, %v1198
  %v1247 = vshrl.u32 %v1246, 3
  %v1248 = vand.u32 %v1246, 7
  %v1249 = vsub.s32 0, %v1248
  %v1250 = vsel %vm1244, %v1249, %v1248
  %vm1251 = vcmp.lt.s32.totalorder %v1199, 0
  %v1252 = vsub.s32 0, %v1199
  %v1253 = vsel %vm1251, %v1252, %v1199
  %v1254 = vshrl.u32 %v1253, 3
  %v1255 = vand.u32 %v1253, 7
  %v1256 = vsub.s32 0, %v1255
  %v1257 = vsel %vm1251, %v1256, %v1255
  %vm1258 = vcmp.lt.s32.totalorder %v1200, 0
  %v1259 = vsub.s32 0, %v1200
  %v1260 = vsel %vm1258, %v1259, %v1200
  %v1261 = vshrl.u32 %v1260, 3
  %v1262 = vand.u32 %v1260, 7
  %v1263 = vsub.s32 0, %v1262
  %v1264 = vsel %vm1258, %v1263, %v1262
  %vm1265 = vcmp.lt.s32.totalorder %v1201, 0
  %v1266 = vsub.s32 0, %v1201
  %v1267 = vsel %vm1265, %v1266, %v1201
  %v1268 = vshrl.u32 %v1267, 3
  %v1269 = vand.u32 %v1267, 7
  %v1270 = vsub.s32 0, %v1269
  %v1271 = vsel %vm1265, %v1270, %v1269
  %vm1272 = vcmp.lt.s32.totalorder %v1202, 0
  %v1273 = vsub.s32 0, %v1202
  %v1274 = vsel %vm1272, %v1273, %v1202
  %v1275 = vshrl.u32 %v1274, 3
  %v1276 = vand.u32 %v1274, 7
  %v1277 = vsub.s32 0, %v1276
  %v1278 = vsel %vm1272, %v1277, %v1276
  %vm1279 = vcmp.lt.s32.totalorder %v1203, 0
  %v1280 = vsub.s32 0, %v1203
  %v1281 = vsel %vm1279, %v1280, %v1203
  %v1282 = vshrl.u32 %v1281, 3
  %v1283 = vand.u32 %v1281, 7
  %v1284 = vsub.s32 0, %v1283
  %v1285 = vsel %vm1279, %v1284, %v1283
  %vm1286 = vcmp.lt.s32.totalorder %v1204, 0
  %v1287 = vsub.s32 0, %v1204
  %v1288 = vsel %vm1286, %v1287, %v1204
  %v1289 = vshrl.u32 %v1288, 3
  %v1290 = vand.u32 %v1288, 7
  %v1291 = vsub.s32 0, %v1290
  %v1292 = vsel %vm1286, %v1291, %v1290
  %vm1293 = vcmp.lt.s32.totalorder %v1205, 0
  %v1294 = vsub.s32 0, %v1205
  %v1295 = vsel %vm1293, %v1294, %v1205
  %v1296 = vshrl.u32 %v1295, 3
  %v1297 = vand.u32 %v1295, 7
  %v1298 = vsub.s32 0, %v1297
  %v1299 = vsel %vm1293, %v1298, %v1297
  %vm1300 = vcmp.lt.s32.totalorder %v1206, 0
  %v1301 = vsub.s32 0, %v1206
  %v1302 = vsel %vm1300, %v1301, %v1206
  %v1303 = vshrl.u32 %v1302, 3
  %v1304 = vand.u32 %v1302, 7
  %v1305 = vsub.s32 0, %v1304
  %v1306 = vsel %vm1300, %v1305, %v1304
  %vm1307 = vcmp.lt.s32.totalorder %v1207, 0
  %v1308 = vsub.s32 0, %v1207
  %v1309 = vsel %vm1307, %v1308, %v1207
  %v1310 = vshrl.u32 %v1309, 3
  %v1311 = vand.u32 %v1309, 7
  %v1312 = vsub.s32 0, %v1311
  %v1313 = vsel %vm1307, %v1312, %v1311
  %vm1314 = vcmp.lt.s32.totalorder %v1208, 0
  %v1315 = vsub.s32 0, %v1208
  %v1316 = vsel %vm1314, %v1315, %v1208
  %v1317 = vshrl.u32 %v1316, 3
  %v1318 = vand.u32 %v1316, 7
  %v1319 = vsub.s32 0, %v1318
  %v1320 = vsel %vm1314, %v1319, %v1318
  %vm1321 = vcmp.ne.s32.totalorder %v1215, 0
  %vm1322 = vcmp.ne.s32.totalorder %v1222, 0
  %vm1323 = vcmp.ne.s32.totalorder %v1229, 0
  %vm1324 = vcmp.ne.s32.totalorder %v1236, 0
  %vm1325 = vcmp.ne.s32.totalorder %v1243, 0
  %vm1326 = vcmp.ne.s32.totalorder %v1250, 0
  %vm1327 = vcmp.ne.s32.totalorder %v1257, 0
  %vm1328 = vcmp.ne.s32.totalorder %v1264, 0
  %vm1329 = vcmp.ne.s32.totalorder %v1271, 0
  %vm1330 = vcmp.ne.s32.totalorder %v1278, 0
  %vm1331 = vcmp.ne.s32.totalorder %v1285, 0
  %vm1332 = vcmp.ne.s32.totalorder %v1292, 0
  %vm1333 = vcmp.ne.s32.totalorder %v1299, 0
  %vm1334 = vcmp.ne.s32.totalorder %v1306, 0
  %vm1335 = vcmp.ne.s32.totalorder %v1313, 0
  %vm1336 = vcmp.ne.s32.totalorder %v1320, 0
  %vm1337 = vcmp.lt.s32.totalorder %v1215, 0
  %vm1338 = vcmp.lt.s32.totalorder %v1222, 0
  %vm1339 = vcmp.lt.s32.totalorder %v1229, 0
  %vm1340 = vcmp.lt.s32.totalorder %v1236, 0
  %vm1341 = vcmp.lt.s32.totalorder %v1243, 0
  %vm1342 = vcmp.lt.s32.totalorder %v1250, 0
  %vm1343 = vcmp.lt.s32.totalorder %v1257, 0
  %vm1344 = vcmp.lt.s32.totalorder %v1264, 0
  %vm1345 = vcmp.lt.s32.totalorder %v1271, 0
  %vm1346 = vcmp.lt.s32.totalorder %v1278, 0
  %vm1347 = vcmp.lt.s32.totalorder %v1285, 0
  %vm1348 = vcmp.lt.s32.totalorder %v1292, 0
  %vm1349 = vcmp.lt.s32.totalorder %v1299, 0
  %vm1350 = vcmp.lt.s32.totalorder %v1306, 0
  %vm1351 = vcmp.lt.s32.totalorder %v1313, 0
  %vm1352 = vcmp.lt.s32.totalorder %v1320, 0
  %vm1353 = vmand %vm1337, %vm1321
  %vm1354 = vmand %vm1338, %vm1322
  %vm1355 = vmand %vm1339, %vm1323
  %vm1356 = vmand %vm1340, %vm1324
  %vm1357 = vmand %vm1341, %vm1325
  %vm1358 = vmand %vm1342, %vm1326
  %vm1359 = vmand %vm1343, %vm1327
  %vm1360 = vmand %vm1344, %vm1328
  %vm1361 = vmand %vm1345, %vm1329
  %vm1362 = vmand %vm1346, %vm1330
  %vm1363 = vmand %vm1347, %vm1331
  %vm1364 = vmand %vm1348, %vm1332
  %vm1365 = vmand %vm1349, %vm1333
  %vm1366 = vmand %vm1350, %vm1334
  %vm1367 = vmand %vm1351, %vm1335
  %vm1368 = vmand %vm1352, %vm1336
  %v1369 = vadd.s32 %v1215, 8
  %v1370 = vadd.s32 %v1222, 8
  %v1371 = vadd.s32 %v1229, 8
  %v1372 = vadd.s32 %v1236, 8
  %v1373 = vadd.s32 %v1243, 8
  %v1374 = vadd.s32 %v1250, 8
  %v1375 = vadd.s32 %v1257, 8
  %v1376 = vadd.s32 %v1264, 8
  %v1377 = vadd.s32 %v1271, 8
  %v1378 = vadd.s32 %v1278, 8
  %v1379 = vadd.s32 %v1285, 8
  %v1380 = vadd.s32 %v1292, 8
  %v1381 = vadd.s32 %v1299, 8
  %v1382 = vadd.s32 %v1306, 8
  %v1383 = vadd.s32 %v1313, 8
  %v1384 = vadd.s32 %v1320, 8
  %v1385 = vsel %vm1353, %v1369, %v1215
  %v1386 = vsel %vm1354, %v1370, %v1222
  %v1387 = vsel %vm1355, %v1371, %v1229
  %v1388 = vsel %vm1356, %v1372, %v1236
  %v1389 = vsel %vm1357, %v1373, %v1243
  %v1390 = vsel %vm1358, %v1374, %v1250
  %v1391 = vsel %vm1359, %v1375, %v1257
  %v1392 = vsel %vm1360, %v1376, %v1264
  %v1393 = vsel %vm1361, %v1377, %v1271
  %v1394 = vsel %vm1362, %v1378, %v1278
  %v1395 = vsel %vm1363, %v1379, %v1285
  %v1396 = vsel %vm1364, %v1380, %v1292
  %v1397 = vsel %vm1365, %v1381, %v1299
  %v1398 = vsel %vm1366, %v1382, %v1306
  %v1399 = vsel %vm1367, %v1383, %v1313
  %v1400 = vsel %vm1368, %v1384, %v1320
  %vm1401 = vcmp.eq.s32.totalorder %v1385, 0
  %vm1402 = vcmp.eq.s32.totalorder %v1386, 0
  %vm1403 = vcmp.eq.s32.totalorder %v1387, 0
  %vm1404 = vcmp.eq.s32.totalorder %v1388, 0
  %vm1405 = vcmp.eq.s32.totalorder %v1389, 0
  %vm1406 = vcmp.eq.s32.totalorder %v1390, 0
  %vm1407 = vcmp.eq.s32.totalorder %v1391, 0
  %vm1408 = vcmp.eq.s32.totalorder %v1392, 0
  %vm1409 = vcmp.eq.s32.totalorder %v1393, 0
  %vm1410 = vcmp.eq.s32.totalorder %v1394, 0
  %vm1411 = vcmp.eq.s32.totalorder %v1395, 0
  %vm1412 = vcmp.eq.s32.totalorder %v1396, 0
  %vm1413 = vcmp.eq.s32.totalorder %v1397, 0
  %vm1414 = vcmp.eq.s32.totalorder %v1398, 0
  %vm1415 = vcmp.eq.s32.totalorder %v1399, 0
  %vm1416 = vcmp.eq.s32.totalorder %v1400, 0
  %v1417 = vrot.slane %v1145, 7
  %v1418 = vrot.slane %v1147, 7
  %v1419 = vrot.slane %v1149, 7
  %v1420 = vrot.slane %v1151, 7
  %v1421 = vrot.slane %v1153, 7
  %v1422 = vrot.slane %v1155, 7
  %v1423 = vrot.slane %v1157, 7
  %v1424 = vrot.slane %v1159, 7
  %v1425 = vrot.slane %v1161, 7
  %v1426 = vrot.slane %v1163, 7
  %v1427 = vrot.slane %v1165, 7
  %v1428 = vrot.slane %v1167, 7
  %v1429 = vrot.slane %v1169, 7
  %v1430 = vrot.slane %v1171, 7
  %v1431 = vrot.slane %v1173, 7
  %v1432 = vrot.slane %v1175, 7
  %vm1433 = vcmp.lt.s32.totalorder %v1193, 1
  %v1434 = vsel %vm1433, %v1431, %v1432
  %v1435 = vsel %vm1433, %v1430, %v1431
  %v1436 = vsel %vm1433, %v1429, %v1430
  %v1437 = vsel %vm1433, %v1428, %v1429
  %v1438 = vsel %vm1433, %v1427, %v1428
  %v1439 = vsel %vm1433, %v1426, %v1427
  %v1440 = vsel %vm1433, %v1425, %v1426
  %v1441 = vsel %vm1433, %v1424, %v1425
  %v1442 = vsel %vm1433, %v1423, %v1424
  %v1443 = vsel %vm1433, %v1422, %v1423
  %v1444 = vsel %vm1433, %v1421, %v1422
  %v1445 = vsel %vm1433, %v1420, %v1421
  %v1446 = vsel %vm1433, %v1419, %v1420
  %v1447 = vsel %vm1433, %v1418, %v1419
  %v1448 = vsel %vm1433, %v1417, %v1418
  %v1449 = vsel %vm1433, %v1432, %v1417
  %v1450 = vsel %vm1401, 1, 0
  %v1451 = vsel %vm1402, 1, 0
  %v1452 = vsel %vm1403, 1, 0
  %v1453 = vsel %vm1404, 1, 0
  %v1454 = vsel %vm1405, 1, 0
  %v1455 = vsel %vm1406, 1, 0
  %v1456 = vsel %vm1407, 1, 0
  %v1457 = vsel %vm1408, 1, 0
  %v1458 = vsel %vm1409, 1, 0
  %v1459 = vsel %vm1410, 1, 0
  %v1460 = vsel %vm1411, 1, 0
  %v1461 = vsel %vm1412, 1, 0
  %v1462 = vsel %vm1413, 1, 0
  %v1463 = vsel %vm1414, 1, 0
  %v1464 = vsel %vm1415, 1, 0
  %v1465 = vsel %vm1416, 1, 0
  %vm1466 = vcmp.eq.s32.totalorder %v1450, 1
  %vm1467 = vcmp.eq.s32.totalorder %v1451, 1
  %vm1468 = vcmp.eq.s32.totalorder %v1452, 1
  %vm1469 = vcmp.eq.s32.totalorder %v1453, 1
  %vm1470 = vcmp.eq.s32.totalorder %v1454, 1
  %vm1471 = vcmp.eq.s32.totalorder %v1455, 1
  %vm1472 = vcmp.eq.s32.totalorder %v1456, 1
  %vm1473 = vcmp.eq.s32.totalorder %v1457, 1
  %vm1474 = vcmp.eq.s32.totalorder %v1458, 1
  %vm1475 = vcmp.eq.s32.totalorder %v1459, 1
  %vm1476 = vcmp.eq.s32.totalorder %v1460, 1
  %vm1477 = vcmp.eq.s32.totalorder %v1461, 1
  %vm1478 = vcmp.eq.s32.totalorder %v1462, 1
  %vm1479 = vcmp.eq.s32.totalorder %v1463, 1
  %vm1480 = vcmp.eq.s32.totalorder %v1464, 1
  %vm1481 = vcmp.eq.s32.totalorder %v1465, 1
  %v1482 = vsel %vm1466, 0.0, %v1449
  %v1483 = vsel %vm1467, 0.0, %v1448
  %v1484 = vsel %vm1468, 0.0, %v1447
  %v1485 = vsel %vm1469, 0.0, %v1446
  %v1486 = vsel %vm1470, 0.0, %v1445
  %v1487 = vsel %vm1471, 0.0, %v1444
  %v1488 = vsel %vm1472, 0.0, %v1443
  %v1489 = vsel %vm1473, 0.0, %v1442
  %v1490 = vsel %vm1474, 0.0, %v1441
  %v1491 = vsel %vm1475, 0.0, %v1440
  %v1492 = vsel %vm1476, 0.0, %v1439
  %v1493 = vsel %vm1477, 0.0, %v1438
  %v1494 = vsel %vm1478, 0.0, %v1437
  %v1495 = vsel %vm1479, 0.0, %v1436
  %v1496 = vsel %vm1480, 0.0, %v1435
  %v1497 = vsel %vm1481, 0.0, %v1434
  %v1498 = vpack.c.bf16 %v1483, %v1482
  %v1499 = vpack.c.bf16 %v1485, %v1484
  %v1500 = vpack.c.bf16 %v1487, %v1486
  %v1501 = vpack.c.bf16 %v1489, %v1488
  %v1502 = vpack.c.bf16 %v1491, %v1490
  %v1503 = vpack.c.bf16 %v1493, %v1492
  %v1504 = vpack.c.bf16 %v1495, %v1494
  %v1505 = vpack.c.bf16 %v1497, %v1496
  %vm1506 = vcmp.eq.s32.totalorder %v1385, 7
  %vm1507 = vcmp.eq.s32.totalorder %v1386, 7
  %vm1508 = vcmp.eq.s32.totalorder %v1387, 7
  %vm1509 = vcmp.eq.s32.totalorder %v1388, 7
  %vm1510 = vcmp.eq.s32.totalorder %v1389, 7
  %vm1511 = vcmp.eq.s32.totalorder %v1390, 7
  %vm1512 = vcmp.eq.s32.totalorder %v1391, 7
  %vm1513 = vcmp.eq.s32.totalorder %v1392, 7
  %vm1514 = vcmp.eq.s32.totalorder %v1393, 7
  %vm1515 = vcmp.eq.s32.totalorder %v1394, 7
  %vm1516 = vcmp.eq.s32.totalorder %v1395, 7
  %vm1517 = vcmp.eq.s32.totalorder %v1396, 7
  %vm1518 = vcmp.eq.s32.totalorder %v1397, 7
  %vm1519 = vcmp.eq.s32.totalorder %v1398, 7
  %vm1520 = vcmp.eq.s32.totalorder %v1399, 7
  %vm1521 = vcmp.eq.s32.totalorder %v1400, 7
  %v1522 = vrot.slane %v1145, 1
  %v1523 = vrot.slane %v1147, 1
  %v1524 = vrot.slane %v1149, 1
  %v1525 = vrot.slane %v1151, 1
  %v1526 = vrot.slane %v1153, 1
  %v1527 = vrot.slane %v1155, 1
  %v1528 = vrot.slane %v1157, 1
  %v1529 = vrot.slane %v1159, 1
  %v1530 = vrot.slane %v1161, 1
  %v1531 = vrot.slane %v1163, 1
  %v1532 = vrot.slane %v1165, 1
  %v1533 = vrot.slane %v1167, 1
  %v1534 = vrot.slane %v1169, 1
  %v1535 = vrot.slane %v1171, 1
  %v1536 = vrot.slane %v1173, 1
  %v1537 = vrot.slane %v1175, 1
  %vm1538 = vcmp.lt.s32.totalorder %v1193, 7
  %v1539 = vsel %vm1538, %v1536, %v1537
  %v1540 = vsel %vm1538, %v1535, %v1536
  %v1541 = vsel %vm1538, %v1534, %v1535
  %v1542 = vsel %vm1538, %v1533, %v1534
  %v1543 = vsel %vm1538, %v1532, %v1533
  %v1544 = vsel %vm1538, %v1531, %v1532
  %v1545 = vsel %vm1538, %v1530, %v1531
  %v1546 = vsel %vm1538, %v1529, %v1530
  %v1547 = vsel %vm1538, %v1528, %v1529
  %v1548 = vsel %vm1538, %v1527, %v1528
  %v1549 = vsel %vm1538, %v1526, %v1527
  %v1550 = vsel %vm1538, %v1525, %v1526
  %v1551 = vsel %vm1538, %v1524, %v1525
  %v1552 = vsel %vm1538, %v1523, %v1524
  %v1553 = vsel %vm1538, %v1522, %v1523
  %v1554 = vsel %vm1538, %v1537, %v1522
  %v1555 = vsel %vm1506, 1, 0
  %v1556 = vsel %vm1507, 1, 0
  %v1557 = vsel %vm1508, 1, 0
  %v1558 = vsel %vm1509, 1, 0
  %v1559 = vsel %vm1510, 1, 0
  %v1560 = vsel %vm1511, 1, 0
  %v1561 = vsel %vm1512, 1, 0
  %v1562 = vsel %vm1513, 1, 0
  %v1563 = vsel %vm1514, 1, 0
  %v1564 = vsel %vm1515, 1, 0
  %v1565 = vsel %vm1516, 1, 0
  %v1566 = vsel %vm1517, 1, 0
  %v1567 = vsel %vm1518, 1, 0
  %v1568 = vsel %vm1519, 1, 0
  %v1569 = vsel %vm1520, 1, 0
  %v1570 = vsel %vm1521, 1, 0
  %vm1571 = vcmp.eq.s32.totalorder %v1555, 1
  %vm1572 = vcmp.eq.s32.totalorder %v1556, 1
  %vm1573 = vcmp.eq.s32.totalorder %v1557, 1
  %vm1574 = vcmp.eq.s32.totalorder %v1558, 1
  %vm1575 = vcmp.eq.s32.totalorder %v1559, 1
  %vm1576 = vcmp.eq.s32.totalorder %v1560, 1
  %vm1577 = vcmp.eq.s32.totalorder %v1561, 1
  %vm1578 = vcmp.eq.s32.totalorder %v1562, 1
  %vm1579 = vcmp.eq.s32.totalorder %v1563, 1
  %vm1580 = vcmp.eq.s32.totalorder %v1564, 1
  %vm1581 = vcmp.eq.s32.totalorder %v1565, 1
  %vm1582 = vcmp.eq.s32.totalorder %v1566, 1
  %vm1583 = vcmp.eq.s32.totalorder %v1567, 1
  %vm1584 = vcmp.eq.s32.totalorder %v1568, 1
  %vm1585 = vcmp.eq.s32.totalorder %v1569, 1
  %vm1586 = vcmp.eq.s32.totalorder %v1570, 1
  %v1587 = vsel %vm1571, 0.0, %v1553
  %v1588 = vsel %vm1572, 0.0, %v1552
  %v1589 = vsel %vm1573, 0.0, %v1551
  %v1590 = vsel %vm1574, 0.0, %v1550
  %v1591 = vsel %vm1575, 0.0, %v1549
  %v1592 = vsel %vm1576, 0.0, %v1548
  %v1593 = vsel %vm1577, 0.0, %v1547
  %v1594 = vsel %vm1578, 0.0, %v1546
  %v1595 = vsel %vm1579, 0.0, %v1545
  %v1596 = vsel %vm1580, 0.0, %v1544
  %v1597 = vsel %vm1581, 0.0, %v1543
  %v1598 = vsel %vm1582, 0.0, %v1542
  %v1599 = vsel %vm1583, 0.0, %v1541
  %v1600 = vsel %vm1584, 0.0, %v1540
  %v1601 = vsel %vm1585, 0.0, %v1539
  %v1602 = vsel %vm1586, 0.0, %v1554
  %v1603 = vpack.c.bf16 %v1588, %v1587
  %v1604 = vpack.c.bf16 %v1590, %v1589
  %v1605 = vpack.c.bf16 %v1592, %v1591
  %v1606 = vpack.c.bf16 %v1594, %v1593
  %v1607 = vpack.c.bf16 %v1596, %v1595
  %v1608 = vpack.c.bf16 %v1598, %v1597
  %v1609 = vpack.c.bf16 %v1600, %v1599
  %v1610 = vpack.c.bf16 %v1602, %v1601
  %v1611 = vld [vmem:[%s4] sm:$0xf]
  %v1612 = vld [vmem:[%s4 + $0x4] sm:$0xf]
  %v1613 = vld [vmem:[%s4 + $0x8] sm:$0xf]
  %v1614 = vld [vmem:[%s4 + $0xc] sm:$0xf]
  %v1615 = vld [vmem:[%s4 + $0x10] sm:$0xf]
  %v1616 = vld [vmem:[%s4 + $0x14] sm:$0xf]
  %v1617 = vld [vmem:[%s4 + $0x18] sm:$0xf]
  %v1618 = vld [vmem:[%s4 + $0x1c] sm:$0xf]
  %v1619 = vld [vmem:[%s4 + $0x20] sm:$0xf]
  %v1620 = vld [vmem:[%s4 + $0x24] sm:$0xf]
  %v1621 = vld [vmem:[%s4 + $0x28] sm:$0xf]
  %v1622 = vld [vmem:[%s4 + $0x2c] sm:$0xf]
  %v1623 = vld [vmem:[%s4 + $0x30] sm:$0xf]
  %v1624 = vld [vmem:[%s4 + $0x34] sm:$0xf]
  %v1625 = vld [vmem:[%s4 + $0x38] sm:$0xf]
  %v1626 = vld [vmem:[%s4 + $0x3c] sm:$0xf]
  %v1627 = vld [vmem:[%s5] sm:$0xf]
  %v1628 = vld [vmem:[%s5 + $0x4] sm:$0xf]
  %v1629 = vld [vmem:[%s5 + $0x8] sm:$0xf]
  %v1630 = vld [vmem:[%s5 + $0xc] sm:$0xf]
  %v1631 = vld [vmem:[%s5 + $0x10] sm:$0xf]
  %v1632 = vld [vmem:[%s5 + $0x14] sm:$0xf]
  %v1633 = vld [vmem:[%s5 + $0x18] sm:$0xf]
  %v1634 = vld [vmem:[%s5 + $0x1c] sm:$0xf]
  %v1635 = vld [vmem:[%s5 + $0x20] sm:$0xf]
  %v1636 = vld [vmem:[%s5 + $0x24] sm:$0xf]
  %v1637 = vld [vmem:[%s5 + $0x28] sm:$0xf]
  %v1638 = vld [vmem:[%s5 + $0x2c] sm:$0xf]
  %v1639 = vld [vmem:[%s5 + $0x30] sm:$0xf]
  %v1640 = vld [vmem:[%s5 + $0x34] sm:$0xf]
  %v1641 = vld [vmem:[%s5 + $0x38] sm:$0xf]
  %v1642 = vld [vmem:[%s5 + $0x3c] sm:$0xf]
  %v1659 = vunpack.c.l.b16 %v1627
  %v1660 = vunpack.c.l.b16 %v1628
  %v1661 = vunpack.c.l.b16 %v1629
  %v1662 = vunpack.c.l.b16 %v1630
  %v1663 = vunpack.c.l.b16 %v1631
  %v1664 = vunpack.c.l.b16 %v1632
  %v1665 = vunpack.c.l.b16 %v1633
  %v1666 = vunpack.c.l.b16 %v1634
  %v1667 = vunpack.c.l.b16 %v1635
  %v1668 = vunpack.c.l.b16 %v1636
  %v1669 = vunpack.c.l.b16 %v1637
  %v1670 = vunpack.c.l.b16 %v1638
  %v1671 = vunpack.c.l.b16 %v1639
  %v1672 = vunpack.c.l.b16 %v1640
  %v1673 = vunpack.c.l.b16 %v1641
  %v1674 = vunpack.c.l.b16 %v1642
  %v1675 = vpack.c.b16 %v1660, %v1659
  %v1676 = vpack.c.b16 %v1662, %v1661
  %v1677 = vpack.c.b16 %v1664, %v1663
  %v1678 = vpack.c.b16 %v1666, %v1665
  %v1679 = vpack.c.b16 %v1668, %v1667
  %v1680 = vpack.c.b16 %v1670, %v1669
  %v1681 = vpack.c.b16 %v1672, %v1671
  %v1682 = vpack.c.b16 %v1674, %v1673
  %1691 = vmatprep.subr.bf16.mxu0 0
  %1692 = vmatpush1.bf16.msra.mxu0 %v1682
  %1693 = vmatprep.subr.bf16.mxu0 0
  %1694 = vmatpush1.bf16.msra.mxu0 %v1681
  %1695 = vmatprep.subr.bf16.mxu0 0
  %1696 = vmatpush1.bf16.msra.mxu0 %v1680
  %1697 = vmatprep.subr.bf16.mxu0 0
  %1698 = vmatpush1.bf16.msra.mxu0 %v1679
  %1699 = vmatprep.subr.bf16.mxu0 0
  %1700 = vmatpush1.bf16.msra.mxu0 %v1678
  %1701 = vmatprep.subr.bf16.mxu0 0
  %1702 = vmatpush1.bf16.msra.mxu0 %v1677
  %1703 = vmatprep.subr.bf16.mxu0 0
  %1704 = vmatpush1.bf16.msra.mxu0 %v1676
  %1705 = vmatprep.subr.bf16.mxu0 0
  %1706 = vmatpush1.bf16.msra.mxu0 %v1675
  %1707 = vmatprep.subr.bf16.mxu0 0
  %1708 = vmatpush2.bf16.msra.mxu0 0
  %1709 = vmatprep.subr.bf16.mxu0 0
  %1710 = vmatpush2.bf16.msra.mxu0 0
  %1711 = vmatprep.subr.bf16.mxu0 0
  %1712 = vmatpush2.bf16.msra.mxu0 0
  %1713 = vmatprep.subr.bf16.mxu0 0
  %1714 = vmatpush2.bf16.msra.mxu0 0
  %1715 = vmatprep.subr.bf16.mxu0 0
  %1716 = vmatpush2.bf16.msra.mxu0 0
  %1717 = vmatprep.subr.bf16.mxu0 0
  %1718 = vmatpush2.bf16.msra.mxu0 0
  %1719 = vmatprep.subr.bf16.mxu0 0
  %1720 = vmatpush2.bf16.msra.mxu0 0
  %1721 = vmatprep.subr.bf16.mxu0 0
  %1722 = vmatpush2.bf16.msra.mxu0 0
  %1723 = vmatprep.mubr.bf16.mxu0 0
  %1724 = vmatmul.mubr.bf16.gmra.mxu0 %v1184
  %v1725 = vpop.f32.mrf.mxu0
  %v1726 = vadd.f32 0.0, %v1725
  %v1727 = vpop.f32.mrf.mxu0
  %v1728 = vpop.f32.mrf.mxu0
  %v1729 = vadd.f32 0.0, %v1728
  %v1730 = vpop.f32.mrf.mxu0
  %1731 = vmatprep.mubr.bf16.mxu0 0
  %1732 = vmatmul.mubr.bf16.gmra.mxu0 %v1185
  %v1733 = vpop.f32.mrf.mxu0
  %v1734 = vadd.f32 0.0, %v1733
  %v1735 = vpop.f32.mrf.mxu0
  %v1736 = vpop.f32.mrf.mxu0
  %v1737 = vadd.f32 0.0, %v1736
  %v1738 = vpop.f32.mrf.mxu0
  %1739 = vmatprep.mubr.bf16.mxu0 0
  %1740 = vmatmul.mubr.bf16.gmra.mxu0 %v1186
  %v1741 = vpop.f32.mrf.mxu0
  %v1742 = vadd.f32 0.0, %v1741
  %v1743 = vpop.f32.mrf.mxu0
  %v1744 = vpop.f32.mrf.mxu0
  %v1745 = vadd.f32 0.0, %v1744
  %v1746 = vpop.f32.mrf.mxu0
  %1747 = vmatprep.mubr.bf16.mxu0 0
  %1748 = vmatmul.mubr.bf16.gmra.mxu0 %v1187
  %v1749 = vpop.f32.mrf.mxu0
  %v1750 = vadd.f32 0.0, %v1749
  %v1751 = vpop.f32.mrf.mxu0
  %v1752 = vpop.f32.mrf.mxu0
  %v1753 = vadd.f32 0.0, %v1752
  %v1754 = vpop.f32.mrf.mxu0
  %1755 = vmatprep.mubr.bf16.mxu0 0
  %1756 = vmatmul.mubr.bf16.gmra.mxu0 %v1188
  %v1757 = vpop.f32.mrf.mxu0
  %v1758 = vadd.f32 0.0, %v1757
  %v1759 = vpop.f32.mrf.mxu0
  %v1760 = vpop.f32.mrf.mxu0
  %v1761 = vadd.f32 0.0, %v1760
  %v1762 = vpop.f32.mrf.mxu0
  %1763 = vmatprep.mubr.bf16.mxu0 0
  %1764 = vmatmul.mubr.bf16.gmra.mxu0 %v1189
  %v1765 = vpop.f32.mrf.mxu0
  %v1766 = vadd.f32 0.0, %v1765
  %v1767 = vpop.f32.mrf.mxu0
  %v1768 = vpop.f32.mrf.mxu0
  %v1769 = vadd.f32 0.0, %v1768
  %v1770 = vpop.f32.mrf.mxu0
  %1771 = vmatprep.mubr.bf16.mxu0 0
  %1772 = vmatmul.mubr.bf16.gmra.mxu0 %v1190
  %v1773 = vpop.f32.mrf.mxu0
  %v1774 = vadd.f32 0.0, %v1773
  %v1775 = vpop.f32.mrf.mxu0
  %v1776 = vpop.f32.mrf.mxu0
  %v1777 = vadd.f32 0.0, %v1776
  %v1778 = vpop.f32.mrf.mxu0
  %1779 = vmatprep.mubr.bf16.mxu0 0
  %1780 = vmatmul.mubr.bf16.gmra.mxu0 %v1191
  %v1781 = vpop.f32.mrf.mxu0
  %v1782 = vadd.f32 0.0, %v1781
  %v1783 = vpop.f32.mrf.mxu0
  %v1784 = vpop.f32.mrf.mxu0
  %v1785 = vadd.f32 0.0, %v1784
  %v1786 = vpop.f32.mrf.mxu0
  %1787 = vdwg.mxu0
  %v1804 = vunpack.c.l.b16 %v1611
  %v1805 = vunpack.c.l.b16 %v1612
  %v1806 = vunpack.c.l.b16 %v1613
  %v1807 = vunpack.c.l.b16 %v1614
  %v1808 = vunpack.c.l.b16 %v1615
  %v1809 = vunpack.c.l.b16 %v1616
  %v1810 = vunpack.c.l.b16 %v1617
  %v1811 = vunpack.c.l.b16 %v1618
  %v1812 = vunpack.c.l.b16 %v1619
  %v1813 = vunpack.c.l.b16 %v1620
  %v1814 = vunpack.c.l.b16 %v1621
  %v1815 = vunpack.c.l.b16 %v1622
  %v1816 = vunpack.c.l.b16 %v1623
  %v1817 = vunpack.c.l.b16 %v1624
  %v1818 = vunpack.c.l.b16 %v1625
  %v1819 = vunpack.c.l.b16 %v1626
  %v1820 = vpack.c.b16 %v1805, %v1804
  %v1821 = vpack.c.b16 %v1807, %v1806
  %v1822 = vpack.c.b16 %v1809, %v1808
  %v1823 = vpack.c.b16 %v1811, %v1810
  %v1824 = vpack.c.b16 %v1813, %v1812
  %v1825 = vpack.c.b16 %v1815, %v1814
  %v1826 = vpack.c.b16 %v1817, %v1816
  %v1827 = vpack.c.b16 %v1819, %v1818
  %1836 = vmatprep.subr.bf16.mxu0 0
  %1837 = vmatpush1.bf16.msra.mxu0 %v1827
  %1838 = vmatprep.subr.bf16.mxu0 0
  %1839 = vmatpush1.bf16.msra.mxu0 %v1826
  %1840 = vmatprep.subr.bf16.mxu0 0
  %1841 = vmatpush1.bf16.msra.mxu0 %v1825
  %1842 = vmatprep.subr.bf16.mxu0 0
  %1843 = vmatpush1.bf16.msra.mxu0 %v1824
  %1844 = vmatprep.subr.bf16.mxu0 0
  %1845 = vmatpush1.bf16.msra.mxu0 %v1823
  %1846 = vmatprep.subr.bf16.mxu0 0
  %1847 = vmatpush1.bf16.msra.mxu0 %v1822
  %1848 = vmatprep.subr.bf16.mxu0 0
  %1849 = vmatpush1.bf16.msra.mxu0 %v1821
  %1850 = vmatprep.subr.bf16.mxu0 0
  %1851 = vmatpush1.bf16.msra.mxu0 %v1820
  %1852 = vmatprep.subr.bf16.mxu0 0
  %1853 = vmatpush2.bf16.msra.mxu0 0
  %1854 = vmatprep.subr.bf16.mxu0 0
  %1855 = vmatpush2.bf16.msra.mxu0 0
  %1856 = vmatprep.subr.bf16.mxu0 0
  %1857 = vmatpush2.bf16.msra.mxu0 0
  %1858 = vmatprep.subr.bf16.mxu0 0
  %1859 = vmatpush2.bf16.msra.mxu0 0
  %1860 = vmatprep.subr.bf16.mxu0 0
  %1861 = vmatpush2.bf16.msra.mxu0 0
  %1862 = vmatprep.subr.bf16.mxu0 0
  %1863 = vmatpush2.bf16.msra.mxu0 0
  %1864 = vmatprep.subr.bf16.mxu0 0
  %1865 = vmatpush2.bf16.msra.mxu0 0
  %1866 = vmatprep.subr.bf16.mxu0 0
  %1867 = vmatpush2.bf16.msra.mxu0 0
  %1868 = vmatprep.mubr.bf16.mxu0 0
  %1869 = vmatmul.mubr.bf16.gmra.mxu0 %v1498
  %v1870 = vpop.f32.mrf.mxu0
  %v1871 = vadd.f32 %v1726, %v1870
  %v1872 = vpop.f32.mrf.mxu0
  %v1873 = vpop.f32.mrf.mxu0
  %v1874 = vadd.f32 %v1729, %v1873
  %v1875 = vpop.f32.mrf.mxu0
  %1876 = vmatprep.mubr.bf16.mxu0 0
  %1877 = vmatmul.mubr.bf16.gmra.mxu0 %v1499
  %v1878 = vpop.f32.mrf.mxu0
  %v1879 = vadd.f32 %v1734, %v1878
  %v1880 = vpop.f32.mrf.mxu0
  %v1881 = vpop.f32.mrf.mxu0
  %v1882 = vadd.f32 %v1737, %v1881
  %v1883 = vpop.f32.mrf.mxu0
  %1884 = vmatprep.mubr.bf16.mxu0 0
  %1885 = vmatmul.mubr.bf16.gmra.mxu0 %v1500
  %v1886 = vpop.f32.mrf.mxu0
  %v1887 = vadd.f32 %v1742, %v1886
  %v1888 = vpop.f32.mrf.mxu0
  %v1889 = vpop.f32.mrf.mxu0
  %v1890 = vadd.f32 %v1745, %v1889
  %v1891 = vpop.f32.mrf.mxu0
  %1892 = vmatprep.mubr.bf16.mxu0 0
  %1893 = vmatmul.mubr.bf16.gmra.mxu0 %v1501
  %v1894 = vpop.f32.mrf.mxu0
  %v1895 = vadd.f32 %v1750, %v1894
  %v1896 = vpop.f32.mrf.mxu0
  %v1897 = vpop.f32.mrf.mxu0
  %v1898 = vadd.f32 %v1753, %v1897
  %v1899 = vpop.f32.mrf.mxu0
  %1900 = vmatprep.mubr.bf16.mxu0 0
  %1901 = vmatmul.mubr.bf16.gmra.mxu0 %v1502
  %v1902 = vpop.f32.mrf.mxu0
  %v1903 = vadd.f32 %v1758, %v1902
  %v1904 = vpop.f32.mrf.mxu0
  %v1905 = vpop.f32.mrf.mxu0
  %v1906 = vadd.f32 %v1761, %v1905
  %v1907 = vpop.f32.mrf.mxu0
  %1908 = vmatprep.mubr.bf16.mxu0 0
  %1909 = vmatmul.mubr.bf16.gmra.mxu0 %v1503
  %v1910 = vpop.f32.mrf.mxu0
  %v1911 = vadd.f32 %v1766, %v1910
  %v1912 = vpop.f32.mrf.mxu0
  %v1913 = vpop.f32.mrf.mxu0
  %v1914 = vadd.f32 %v1769, %v1913
  %v1915 = vpop.f32.mrf.mxu0
  %1916 = vmatprep.mubr.bf16.mxu0 0
  %1917 = vmatmul.mubr.bf16.gmra.mxu0 %v1504
  %v1918 = vpop.f32.mrf.mxu0
  %v1919 = vadd.f32 %v1774, %v1918
  %v1920 = vpop.f32.mrf.mxu0
  %v1921 = vpop.f32.mrf.mxu0
  %v1922 = vadd.f32 %v1777, %v1921
  %v1923 = vpop.f32.mrf.mxu0
  %1924 = vmatprep.mubr.bf16.mxu0 0
  %1925 = vmatmul.mubr.bf16.gmra.mxu0 %v1505
  %v1926 = vpop.f32.mrf.mxu0
  %v1927 = vadd.f32 %v1782, %v1926
  %v1928 = vpop.f32.mrf.mxu0
  %v1929 = vpop.f32.mrf.mxu0
  %v1930 = vadd.f32 %v1785, %v1929
  %v1931 = vpop.f32.mrf.mxu0
  %1932 = vdwg.mxu0
  %v1933 = vld [vmem:[%s6] sm:$0xf]
  %v1934 = vld [vmem:[%s6 + $0x4] sm:$0xf]
  %v1935 = vld [vmem:[%s6 + $0x8] sm:$0xf]
  %v1936 = vld [vmem:[%s6 + $0xc] sm:$0xf]
  %v1937 = vld [vmem:[%s6 + $0x10] sm:$0xf]
  %v1938 = vld [vmem:[%s6 + $0x14] sm:$0xf]
  %v1939 = vld [vmem:[%s6 + $0x18] sm:$0xf]
  %v1940 = vld [vmem:[%s6 + $0x1c] sm:$0xf]
  %v1941 = vld [vmem:[%s6 + $0x20] sm:$0xf]
  %v1942 = vld [vmem:[%s6 + $0x24] sm:$0xf]
  %v1943 = vld [vmem:[%s6 + $0x28] sm:$0xf]
  %v1944 = vld [vmem:[%s6 + $0x2c] sm:$0xf]
  %v1945 = vld [vmem:[%s6 + $0x30] sm:$0xf]
  %v1946 = vld [vmem:[%s6 + $0x34] sm:$0xf]
  %v1947 = vld [vmem:[%s6 + $0x38] sm:$0xf]
  %v1948 = vld [vmem:[%s6 + $0x3c] sm:$0xf]
  %v1965 = vunpack.c.l.b16 %v1933
  %v1966 = vunpack.c.l.b16 %v1934
  %v1967 = vunpack.c.l.b16 %v1935
  %v1968 = vunpack.c.l.b16 %v1936
  %v1969 = vunpack.c.l.b16 %v1937
  %v1970 = vunpack.c.l.b16 %v1938
  %v1971 = vunpack.c.l.b16 %v1939
  %v1972 = vunpack.c.l.b16 %v1940
  %v1973 = vunpack.c.l.b16 %v1941
  %v1974 = vunpack.c.l.b16 %v1942
  %v1975 = vunpack.c.l.b16 %v1943
  %v1976 = vunpack.c.l.b16 %v1944
  %v1977 = vunpack.c.l.b16 %v1945
  %v1978 = vunpack.c.l.b16 %v1946
  %v1979 = vunpack.c.l.b16 %v1947
  %v1980 = vunpack.c.l.b16 %v1948
  %v1981 = vpack.c.b16 %v1966, %v1965
  %v1982 = vpack.c.b16 %v1968, %v1967
  %v1983 = vpack.c.b16 %v1970, %v1969
  %v1984 = vpack.c.b16 %v1972, %v1971
  %v1985 = vpack.c.b16 %v1974, %v1973
  %v1986 = vpack.c.b16 %v1976, %v1975
  %v1987 = vpack.c.b16 %v1978, %v1977
  %v1988 = vpack.c.b16 %v1980, %v1979
  %1997 = vmatprep.subr.bf16.mxu0 0
  %1998 = vmatpush1.bf16.msra.mxu0 %v1988
  %1999 = vmatprep.subr.bf16.mxu0 0
  %2000 = vmatpush1.bf16.msra.mxu0 %v1987
  %2001 = vmatprep.subr.bf16.mxu0 0
  %2002 = vmatpush1.bf16.msra.mxu0 %v1986
  %2003 = vmatprep.subr.bf16.mxu0 0
  %2004 = vmatpush1.bf16.msra.mxu0 %v1985
  %2005 = vmatprep.subr.bf16.mxu0 0
  %2006 = vmatpush1.bf16.msra.mxu0 %v1984
  %2007 = vmatprep.subr.bf16.mxu0 0
  %2008 = vmatpush1.bf16.msra.mxu0 %v1983
  %2009 = vmatprep.subr.bf16.mxu0 0
  %2010 = vmatpush1.bf16.msra.mxu0 %v1982
  %2011 = vmatprep.subr.bf16.mxu0 0
  %2012 = vmatpush1.bf16.msra.mxu0 %v1981
  %2013 = vmatprep.subr.bf16.mxu0 0
  %2014 = vmatpush2.bf16.msra.mxu0 0
  %2015 = vmatprep.subr.bf16.mxu0 0
  %2016 = vmatpush2.bf16.msra.mxu0 0
  %2017 = vmatprep.subr.bf16.mxu0 0
  %2018 = vmatpush2.bf16.msra.mxu0 0
  %2019 = vmatprep.subr.bf16.mxu0 0
  %2020 = vmatpush2.bf16.msra.mxu0 0
  %2021 = vmatprep.subr.bf16.mxu0 0
  %2022 = vmatpush2.bf16.msra.mxu0 0
  %2023 = vmatprep.subr.bf16.mxu0 0
  %2024 = vmatpush2.bf16.msra.mxu0 0
  %2025 = vmatprep.subr.bf16.mxu0 0
  %2026 = vmatpush2.bf16.msra.mxu0 0
  %2027 = vmatprep.subr.bf16.mxu0 0
  %2028 = vmatpush2.bf16.msra.mxu0 0
  %2029 = vmatprep.mubr.bf16.mxu0 0
  %2030 = vmatmul.mubr.bf16.gmra.mxu0 %v1603
  %v2031 = vpop.f32.mrf.mxu0
  %v2032 = vadd.f32 0.0, %v2031
  %v2033 = vpop.f32.mrf.mxu0
  %v2034 = vpop.f32.mrf.mxu0
  %v2035 = vadd.f32 0.0, %v2034
  %v2036 = vpop.f32.mrf.mxu0
  %2037 = vmatprep.mubr.bf16.mxu0 0
  %2038 = vmatmul.mubr.bf16.gmra.mxu0 %v1604
  %v2039 = vpop.f32.mrf.mxu0
  %v2040 = vadd.f32 0.0, %v2039
  %v2041 = vpop.f32.mrf.mxu0
  %v2042 = vpop.f32.mrf.mxu0
  %v2043 = vadd.f32 0.0, %v2042
  %v2044 = vpop.f32.mrf.mxu0
  %2045 = vmatprep.mubr.bf16.mxu0 0
  %2046 = vmatmul.mubr.bf16.gmra.mxu0 %v1605
  %v2047 = vpop.f32.mrf.mxu0
  %v2048 = vadd.f32 0.0, %v2047
  %v2049 = vpop.f32.mrf.mxu0
  %v2050 = vpop.f32.mrf.mxu0
  %v2051 = vadd.f32 0.0, %v2050
  %v2052 = vpop.f32.mrf.mxu0
  %2053 = vmatprep.mubr.bf16.mxu0 0
  %2054 = vmatmul.mubr.bf16.gmra.mxu0 %v1606
  %v2055 = vpop.f32.mrf.mxu0
  %v2056 = vadd.f32 0.0, %v2055
  %v2057 = vpop.f32.mrf.mxu0
  %v2058 = vpop.f32.mrf.mxu0
  %v2059 = vadd.f32 0.0, %v2058
  %v2060 = vpop.f32.mrf.mxu0
  %2061 = vmatprep.mubr.bf16.mxu0 0
  %2062 = vmatmul.mubr.bf16.gmra.mxu0 %v1607
  %v2063 = vpop.f32.mrf.mxu0
  %v2064 = vadd.f32 0.0, %v2063
  %v2065 = vpop.f32.mrf.mxu0
  %v2066 = vpop.f32.mrf.mxu0
  %v2067 = vadd.f32 0.0, %v2066
  %v2068 = vpop.f32.mrf.mxu0
  %2069 = vmatprep.mubr.bf16.mxu0 0
  %2070 = vmatmul.mubr.bf16.gmra.mxu0 %v1608
  %v2071 = vpop.f32.mrf.mxu0
  %v2072 = vadd.f32 0.0, %v2071
  %v2073 = vpop.f32.mrf.mxu0
  %v2074 = vpop.f32.mrf.mxu0
  %v2075 = vadd.f32 0.0, %v2074
  %v2076 = vpop.f32.mrf.mxu0
  %2077 = vmatprep.mubr.bf16.mxu0 0
  %2078 = vmatmul.mubr.bf16.gmra.mxu0 %v1609
  %v2079 = vpop.f32.mrf.mxu0
  %v2080 = vadd.f32 0.0, %v2079
  %v2081 = vpop.f32.mrf.mxu0
  %v2082 = vpop.f32.mrf.mxu0
  %v2083 = vadd.f32 0.0, %v2082
  %v2084 = vpop.f32.mrf.mxu0
  %2085 = vmatprep.mubr.bf16.mxu0 0
  %2086 = vmatmul.mubr.bf16.gmra.mxu0 %v1610
  %v2087 = vpop.f32.mrf.mxu0
  %v2088 = vadd.f32 0.0, %v2087
  %v2089 = vpop.f32.mrf.mxu0
  %v2090 = vpop.f32.mrf.mxu0
  %v2091 = vadd.f32 0.0, %v2090
  %v2092 = vpop.f32.mrf.mxu0
  %2093 = vdwg.mxu0
  %v2094 = vadd.f32 %v1871, %v2032
  %v2095 = vadd.f32 %v1874, %v2035
  %v2096 = vadd.f32 %v1879, %v2040
  %v2097 = vadd.f32 %v1882, %v2043
  %v2098 = vadd.f32 %v1887, %v2048
  %v2099 = vadd.f32 %v1890, %v2051
  %v2100 = vadd.f32 %v1895, %v2056
  %v2101 = vadd.f32 %v1898, %v2059
  %v2102 = vadd.f32 %v1903, %v2064
  %v2103 = vadd.f32 %v1906, %v2067
  %v2104 = vadd.f32 %v1911, %v2072
  %v2105 = vadd.f32 %v1914, %v2075
  %v2106 = vadd.f32 %v1919, %v2080
  %v2107 = vadd.f32 %v1922, %v2083
  %v2108 = vadd.f32 %v1927, %v2088
  %v2109 = vadd.f32 %v1930, %v2091
  %v2110 = vld [vmem:[%s7] sm:$0x1]
  %v2112 = vlaneseq
  %v2113 = vshrl.u32 %v2112, 7
  %v2114 = vsub.s32 0, %v2113
  %v2115 = vrot.slane %v2110, %v2114
  %v2117 = vmul.f32 %v2094, %v2115
  %v2118 = vmul.f32 %v2095, %v2115
  %v2119 = vmul.f32 %v2096, %v2115
  %v2120 = vmul.f32 %v2097, %v2115
  %v2121 = vmul.f32 %v2098, %v2115
  %v2122 = vmul.f32 %v2099, %v2115
  %v2123 = vmul.f32 %v2100, %v2115
  %v2124 = vmul.f32 %v2101, %v2115
  %v2125 = vmul.f32 %v2102, %v2115
  %v2126 = vmul.f32 %v2103, %v2115
  %v2127 = vmul.f32 %v2104, %v2115
  %v2128 = vmul.f32 %v2105, %v2115
  %v2129 = vmul.f32 %v2106, %v2115
  %v2130 = vmul.f32 %v2107, %v2115
  %v2131 = vmul.f32 %v2108, %v2115
  %v2132 = vmul.f32 %v2109, %v2115
  %v2133 = vld [vmem:[%s8] sm:$0x1]
  %v2135 = vlaneseq
  %v2136 = vshrl.u32 %v2135, 7
  %v2137 = vsub.s32 0, %v2136
  %v2138 = vrot.slane %v2133, %v2137
  %v2140 = vadd.f32 %v2117, %v2138
  %v2141 = vadd.f32 %v2118, %v2138
  %v2142 = vadd.f32 %v2119, %v2138
  %v2143 = vadd.f32 %v2120, %v2138
  %v2144 = vadd.f32 %v2121, %v2138
  %v2145 = vadd.f32 %v2122, %v2138
  %v2146 = vadd.f32 %v2123, %v2138
  %v2147 = vadd.f32 %v2124, %v2138
  %v2148 = vadd.f32 %v2125, %v2138
  %v2149 = vadd.f32 %v2126, %v2138
  %v2150 = vadd.f32 %v2127, %v2138
  %v2151 = vadd.f32 %v2128, %v2138
  %v2152 = vadd.f32 %v2129, %v2138
  %v2153 = vadd.f32 %v2130, %v2138
  %v2154 = vadd.f32 %v2131, %v2138
  %v2155 = vadd.f32 %v2132, %v2138
  %v2156 = vmax.f32 %v2140, 0.0
  %v2157 = vmax.f32 %v2141, 0.0
  %v2158 = vmax.f32 %v2142, 0.0
  %v2159 = vmax.f32 %v2143, 0.0
  %v2160 = vmax.f32 %v2144, 0.0
  %v2161 = vmax.f32 %v2145, 0.0
  %v2162 = vmax.f32 %v2146, 0.0
  %v2163 = vmax.f32 %v2147, 0.0
  %v2164 = vmax.f32 %v2148, 0.0
  %v2165 = vmax.f32 %v2149, 0.0
  %v2166 = vmax.f32 %v2150, 0.0
  %v2167 = vmax.f32 %v2151, 0.0
  %v2168 = vmax.f32 %v2152, 0.0
  %v2169 = vmax.f32 %v2153, 0.0
  %v2170 = vmax.f32 %v2154, 0.0
  %v2171 = vmax.f32 %v2155, 0.0
  %v2172 = vpack.c.bf16 %v2157, %v2156
  %v2173 = vpack.c.bf16 %v2159, %v2158
  %v2174 = vpack.c.bf16 %v2161, %v2160
  %v2175 = vpack.c.bf16 %v2163, %v2162
  %v2176 = vpack.c.bf16 %v2165, %v2164
  %v2177 = vpack.c.bf16 %v2167, %v2166
  %v2178 = vpack.c.bf16 %v2169, %v2168
  %v2179 = vpack.c.bf16 %v2171, %v2170
  %vm2180 = vcmp.lt.s32.totalorder %v1193, 0
  %v2181 = vsub.s32 0, %v1193
  %v2182 = vsel %vm2180, %v2181, %v1193
  %v2183 = vshrl.u32 %v2182, 6
  %v2184 = vand.u32 %v2182, 63
  %v2185 = vsub.s32 0, %v2184
  %v2186 = vsel %vm2180, %v2185, %v2184
  %vm2187 = vcmp.lt.s32.totalorder %v1194, 0
  %v2188 = vsub.s32 0, %v1194
  %v2189 = vsel %vm2187, %v2188, %v1194
  %v2190 = vshrl.u32 %v2189, 6
  %v2191 = vand.u32 %v2189, 63
  %v2192 = vsub.s32 0, %v2191
  %v2193 = vsel %vm2187, %v2192, %v2191
  %vm2194 = vcmp.lt.s32.totalorder %v1195, 0
  %v2195 = vsub.s32 0, %v1195
  %v2196 = vsel %vm2194, %v2195, %v1195
  %v2197 = vshrl.u32 %v2196, 6
  %v2198 = vand.u32 %v2196, 63
  %v2199 = vsub.s32 0, %v2198
  %v2200 = vsel %vm2194, %v2199, %v2198
  %vm2201 = vcmp.lt.s32.totalorder %v1196, 0
  %v2202 = vsub.s32 0, %v1196
  %v2203 = vsel %vm2201, %v2202, %v1196
  %v2204 = vshrl.u32 %v2203, 6
  %v2205 = vand.u32 %v2203, 63
  %v2206 = vsub.s32 0, %v2205
  %v2207 = vsel %vm2201, %v2206, %v2205
  %vm2208 = vcmp.lt.s32.totalorder %v1197, 0
  %v2209 = vsub.s32 0, %v1197
  %v2210 = vsel %vm2208, %v2209, %v1197
  %v2211 = vshrl.u32 %v2210, 6
  %v2212 = vand.u32 %v2210, 63
  %v2213 = vsub.s32 0, %v2212
  %v2214 = vsel %vm2208, %v2213, %v2212
  %vm2215 = vcmp.lt.s32.totalorder %v1198, 0
  %v2216 = vsub.s32 0, %v1198
  %v2217 = vsel %vm2215, %v2216, %v1198
  %v2218 = vshrl.u32 %v2217, 6
  %v2219 = vand.u32 %v2217, 63
  %v2220 = vsub.s32 0, %v2219
  %v2221 = vsel %vm2215, %v2220, %v2219
  %vm2222 = vcmp.lt.s32.totalorder %v1199, 0
  %v2223 = vsub.s32 0, %v1199
  %v2224 = vsel %vm2222, %v2223, %v1199
  %v2225 = vshrl.u32 %v2224, 6
  %v2226 = vand.u32 %v2224, 63
  %v2227 = vsub.s32 0, %v2226
  %v2228 = vsel %vm2222, %v2227, %v2226
  %vm2229 = vcmp.lt.s32.totalorder %v1200, 0
  %v2230 = vsub.s32 0, %v1200
  %v2231 = vsel %vm2229, %v2230, %v1200
  %v2232 = vshrl.u32 %v2231, 6
  %v2233 = vand.u32 %v2231, 63
  %v2234 = vsub.s32 0, %v2233
  %v2235 = vsel %vm2229, %v2234, %v2233
  %vm2236 = vcmp.lt.s32.totalorder %v1201, 0
  %v2237 = vsub.s32 0, %v1201
  %v2238 = vsel %vm2236, %v2237, %v1201
  %v2239 = vshrl.u32 %v2238, 6
  %v2240 = vand.u32 %v2238, 63
  %v2241 = vsub.s32 0, %v2240
  %v2242 = vsel %vm2236, %v2241, %v2240
  %vm2243 = vcmp.lt.s32.totalorder %v1202, 0
  %v2244 = vsub.s32 0, %v1202
  %v2245 = vsel %vm2243, %v2244, %v1202
  %v2246 = vshrl.u32 %v2245, 6
  %v2247 = vand.u32 %v2245, 63
  %v2248 = vsub.s32 0, %v2247
  %v2249 = vsel %vm2243, %v2248, %v2247
  %vm2250 = vcmp.lt.s32.totalorder %v1203, 0
  %v2251 = vsub.s32 0, %v1203
  %v2252 = vsel %vm2250, %v2251, %v1203
  %v2253 = vshrl.u32 %v2252, 6
  %v2254 = vand.u32 %v2252, 63
  %v2255 = vsub.s32 0, %v2254
  %v2256 = vsel %vm2250, %v2255, %v2254
  %vm2257 = vcmp.lt.s32.totalorder %v1204, 0
  %v2258 = vsub.s32 0, %v1204
  %v2259 = vsel %vm2257, %v2258, %v1204
  %v2260 = vshrl.u32 %v2259, 6
  %v2261 = vand.u32 %v2259, 63
  %v2262 = vsub.s32 0, %v2261
  %v2263 = vsel %vm2257, %v2262, %v2261
  %vm2264 = vcmp.lt.s32.totalorder %v1205, 0
  %v2265 = vsub.s32 0, %v1205
  %v2266 = vsel %vm2264, %v2265, %v1205
  %v2267 = vshrl.u32 %v2266, 6
  %v2268 = vand.u32 %v2266, 63
  %v2269 = vsub.s32 0, %v2268
  %v2270 = vsel %vm2264, %v2269, %v2268
  %vm2271 = vcmp.lt.s32.totalorder %v1206, 0
  %v2272 = vsub.s32 0, %v1206
  %v2273 = vsel %vm2271, %v2272, %v1206
  %v2274 = vshrl.u32 %v2273, 6
  %v2275 = vand.u32 %v2273, 63
  %v2276 = vsub.s32 0, %v2275
  %v2277 = vsel %vm2271, %v2276, %v2275
  %vm2278 = vcmp.lt.s32.totalorder %v1207, 0
  %v2279 = vsub.s32 0, %v1207
  %v2280 = vsel %vm2278, %v2279, %v1207
  %v2281 = vshrl.u32 %v2280, 6
  %v2282 = vand.u32 %v2280, 63
  %v2283 = vsub.s32 0, %v2282
  %v2284 = vsel %vm2278, %v2283, %v2282
  %vm2285 = vcmp.lt.s32.totalorder %v1208, 0
  %v2286 = vsub.s32 0, %v1208
  %v2287 = vsel %vm2285, %v2286, %v1208
  %v2288 = vshrl.u32 %v2287, 6
  %v2289 = vand.u32 %v2287, 63
  %v2290 = vsub.s32 0, %v2289
  %v2291 = vsel %vm2285, %v2290, %v2289
  %vm2292 = vcmp.ne.s32.totalorder %v2186, 0
  %vm2293 = vcmp.ne.s32.totalorder %v2193, 0
  %vm2294 = vcmp.ne.s32.totalorder %v2200, 0
  %vm2295 = vcmp.ne.s32.totalorder %v2207, 0
  %vm2296 = vcmp.ne.s32.totalorder %v2214, 0
  %vm2297 = vcmp.ne.s32.totalorder %v2221, 0
  %vm2298 = vcmp.ne.s32.totalorder %v2228, 0
  %vm2299 = vcmp.ne.s32.totalorder %v2235, 0
  %vm2300 = vcmp.ne.s32.totalorder %v2242, 0
  %vm2301 = vcmp.ne.s32.totalorder %v2249, 0
  %vm2302 = vcmp.ne.s32.totalorder %v2256, 0
  %vm2303 = vcmp.ne.s32.totalorder %v2263, 0
  %vm2304 = vcmp.ne.s32.totalorder %v2270, 0
  %vm2305 = vcmp.ne.s32.totalorder %v2277, 0
  %vm2306 = vcmp.ne.s32.totalorder %v2284, 0
  %vm2307 = vcmp.ne.s32.totalorder %v2291, 0
  %vm2308 = vcmp.lt.s32.totalorder %v2186, 0
  %vm2309 = vcmp.lt.s32.totalorder %v2193, 0
  %vm2310 = vcmp.lt.s32.totalorder %v2200, 0
  %vm2311 = vcmp.lt.s32.totalorder %v2207, 0
  %vm2312 = vcmp.lt.s32.totalorder %v2214, 0
  %vm2313 = vcmp.lt.s32.totalorder %v2221, 0
  %vm2314 = vcmp.lt.s32.totalorder %v2228, 0
  %vm2315 = vcmp.lt.s32.totalorder %v2235, 0
  %vm2316 = vcmp.lt.s32.totalorder %v2242, 0
  %vm2317 = vcmp.lt.s32.totalorder %v2249, 0
  %vm2318 = vcmp.lt.s32.totalorder %v2256, 0
  %vm2319 = vcmp.lt.s32.totalorder %v2263, 0
  %vm2320 = vcmp.lt.s32.totalorder %v2270, 0
  %vm2321 = vcmp.lt.s32.totalorder %v2277, 0
  %vm2322 = vcmp.lt.s32.totalorder %v2284, 0
  %vm2323 = vcmp.lt.s32.totalorder %v2291, 0
  %vm2324 = vmand %vm2308, %vm2292
  %vm2325 = vmand %vm2309, %vm2293
  %vm2326 = vmand %vm2310, %vm2294
  %vm2327 = vmand %vm2311, %vm2295
  %vm2328 = vmand %vm2312, %vm2296
  %vm2329 = vmand %vm2313, %vm2297
  %vm2330 = vmand %vm2314, %vm2298
  %vm2331 = vmand %vm2315, %vm2299
  %vm2332 = vmand %vm2316, %vm2300
  %vm2333 = vmand %vm2317, %vm2301
  %vm2334 = vmand %vm2318, %vm2302
  %vm2335 = vmand %vm2319, %vm2303
  %vm2336 = vmand %vm2320, %vm2304
  %vm2337 = vmand %vm2321, %vm2305
  %vm2338 = vmand %vm2322, %vm2306
  %vm2339 = vmand %vm2323, %vm2307
  %v2340 = vadd.s32 %v2186, 64
  %v2341 = vadd.s32 %v2193, 64
  %v2342 = vadd.s32 %v2200, 64
  %v2343 = vadd.s32 %v2207, 64
  %v2344 = vadd.s32 %v2214, 64
  %v2345 = vadd.s32 %v2221, 64
  %v2346 = vadd.s32 %v2228, 64
  %v2347 = vadd.s32 %v2235, 64
  %v2348 = vadd.s32 %v2242, 64
  %v2349 = vadd.s32 %v2249, 64
  %v2350 = vadd.s32 %v2256, 64
  %v2351 = vadd.s32 %v2263, 64
  %v2352 = vadd.s32 %v2270, 64
  %v2353 = vadd.s32 %v2277, 64
  %v2354 = vadd.s32 %v2284, 64
  %v2355 = vadd.s32 %v2291, 64
  %v2356 = vsel %vm2324, %v2340, %v2186
  %v2357 = vsel %vm2325, %v2341, %v2193
  %v2358 = vsel %vm2326, %v2342, %v2200
  %v2359 = vsel %vm2327, %v2343, %v2207
  %v2360 = vsel %vm2328, %v2344, %v2214
  %v2361 = vsel %vm2329, %v2345, %v2221
  %v2362 = vsel %vm2330, %v2346, %v2228
  %v2363 = vsel %vm2331, %v2347, %v2235
  %v2364 = vsel %vm2332, %v2348, %v2242
  %v2365 = vsel %vm2333, %v2349, %v2249
  %v2366 = vsel %vm2334, %v2350, %v2256
  %v2367 = vsel %vm2335, %v2351, %v2263
  %v2368 = vsel %vm2336, %v2352, %v2270
  %v2369 = vsel %vm2337, %v2353, %v2277
  %v2370 = vsel %vm2338, %v2354, %v2284
  %v2371 = vsel %vm2339, %v2355, %v2291
  %vm2372 = vcmp.lt.s32.totalorder %v2356, 8
  %vm2373 = vcmp.lt.s32.totalorder %v2357, 8
  %vm2374 = vcmp.lt.s32.totalorder %v2358, 8
  %vm2375 = vcmp.lt.s32.totalorder %v2359, 8
  %vm2376 = vcmp.lt.s32.totalorder %v2360, 8
  %vm2377 = vcmp.lt.s32.totalorder %v2361, 8
  %vm2378 = vcmp.lt.s32.totalorder %v2362, 8
  %vm2379 = vcmp.lt.s32.totalorder %v2363, 8
  %vm2380 = vcmp.lt.s32.totalorder %v2364, 8
  %vm2381 = vcmp.lt.s32.totalorder %v2365, 8
  %vm2382 = vcmp.lt.s32.totalorder %v2366, 8
  %vm2383 = vcmp.lt.s32.totalorder %v2367, 8
  %vm2384 = vcmp.lt.s32.totalorder %v2368, 8
  %vm2385 = vcmp.lt.s32.totalorder %v2369, 8
  %vm2386 = vcmp.lt.s32.totalorder %v2370, 8
  %vm2387 = vcmp.lt.s32.totalorder %v2371, 8
  %v2388 = vsel %vm2372, 1, 0
  %v2389 = vsel %vm2373, 1, 0
  %v2390 = vsel %vm2374, 1, 0
  %v2391 = vsel %vm2375, 1, 0
  %v2392 = vsel %vm2376, 1, 0
  %v2393 = vsel %vm2377, 1, 0
  %v2394 = vsel %vm2378, 1, 0
  %v2395 = vsel %vm2379, 1, 0
  %v2396 = vsel %vm2380, 1, 0
  %v2397 = vsel %vm2381, 1, 0
  %v2398 = vsel %vm2382, 1, 0
  %v2399 = vsel %vm2383, 1, 0
  %v2400 = vsel %vm2384, 1, 0
  %v2401 = vsel %vm2385, 1, 0
  %v2402 = vsel %vm2386, 1, 0
  %v2403 = vsel %vm2387, 1, 0
  %vm2404 = vcmp.eq.s32.totalorder %v2388, 1
  %vm2405 = vcmp.eq.s32.totalorder %v2389, 1
  %vm2406 = vcmp.eq.s32.totalorder %v2390, 1
  %vm2407 = vcmp.eq.s32.totalorder %v2391, 1
  %vm2408 = vcmp.eq.s32.totalorder %v2392, 1
  %vm2409 = vcmp.eq.s32.totalorder %v2393, 1
  %vm2410 = vcmp.eq.s32.totalorder %v2394, 1
  %vm2411 = vcmp.eq.s32.totalorder %v2395, 1
  %vm2412 = vcmp.eq.s32.totalorder %v2396, 1
  %vm2413 = vcmp.eq.s32.totalorder %v2397, 1
  %vm2414 = vcmp.eq.s32.totalorder %v2398, 1
  %vm2415 = vcmp.eq.s32.totalorder %v2399, 1
  %vm2416 = vcmp.eq.s32.totalorder %v2400, 1
  %vm2417 = vcmp.eq.s32.totalorder %v2401, 1
  %vm2418 = vcmp.eq.s32.totalorder %v2402, 1
  %vm2419 = vcmp.eq.s32.totalorder %v2403, 1
  %v2420 = vsel %vm2404, 0.0, %v2171
  %v2421 = vsel %vm2405, 0.0, %v2156
  %v2422 = vsel %vm2406, 0.0, %v2157
  %v2423 = vsel %vm2407, 0.0, %v2158
  %v2424 = vsel %vm2408, 0.0, %v2159
  %v2425 = vsel %vm2409, 0.0, %v2160
  %v2426 = vsel %vm2410, 0.0, %v2161
  %v2427 = vsel %vm2411, 0.0, %v2162
  %v2428 = vsel %vm2412, 0.0, %v2163
  %v2429 = vsel %vm2413, 0.0, %v2164
  %v2430 = vsel %vm2414, 0.0, %v2165
  %v2431 = vsel %vm2415, 0.0, %v2166
  %v2432 = vsel %vm2416, 0.0, %v2167
  %v2433 = vsel %vm2417, 0.0, %v2168
  %v2434 = vsel %vm2418, 0.0, %v2169
  %v2435 = vsel %vm2419, 0.0, %v2170
  %v2436 = vpack.c.bf16 %v2421, %v2420
  %v2437 = vpack.c.bf16 %v2423, %v2422
  %v2438 = vpack.c.bf16 %v2425, %v2424
  %v2439 = vpack.c.bf16 %v2427, %v2426
  %v2440 = vpack.c.bf16 %v2429, %v2428
  %v2441 = vpack.c.bf16 %v2431, %v2430
  %v2442 = vpack.c.bf16 %v2433, %v2432
  %v2443 = vpack.c.bf16 %v2435, %v2434
  %vm2444 = vcmp.ge.s32.totalorder %v2356, 56
  %vm2445 = vcmp.ge.s32.totalorder %v2357, 56
  %vm2446 = vcmp.ge.s32.totalorder %v2358, 56
  %vm2447 = vcmp.ge.s32.totalorder %v2359, 56
  %vm2448 = vcmp.ge.s32.totalorder %v2360, 56
  %vm2449 = vcmp.ge.s32.totalorder %v2361, 56
  %vm2450 = vcmp.ge.s32.totalorder %v2362, 56
  %vm2451 = vcmp.ge.s32.totalorder %v2363, 56
  %vm2452 = vcmp.ge.s32.totalorder %v2364, 56
  %vm2453 = vcmp.ge.s32.totalorder %v2365, 56
  %vm2454 = vcmp.ge.s32.totalorder %v2366, 56
  %vm2455 = vcmp.ge.s32.totalorder %v2367, 56
  %vm2456 = vcmp.ge.s32.totalorder %v2368, 56
  %vm2457 = vcmp.ge.s32.totalorder %v2369, 56
  %vm2458 = vcmp.ge.s32.totalorder %v2370, 56
  %vm2459 = vcmp.ge.s32.totalorder %v2371, 56
  %v2460 = vsel %vm2444, 1, 0
  %v2461 = vsel %vm2445, 1, 0
  %v2462 = vsel %vm2446, 1, 0
  %v2463 = vsel %vm2447, 1, 0
  %v2464 = vsel %vm2448, 1, 0
  %v2465 = vsel %vm2449, 1, 0
  %v2466 = vsel %vm2450, 1, 0
  %v2467 = vsel %vm2451, 1, 0
  %v2468 = vsel %vm2452, 1, 0
  %v2469 = vsel %vm2453, 1, 0
  %v2470 = vsel %vm2454, 1, 0
  %v2471 = vsel %vm2455, 1, 0
  %v2472 = vsel %vm2456, 1, 0
  %v2473 = vsel %vm2457, 1, 0
  %v2474 = vsel %vm2458, 1, 0
  %v2475 = vsel %vm2459, 1, 0
  %vm2476 = vcmp.eq.s32.totalorder %v2460, 1
  %vm2477 = vcmp.eq.s32.totalorder %v2461, 1
  %vm2478 = vcmp.eq.s32.totalorder %v2462, 1
  %vm2479 = vcmp.eq.s32.totalorder %v2463, 1
  %vm2480 = vcmp.eq.s32.totalorder %v2464, 1
  %vm2481 = vcmp.eq.s32.totalorder %v2465, 1
  %vm2482 = vcmp.eq.s32.totalorder %v2466, 1
  %vm2483 = vcmp.eq.s32.totalorder %v2467, 1
  %vm2484 = vcmp.eq.s32.totalorder %v2468, 1
  %vm2485 = vcmp.eq.s32.totalorder %v2469, 1
  %vm2486 = vcmp.eq.s32.totalorder %v2470, 1
  %vm2487 = vcmp.eq.s32.totalorder %v2471, 1
  %vm2488 = vcmp.eq.s32.totalorder %v2472, 1
  %vm2489 = vcmp.eq.s32.totalorder %v2473, 1
  %vm2490 = vcmp.eq.s32.totalorder %v2474, 1
  %vm2491 = vcmp.eq.s32.totalorder %v2475, 1
  %v2492 = vsel %vm2476, 0.0, %v2157
  %v2493 = vsel %vm2477, 0.0, %v2158
  %v2494 = vsel %vm2478, 0.0, %v2159
  %v2495 = vsel %vm2479, 0.0, %v2160
  %v2496 = vsel %vm2480, 0.0, %v2161
  %v2497 = vsel %vm2481, 0.0, %v2162
  %v2498 = vsel %vm2482, 0.0, %v2163
  %v2499 = vsel %vm2483, 0.0, %v2164
  %v2500 = vsel %vm2484, 0.0, %v2165
  %v2501 = vsel %vm2485, 0.0, %v2166
  %v2502 = vsel %vm2486, 0.0, %v2167
  %v2503 = vsel %vm2487, 0.0, %v2168
  %v2504 = vsel %vm2488, 0.0, %v2169
  %v2505 = vsel %vm2489, 0.0, %v2170
  %v2506 = vsel %vm2490, 0.0, %v2171
  %v2507 = vsel %vm2491, 0.0, %v2156
  %v2508 = vpack.c.bf16 %v2493, %v2492
  %v2509 = vpack.c.bf16 %v2495, %v2494
  %v2510 = vpack.c.bf16 %v2497, %v2496
  %v2511 = vpack.c.bf16 %v2499, %v2498
  %v2512 = vpack.c.bf16 %v2501, %v2500
  %v2513 = vpack.c.bf16 %v2503, %v2502
  %v2514 = vpack.c.bf16 %v2505, %v2504
  %v2515 = vpack.c.bf16 %v2507, %v2506
  %v2516 = vld [vmem:[%s9] sm:$0xf]
  %v2517 = vld [vmem:[%s9 + $0x4] sm:$0xf]
  %v2518 = vld [vmem:[%s9 + $0x8] sm:$0xf]
  %v2519 = vld [vmem:[%s9 + $0xc] sm:$0xf]
  %v2520 = vld [vmem:[%s9 + $0x10] sm:$0xf]
  %v2521 = vld [vmem:[%s9 + $0x14] sm:$0xf]
  %v2522 = vld [vmem:[%s9 + $0x18] sm:$0xf]
  %v2523 = vld [vmem:[%s9 + $0x1c] sm:$0xf]
  %v2524 = vld [vmem:[%s9 + $0x20] sm:$0xf]
  %v2525 = vld [vmem:[%s9 + $0x24] sm:$0xf]
  %v2526 = vld [vmem:[%s9 + $0x28] sm:$0xf]
  %v2527 = vld [vmem:[%s9 + $0x2c] sm:$0xf]
  %v2528 = vld [vmem:[%s9 + $0x30] sm:$0xf]
  %v2529 = vld [vmem:[%s9 + $0x34] sm:$0xf]
  %v2530 = vld [vmem:[%s9 + $0x38] sm:$0xf]
  %v2531 = vld [vmem:[%s9 + $0x3c] sm:$0xf]
  %v2532 = vld [vmem:[%s10] sm:$0xf]
  %v2533 = vld [vmem:[%s10 + $0x4] sm:$0xf]
  %v2534 = vld [vmem:[%s10 + $0x8] sm:$0xf]
  %v2535 = vld [vmem:[%s10 + $0xc] sm:$0xf]
  %v2536 = vld [vmem:[%s10 + $0x10] sm:$0xf]
  %v2537 = vld [vmem:[%s10 + $0x14] sm:$0xf]
  %v2538 = vld [vmem:[%s10 + $0x18] sm:$0xf]
  %v2539 = vld [vmem:[%s10 + $0x1c] sm:$0xf]
  %v2540 = vld [vmem:[%s10 + $0x20] sm:$0xf]
  %v2541 = vld [vmem:[%s10 + $0x24] sm:$0xf]
  %v2542 = vld [vmem:[%s10 + $0x28] sm:$0xf]
  %v2543 = vld [vmem:[%s10 + $0x2c] sm:$0xf]
  %v2544 = vld [vmem:[%s10 + $0x30] sm:$0xf]
  %v2545 = vld [vmem:[%s10 + $0x34] sm:$0xf]
  %v2546 = vld [vmem:[%s10 + $0x38] sm:$0xf]
  %v2547 = vld [vmem:[%s10 + $0x3c] sm:$0xf]
  %v2564 = vunpack.c.l.b16 %v2532
  %v2565 = vunpack.c.l.b16 %v2533
  %v2566 = vunpack.c.l.b16 %v2534
  %v2567 = vunpack.c.l.b16 %v2535
  %v2568 = vunpack.c.l.b16 %v2536
  %v2569 = vunpack.c.l.b16 %v2537
  %v2570 = vunpack.c.l.b16 %v2538
  %v2571 = vunpack.c.l.b16 %v2539
  %v2572 = vunpack.c.l.b16 %v2540
  %v2573 = vunpack.c.l.b16 %v2541
  %v2574 = vunpack.c.l.b16 %v2542
  %v2575 = vunpack.c.l.b16 %v2543
  %v2576 = vunpack.c.l.b16 %v2544
  %v2577 = vunpack.c.l.b16 %v2545
  %v2578 = vunpack.c.l.b16 %v2546
  %v2579 = vunpack.c.l.b16 %v2547
  %v2580 = vpack.c.b16 %v2565, %v2564
  %v2581 = vpack.c.b16 %v2567, %v2566
  %v2582 = vpack.c.b16 %v2569, %v2568
  %v2583 = vpack.c.b16 %v2571, %v2570
  %v2584 = vpack.c.b16 %v2573, %v2572
  %v2585 = vpack.c.b16 %v2575, %v2574
  %v2586 = vpack.c.b16 %v2577, %v2576
  %v2587 = vpack.c.b16 %v2579, %v2578
  %2596 = vmatprep.subr.bf16.mxu0 0
  %2597 = vmatpush1.bf16.msra.mxu0 %v2587
  %2598 = vmatprep.subr.bf16.mxu0 0
  %2599 = vmatpush1.bf16.msra.mxu0 %v2586
  %2600 = vmatprep.subr.bf16.mxu0 0
  %2601 = vmatpush1.bf16.msra.mxu0 %v2585
  %2602 = vmatprep.subr.bf16.mxu0 0
  %2603 = vmatpush1.bf16.msra.mxu0 %v2584
  %2604 = vmatprep.subr.bf16.mxu0 0
  %2605 = vmatpush1.bf16.msra.mxu0 %v2583
  %2606 = vmatprep.subr.bf16.mxu0 0
  %2607 = vmatpush1.bf16.msra.mxu0 %v2582
  %2608 = vmatprep.subr.bf16.mxu0 0
  %2609 = vmatpush1.bf16.msra.mxu0 %v2581
  %2610 = vmatprep.subr.bf16.mxu0 0
  %2611 = vmatpush1.bf16.msra.mxu0 %v2580
  %2612 = vmatprep.subr.bf16.mxu0 0
  %2613 = vmatpush2.bf16.msra.mxu0 0
  %2614 = vmatprep.subr.bf16.mxu0 0
  %2615 = vmatpush2.bf16.msra.mxu0 0
  %2616 = vmatprep.subr.bf16.mxu0 0
  %2617 = vmatpush2.bf16.msra.mxu0 0
  %2618 = vmatprep.subr.bf16.mxu0 0
  %2619 = vmatpush2.bf16.msra.mxu0 0
  %2620 = vmatprep.subr.bf16.mxu0 0
  %2621 = vmatpush2.bf16.msra.mxu0 0
  %2622 = vmatprep.subr.bf16.mxu0 0
  %2623 = vmatpush2.bf16.msra.mxu0 0
  %2624 = vmatprep.subr.bf16.mxu0 0
  %2625 = vmatpush2.bf16.msra.mxu0 0
  %2626 = vmatprep.subr.bf16.mxu0 0
  %2627 = vmatpush2.bf16.msra.mxu0 0
  %2628 = vmatprep.mubr.bf16.mxu0 0
  %2629 = vmatmul.mubr.bf16.gmra.mxu0 %v2172
  %v2630 = vpop.f32.mrf.mxu0
  %v2631 = vadd.f32 0.0, %v2630
  %v2632 = vpop.f32.mrf.mxu0
  %v2633 = vpop.f32.mrf.mxu0
  %v2634 = vadd.f32 0.0, %v2633
  %v2635 = vpop.f32.mrf.mxu0
  %2636 = vmatprep.mubr.bf16.mxu0 0
  %2637 = vmatmul.mubr.bf16.gmra.mxu0 %v2173
  %v2638 = vpop.f32.mrf.mxu0
  %v2639 = vadd.f32 0.0, %v2638
  %v2640 = vpop.f32.mrf.mxu0
  %v2641 = vpop.f32.mrf.mxu0
  %v2642 = vadd.f32 0.0, %v2641
  %v2643 = vpop.f32.mrf.mxu0
  %2644 = vmatprep.mubr.bf16.mxu0 0
  %2645 = vmatmul.mubr.bf16.gmra.mxu0 %v2174
  %v2646 = vpop.f32.mrf.mxu0
  %v2647 = vadd.f32 0.0, %v2646
  %v2648 = vpop.f32.mrf.mxu0
  %v2649 = vpop.f32.mrf.mxu0
  %v2650 = vadd.f32 0.0, %v2649
  %v2651 = vpop.f32.mrf.mxu0
  %2652 = vmatprep.mubr.bf16.mxu0 0
  %2653 = vmatmul.mubr.bf16.gmra.mxu0 %v2175
  %v2654 = vpop.f32.mrf.mxu0
  %v2655 = vadd.f32 0.0, %v2654
  %v2656 = vpop.f32.mrf.mxu0
  %v2657 = vpop.f32.mrf.mxu0
  %v2658 = vadd.f32 0.0, %v2657
  %v2659 = vpop.f32.mrf.mxu0
  %2660 = vmatprep.mubr.bf16.mxu0 0
  %2661 = vmatmul.mubr.bf16.gmra.mxu0 %v2176
  %v2662 = vpop.f32.mrf.mxu0
  %v2663 = vadd.f32 0.0, %v2662
  %v2664 = vpop.f32.mrf.mxu0
  %v2665 = vpop.f32.mrf.mxu0
  %v2666 = vadd.f32 0.0, %v2665
  %v2667 = vpop.f32.mrf.mxu0
  %2668 = vmatprep.mubr.bf16.mxu0 0
  %2669 = vmatmul.mubr.bf16.gmra.mxu0 %v2177
  %v2670 = vpop.f32.mrf.mxu0
  %v2671 = vadd.f32 0.0, %v2670
  %v2672 = vpop.f32.mrf.mxu0
  %v2673 = vpop.f32.mrf.mxu0
  %v2674 = vadd.f32 0.0, %v2673
  %v2675 = vpop.f32.mrf.mxu0
  %2676 = vmatprep.mubr.bf16.mxu0 0
  %2677 = vmatmul.mubr.bf16.gmra.mxu0 %v2178
  %v2678 = vpop.f32.mrf.mxu0
  %v2679 = vadd.f32 0.0, %v2678
  %v2680 = vpop.f32.mrf.mxu0
  %v2681 = vpop.f32.mrf.mxu0
  %v2682 = vadd.f32 0.0, %v2681
  %v2683 = vpop.f32.mrf.mxu0
  %2684 = vmatprep.mubr.bf16.mxu0 0
  %2685 = vmatmul.mubr.bf16.gmra.mxu0 %v2179
  %v2686 = vpop.f32.mrf.mxu0
  %v2687 = vadd.f32 0.0, %v2686
  %v2688 = vpop.f32.mrf.mxu0
  %v2689 = vpop.f32.mrf.mxu0
  %v2690 = vadd.f32 0.0, %v2689
  %v2691 = vpop.f32.mrf.mxu0
  %2692 = vdwg.mxu0
  %v2709 = vunpack.c.l.b16 %v2516
  %v2710 = vunpack.c.l.b16 %v2517
  %v2711 = vunpack.c.l.b16 %v2518
  %v2712 = vunpack.c.l.b16 %v2519
  %v2713 = vunpack.c.l.b16 %v2520
  %v2714 = vunpack.c.l.b16 %v2521
  %v2715 = vunpack.c.l.b16 %v2522
  %v2716 = vunpack.c.l.b16 %v2523
  %v2717 = vunpack.c.l.b16 %v2524
  %v2718 = vunpack.c.l.b16 %v2525
  %v2719 = vunpack.c.l.b16 %v2526
  %v2720 = vunpack.c.l.b16 %v2527
  %v2721 = vunpack.c.l.b16 %v2528
  %v2722 = vunpack.c.l.b16 %v2529
  %v2723 = vunpack.c.l.b16 %v2530
  %v2724 = vunpack.c.l.b16 %v2531
  %v2725 = vpack.c.b16 %v2710, %v2709
  %v2726 = vpack.c.b16 %v2712, %v2711
  %v2727 = vpack.c.b16 %v2714, %v2713
  %v2728 = vpack.c.b16 %v2716, %v2715
  %v2729 = vpack.c.b16 %v2718, %v2717
  %v2730 = vpack.c.b16 %v2720, %v2719
  %v2731 = vpack.c.b16 %v2722, %v2721
  %v2732 = vpack.c.b16 %v2724, %v2723
  %2741 = vmatprep.subr.bf16.mxu0 0
  %2742 = vmatpush1.bf16.msra.mxu0 %v2732
  %2743 = vmatprep.subr.bf16.mxu0 0
  %2744 = vmatpush1.bf16.msra.mxu0 %v2731
  %2745 = vmatprep.subr.bf16.mxu0 0
  %2746 = vmatpush1.bf16.msra.mxu0 %v2730
  %2747 = vmatprep.subr.bf16.mxu0 0
  %2748 = vmatpush1.bf16.msra.mxu0 %v2729
  %2749 = vmatprep.subr.bf16.mxu0 0
  %2750 = vmatpush1.bf16.msra.mxu0 %v2728
  %2751 = vmatprep.subr.bf16.mxu0 0
  %2752 = vmatpush1.bf16.msra.mxu0 %v2727
  %2753 = vmatprep.subr.bf16.mxu0 0
  %2754 = vmatpush1.bf16.msra.mxu0 %v2726
  %2755 = vmatprep.subr.bf16.mxu0 0
  %2756 = vmatpush1.bf16.msra.mxu0 %v2725
  %2757 = vmatprep.subr.bf16.mxu0 0
  %2758 = vmatpush2.bf16.msra.mxu0 0
  %2759 = vmatprep.subr.bf16.mxu0 0
  %2760 = vmatpush2.bf16.msra.mxu0 0
  %2761 = vmatprep.subr.bf16.mxu0 0
  %2762 = vmatpush2.bf16.msra.mxu0 0
  %2763 = vmatprep.subr.bf16.mxu0 0
  %2764 = vmatpush2.bf16.msra.mxu0 0
  %2765 = vmatprep.subr.bf16.mxu0 0
  %2766 = vmatpush2.bf16.msra.mxu0 0
  %2767 = vmatprep.subr.bf16.mxu0 0
  %2768 = vmatpush2.bf16.msra.mxu0 0
  %2769 = vmatprep.subr.bf16.mxu0 0
  %2770 = vmatpush2.bf16.msra.mxu0 0
  %2771 = vmatprep.subr.bf16.mxu0 0
  %2772 = vmatpush2.bf16.msra.mxu0 0
  %2773 = vmatprep.mubr.bf16.mxu0 0
  %2774 = vmatmul.mubr.bf16.gmra.mxu0 %v2436
  %v2775 = vpop.f32.mrf.mxu0
  %v2776 = vadd.f32 %v2631, %v2775
  %v2777 = vpop.f32.mrf.mxu0
  %v2778 = vpop.f32.mrf.mxu0
  %v2779 = vadd.f32 %v2634, %v2778
  %v2780 = vpop.f32.mrf.mxu0
  %2781 = vmatprep.mubr.bf16.mxu0 0
  %2782 = vmatmul.mubr.bf16.gmra.mxu0 %v2437
  %v2783 = vpop.f32.mrf.mxu0
  %v2784 = vadd.f32 %v2639, %v2783
  %v2785 = vpop.f32.mrf.mxu0
  %v2786 = vpop.f32.mrf.mxu0
  %v2787 = vadd.f32 %v2642, %v2786
  %v2788 = vpop.f32.mrf.mxu0
  %2789 = vmatprep.mubr.bf16.mxu0 0
  %2790 = vmatmul.mubr.bf16.gmra.mxu0 %v2438
  %v2791 = vpop.f32.mrf.mxu0
  %v2792 = vadd.f32 %v2647, %v2791
  %v2793 = vpop.f32.mrf.mxu0
  %v2794 = vpop.f32.mrf.mxu0
  %v2795 = vadd.f32 %v2650, %v2794
  %v2796 = vpop.f32.mrf.mxu0
  %2797 = vmatprep.mubr.bf16.mxu0 0
  %2798 = vmatmul.mubr.bf16.gmra.mxu0 %v2439
  %v2799 = vpop.f32.mrf.mxu0
  %v2800 = vadd.f32 %v2655, %v2799
  %v2801 = vpop.f32.mrf.mxu0
  %v2802 = vpop.f32.mrf.mxu0
  %v2803 = vadd.f32 %v2658, %v2802
  %v2804 = vpop.f32.mrf.mxu0
  %2805 = vmatprep.mubr.bf16.mxu0 0
  %2806 = vmatmul.mubr.bf16.gmra.mxu0 %v2440
  %v2807 = vpop.f32.mrf.mxu0
  %v2808 = vadd.f32 %v2663, %v2807
  %v2809 = vpop.f32.mrf.mxu0
  %v2810 = vpop.f32.mrf.mxu0
  %v2811 = vadd.f32 %v2666, %v2810
  %v2812 = vpop.f32.mrf.mxu0
  %2813 = vmatprep.mubr.bf16.mxu0 0
  %2814 = vmatmul.mubr.bf16.gmra.mxu0 %v2441
  %v2815 = vpop.f32.mrf.mxu0
  %v2816 = vadd.f32 %v2671, %v2815
  %v2817 = vpop.f32.mrf.mxu0
  %v2818 = vpop.f32.mrf.mxu0
  %v2819 = vadd.f32 %v2674, %v2818
  %v2820 = vpop.f32.mrf.mxu0
  %2821 = vmatprep.mubr.bf16.mxu0 0
  %2822 = vmatmul.mubr.bf16.gmra.mxu0 %v2442
  %v2823 = vpop.f32.mrf.mxu0
  %v2824 = vadd.f32 %v2679, %v2823
  %v2825 = vpop.f32.mrf.mxu0
  %v2826 = vpop.f32.mrf.mxu0
  %v2827 = vadd.f32 %v2682, %v2826
  %v2828 = vpop.f32.mrf.mxu0
  %2829 = vmatprep.mubr.bf16.mxu0 0
  %2830 = vmatmul.mubr.bf16.gmra.mxu0 %v2443
  %v2831 = vpop.f32.mrf.mxu0
  %v2832 = vadd.f32 %v2687, %v2831
  %v2833 = vpop.f32.mrf.mxu0
  %v2834 = vpop.f32.mrf.mxu0
  %v2835 = vadd.f32 %v2690, %v2834
  %v2836 = vpop.f32.mrf.mxu0
  %2837 = vdwg.mxu0
  %v2838 = vld [vmem:[%s11] sm:$0xf]
  %v2839 = vld [vmem:[%s11 + $0x4] sm:$0xf]
  %v2840 = vld [vmem:[%s11 + $0x8] sm:$0xf]
  %v2841 = vld [vmem:[%s11 + $0xc] sm:$0xf]
  %v2842 = vld [vmem:[%s11 + $0x10] sm:$0xf]
  %v2843 = vld [vmem:[%s11 + $0x14] sm:$0xf]
  %v2844 = vld [vmem:[%s11 + $0x18] sm:$0xf]
  %v2845 = vld [vmem:[%s11 + $0x1c] sm:$0xf]
  %v2846 = vld [vmem:[%s11 + $0x20] sm:$0xf]
  %v2847 = vld [vmem:[%s11 + $0x24] sm:$0xf]
  %v2848 = vld [vmem:[%s11 + $0x28] sm:$0xf]
  %v2849 = vld [vmem:[%s11 + $0x2c] sm:$0xf]
  %v2850 = vld [vmem:[%s11 + $0x30] sm:$0xf]
  %v2851 = vld [vmem:[%s11 + $0x34] sm:$0xf]
  %v2852 = vld [vmem:[%s11 + $0x38] sm:$0xf]
  %v2853 = vld [vmem:[%s11 + $0x3c] sm:$0xf]
  %v2870 = vunpack.c.l.b16 %v2838
  %v2871 = vunpack.c.l.b16 %v2839
  %v2872 = vunpack.c.l.b16 %v2840
  %v2873 = vunpack.c.l.b16 %v2841
  %v2874 = vunpack.c.l.b16 %v2842
  %v2875 = vunpack.c.l.b16 %v2843
  %v2876 = vunpack.c.l.b16 %v2844
  %v2877 = vunpack.c.l.b16 %v2845
  %v2878 = vunpack.c.l.b16 %v2846
  %v2879 = vunpack.c.l.b16 %v2847
  %v2880 = vunpack.c.l.b16 %v2848
  %v2881 = vunpack.c.l.b16 %v2849
  %v2882 = vunpack.c.l.b16 %v2850
  %v2883 = vunpack.c.l.b16 %v2851
  %v2884 = vunpack.c.l.b16 %v2852
  %v2885 = vunpack.c.l.b16 %v2853
  %v2886 = vpack.c.b16 %v2871, %v2870
  %v2887 = vpack.c.b16 %v2873, %v2872
  %v2888 = vpack.c.b16 %v2875, %v2874
  %v2889 = vpack.c.b16 %v2877, %v2876
  %v2890 = vpack.c.b16 %v2879, %v2878
  %v2891 = vpack.c.b16 %v2881, %v2880
  %v2892 = vpack.c.b16 %v2883, %v2882
  %v2893 = vpack.c.b16 %v2885, %v2884
  %2902 = vmatprep.subr.bf16.mxu0 0
  %2903 = vmatpush1.bf16.msra.mxu0 %v2893
  %2904 = vmatprep.subr.bf16.mxu0 0
  %2905 = vmatpush1.bf16.msra.mxu0 %v2892
  %2906 = vmatprep.subr.bf16.mxu0 0
  %2907 = vmatpush1.bf16.msra.mxu0 %v2891
  %2908 = vmatprep.subr.bf16.mxu0 0
  %2909 = vmatpush1.bf16.msra.mxu0 %v2890
  %2910 = vmatprep.subr.bf16.mxu0 0
  %2911 = vmatpush1.bf16.msra.mxu0 %v2889
  %2912 = vmatprep.subr.bf16.mxu0 0
  %2913 = vmatpush1.bf16.msra.mxu0 %v2888
  %2914 = vmatprep.subr.bf16.mxu0 0
  %2915 = vmatpush1.bf16.msra.mxu0 %v2887
  %2916 = vmatprep.subr.bf16.mxu0 0
  %2917 = vmatpush1.bf16.msra.mxu0 %v2886
  %2918 = vmatprep.subr.bf16.mxu0 0
  %2919 = vmatpush2.bf16.msra.mxu0 0
  %2920 = vmatprep.subr.bf16.mxu0 0
  %2921 = vmatpush2.bf16.msra.mxu0 0
  %2922 = vmatprep.subr.bf16.mxu0 0
  %2923 = vmatpush2.bf16.msra.mxu0 0
  %2924 = vmatprep.subr.bf16.mxu0 0
  %2925 = vmatpush2.bf16.msra.mxu0 0
  %2926 = vmatprep.subr.bf16.mxu0 0
  %2927 = vmatpush2.bf16.msra.mxu0 0
  %2928 = vmatprep.subr.bf16.mxu0 0
  %2929 = vmatpush2.bf16.msra.mxu0 0
  %2930 = vmatprep.subr.bf16.mxu0 0
  %2931 = vmatpush2.bf16.msra.mxu0 0
  %2932 = vmatprep.subr.bf16.mxu0 0
  %2933 = vmatpush2.bf16.msra.mxu0 0
  %2934 = vmatprep.mubr.bf16.mxu0 0
  %2935 = vmatmul.mubr.bf16.gmra.mxu0 %v2508
  %v2936 = vpop.f32.mrf.mxu0
  %v2937 = vadd.f32 0.0, %v2936
  %v2938 = vpop.f32.mrf.mxu0
  %v2939 = vpop.f32.mrf.mxu0
  %v2940 = vadd.f32 0.0, %v2939
  %v2941 = vpop.f32.mrf.mxu0
  %2942 = vmatprep.mubr.bf16.mxu0 0
  %2943 = vmatmul.mubr.bf16.gmra.mxu0 %v2509
  %v2944 = vpop.f32.mrf.mxu0
  %v2945 = vadd.f32 0.0, %v2944
  %v2946 = vpop.f32.mrf.mxu0
  %v2947 = vpop.f32.mrf.mxu0
  %v2948 = vadd.f32 0.0, %v2947
  %v2949 = vpop.f32.mrf.mxu0
  %2950 = vmatprep.mubr.bf16.mxu0 0
  %2951 = vmatmul.mubr.bf16.gmra.mxu0 %v2510
  %v2952 = vpop.f32.mrf.mxu0
  %v2953 = vadd.f32 0.0, %v2952
  %v2954 = vpop.f32.mrf.mxu0
  %v2955 = vpop.f32.mrf.mxu0
  %v2956 = vadd.f32 0.0, %v2955
  %v2957 = vpop.f32.mrf.mxu0
  %2958 = vmatprep.mubr.bf16.mxu0 0
  %2959 = vmatmul.mubr.bf16.gmra.mxu0 %v2511
  %v2960 = vpop.f32.mrf.mxu0
  %v2961 = vadd.f32 0.0, %v2960
  %v2962 = vpop.f32.mrf.mxu0
  %v2963 = vpop.f32.mrf.mxu0
  %v2964 = vadd.f32 0.0, %v2963
  %v2965 = vpop.f32.mrf.mxu0
  %2966 = vmatprep.mubr.bf16.mxu0 0
  %2967 = vmatmul.mubr.bf16.gmra.mxu0 %v2512
  %v2968 = vpop.f32.mrf.mxu0
  %v2969 = vadd.f32 0.0, %v2968
  %v2970 = vpop.f32.mrf.mxu0
  %v2971 = vpop.f32.mrf.mxu0
  %v2972 = vadd.f32 0.0, %v2971
  %v2973 = vpop.f32.mrf.mxu0
  %2974 = vmatprep.mubr.bf16.mxu0 0
  %2975 = vmatmul.mubr.bf16.gmra.mxu0 %v2513
  %v2976 = vpop.f32.mrf.mxu0
  %v2977 = vadd.f32 0.0, %v2976
  %v2978 = vpop.f32.mrf.mxu0
  %v2979 = vpop.f32.mrf.mxu0
  %v2980 = vadd.f32 0.0, %v2979
  %v2981 = vpop.f32.mrf.mxu0
  %2982 = vmatprep.mubr.bf16.mxu0 0
  %2983 = vmatmul.mubr.bf16.gmra.mxu0 %v2514
  %v2984 = vpop.f32.mrf.mxu0
  %v2985 = vadd.f32 0.0, %v2984
  %v2986 = vpop.f32.mrf.mxu0
  %v2987 = vpop.f32.mrf.mxu0
  %v2988 = vadd.f32 0.0, %v2987
  %v2989 = vpop.f32.mrf.mxu0
  %2990 = vmatprep.mubr.bf16.mxu0 0
  %2991 = vmatmul.mubr.bf16.gmra.mxu0 %v2515
  %v2992 = vpop.f32.mrf.mxu0
  %v2993 = vadd.f32 0.0, %v2992
  %v2994 = vpop.f32.mrf.mxu0
  %v2995 = vpop.f32.mrf.mxu0
  %v2996 = vadd.f32 0.0, %v2995
  %v2997 = vpop.f32.mrf.mxu0
  %2998 = vdwg.mxu0
  %v2999 = vadd.f32 %v2776, %v2937
  %v3000 = vadd.f32 %v2779, %v2940
  %v3001 = vadd.f32 %v2784, %v2945
  %v3002 = vadd.f32 %v2787, %v2948
  %v3003 = vadd.f32 %v2792, %v2953
  %v3004 = vadd.f32 %v2795, %v2956
  %v3005 = vadd.f32 %v2800, %v2961
  %v3006 = vadd.f32 %v2803, %v2964
  %v3007 = vadd.f32 %v2808, %v2969
  %v3008 = vadd.f32 %v2811, %v2972
  %v3009 = vadd.f32 %v2816, %v2977
  %v3010 = vadd.f32 %v2819, %v2980
  %v3011 = vadd.f32 %v2824, %v2985
  %v3012 = vadd.f32 %v2827, %v2988
  %v3013 = vadd.f32 %v2832, %v2993
  %v3014 = vadd.f32 %v2835, %v2996
  %v3015 = vld [vmem:[%s12] sm:$0x1]
  %v3017 = vlaneseq
  %v3018 = vshrl.u32 %v3017, 7
  %v3019 = vsub.s32 0, %v3018
  %v3020 = vrot.slane %v3015, %v3019
  %v3022 = vmul.f32 %v2999, %v3020
  %v3023 = vmul.f32 %v3000, %v3020
  %v3024 = vmul.f32 %v3001, %v3020
  %v3025 = vmul.f32 %v3002, %v3020
  %v3026 = vmul.f32 %v3003, %v3020
  %v3027 = vmul.f32 %v3004, %v3020
  %v3028 = vmul.f32 %v3005, %v3020
  %v3029 = vmul.f32 %v3006, %v3020
  %v3030 = vmul.f32 %v3007, %v3020
  %v3031 = vmul.f32 %v3008, %v3020
  %v3032 = vmul.f32 %v3009, %v3020
  %v3033 = vmul.f32 %v3010, %v3020
  %v3034 = vmul.f32 %v3011, %v3020
  %v3035 = vmul.f32 %v3012, %v3020
  %v3036 = vmul.f32 %v3013, %v3020
  %v3037 = vmul.f32 %v3014, %v3020
  %v3038 = vld [vmem:[%s13] sm:$0x1]
  %v3040 = vlaneseq
  %v3041 = vshrl.u32 %v3040, 7
  %v3042 = vsub.s32 0, %v3041
  %v3043 = vrot.slane %v3038, %v3042
  %v3045 = vadd.f32 %v3022, %v3043
  %v3046 = vadd.f32 %v3023, %v3043
  %v3047 = vadd.f32 %v3024, %v3043
  %v3048 = vadd.f32 %v3025, %v3043
  %v3049 = vadd.f32 %v3026, %v3043
  %v3050 = vadd.f32 %v3027, %v3043
  %v3051 = vadd.f32 %v3028, %v3043
  %v3052 = vadd.f32 %v3029, %v3043
  %v3053 = vadd.f32 %v3030, %v3043
  %v3054 = vadd.f32 %v3031, %v3043
  %v3055 = vadd.f32 %v3032, %v3043
  %v3056 = vadd.f32 %v3033, %v3043
  %v3057 = vadd.f32 %v3034, %v3043
  %v3058 = vadd.f32 %v3035, %v3043
  %v3059 = vadd.f32 %v3036, %v3043
  %v3060 = vadd.f32 %v3037, %v3043
  %v3061 = vmax.f32 %v3045, 0.0
  %v3062 = vmax.f32 %v3046, 0.0
  %v3063 = vmax.f32 %v3047, 0.0
  %v3064 = vmax.f32 %v3048, 0.0
  %v3065 = vmax.f32 %v3049, 0.0
  %v3066 = vmax.f32 %v3050, 0.0
  %v3067 = vmax.f32 %v3051, 0.0
  %v3068 = vmax.f32 %v3052, 0.0
  %v3069 = vmax.f32 %v3053, 0.0
  %v3070 = vmax.f32 %v3054, 0.0
  %v3071 = vmax.f32 %v3055, 0.0
  %v3072 = vmax.f32 %v3056, 0.0
  %v3073 = vmax.f32 %v3057, 0.0
  %v3074 = vmax.f32 %v3058, 0.0
  %v3075 = vmax.f32 %v3059, 0.0
  %v3076 = vmax.f32 %v3060, 0.0
  %v3077 = vpack.c.bf16 %v3062, %v3061
  %v3078 = vpack.c.bf16 %v3064, %v3063
  %v3079 = vpack.c.bf16 %v3066, %v3065
  %v3080 = vpack.c.bf16 %v3068, %v3067
  %v3081 = vpack.c.bf16 %v3070, %v3069
  %v3082 = vpack.c.bf16 %v3072, %v3071
  %v3083 = vpack.c.bf16 %v3074, %v3073
  %v3084 = vpack.c.bf16 %v3076, %v3075
  %v3085 = vld [vmem:[%s14] sm:$0xff]
  %v3086 = vld [vmem:[%s14 + $0x8] sm:$0xff]
  %v3087 = vld [vmem:[%s14 + $0x10] sm:$0xf]
  %v3088 = vld [vmem:[%s14 + $0x14] sm:$0xff]
  %v3089 = vld [vmem:[%s14 + $0x1c] sm:$0xff]
  %v3090 = vld [vmem:[%s14 + $0x24] sm:$0xf]
  %v3091 = vld [vmem:[%s14 + $0x28] sm:$0xff]
  %v3092 = vld [vmem:[%s14 + $0x30] sm:$0xff]
  %v3093 = vld [vmem:[%s14 + $0x38] sm:$0xf]
  %v3094 = vld [vmem:[%s14 + $0x3c] sm:$0xff]
  %v3095 = vld [vmem:[%s14 + $0x44] sm:$0xff]
  %v3096 = vld [vmem:[%s14 + $0x4c] sm:$0xf]
  %v3097 = vld [vmem:[%s14 + $0x50] sm:$0xff]
  %v3098 = vld [vmem:[%s14 + $0x58] sm:$0xff]
  %v3099 = vld [vmem:[%s14 + $0x60] sm:$0xf]
  %v3100 = vld [vmem:[%s14 + $0x64] sm:$0xff]
  %v3101 = vld [vmem:[%s14 + $0x6c] sm:$0xff]
  %v3102 = vld [vmem:[%s14 + $0x74] sm:$0xf]
  %v3103 = vld [vmem:[%s14 + $0x78] sm:$0xff]
  %v3104 = vld [vmem:[%s14 + $0x80] sm:$0xff]
  %v3105 = vld [vmem:[%s14 + $0x88] sm:$0xf]
  %v3106 = vld [vmem:[%s14 + $0x8c] sm:$0xff]
  %v3107 = vld [vmem:[%s14 + $0x94] sm:$0xff]
  %v3108 = vld [vmem:[%s14 + $0x9c] sm:$0xf]
  %v3109 = vld [vmem:[%s14 + $0xa0] sm:$0xff]
  %v3110 = vld [vmem:[%s14 + $0xa8] sm:$0xff]
  %v3111 = vld [vmem:[%s14 + $0xb0] sm:$0xf]
  %v3112 = vld [vmem:[%s14 + $0xb4] sm:$0xff]
  %v3113 = vld [vmem:[%s14 + $0xbc] sm:$0xff]
  %v3114 = vld [vmem:[%s14 + $0xc4] sm:$0xf]
  %v3115 = vld [vmem:[%s14 + $0xc8] sm:$0xff]
  %v3116 = vld [vmem:[%s14 + $0xd0] sm:$0xff]
  %v3117 = vld [vmem:[%s14 + $0xd8] sm:$0xf]
  %v3118 = vld [vmem:[%s14 + $0xdc] sm:$0xff]
  %v3119 = vld [vmem:[%s14 + $0xe4] sm:$0xff]
  %v3120 = vld [vmem:[%s14 + $0xec] sm:$0xf]
  %v3121 = vld [vmem:[%s14 + $0xf0] sm:$0xff]
  %v3122 = vld [vmem:[%s14 + $0xf8] sm:$0xff]
  %v3123 = vld [vmem:[%s14 + $0x100] sm:$0xf]
  %v3124 = vld [vmem:[%s14 + $0x104] sm:$0xff]
  %v3125 = vld [vmem:[%s14 + $0x10c] sm:$0xff]
  %v3126 = vld [vmem:[%s14 + $0x114] sm:$0xf]
  %v3127 = vld [vmem:[%s14 + $0x118] sm:$0xff]
  %v3128 = vld [vmem:[%s14 + $0x120] sm:$0xff]
  %v3129 = vld [vmem:[%s14 + $0x128] sm:$0xf]
  %v3130 = vld [vmem:[%s14 + $0x12c] sm:$0xff]
  %v3131 = vld [vmem:[%s14 + $0x134] sm:$0xff]
  %v3132 = vld [vmem:[%s14 + $0x13c] sm:$0xf]
  %v3133 = vld [vmem:[%s15] sm:$0xff]
  %v3134 = vld [vmem:[%s15 + $0x8] sm:$0xff]
  %v3135 = vld [vmem:[%s15 + $0x10] sm:$0xf]
  %v3136 = vld [vmem:[%s15 + $0x14] sm:$0xff]
  %v3137 = vld [vmem:[%s15 + $0x1c] sm:$0xff]
  %v3138 = vld [vmem:[%s15 + $0x24] sm:$0xf]
  %v3139 = vld [vmem:[%s15 + $0x28] sm:$0xff]
  %v3140 = vld [vmem:[%s15 + $0x30] sm:$0xff]
  %v3141 = vld [vmem:[%s15 + $0x38] sm:$0xf]
  %v3142 = vld [vmem:[%s15 + $0x3c] sm:$0xff]
  %v3143 = vld [vmem:[%s15 + $0x44] sm:$0xff]
  %v3144 = vld [vmem:[%s15 + $0x4c] sm:$0xf]
  %v3145 = vld [vmem:[%s15 + $0x50] sm:$0xff]
  %v3146 = vld [vmem:[%s15 + $0x58] sm:$0xff]
  %v3147 = vld [vmem:[%s15 + $0x60] sm:$0xf]
  %v3148 = vld [vmem:[%s15 + $0x64] sm:$0xff]
  %v3149 = vld [vmem:[%s15 + $0x6c] sm:$0xff]
  %v3150 = vld [vmem:[%s15 + $0x74] sm:$0xf]
  %v3151 = vld [vmem:[%s15 + $0x78] sm:$0xff]
  %v3152 = vld [vmem:[%s15 + $0x80] sm:$0xff]
  %v3153 = vld [vmem:[%s15 + $0x88] sm:$0xf]
  %v3154 = vld [vmem:[%s15 + $0x8c] sm:$0xff]
  %v3155 = vld [vmem:[%s15 + $0x94] sm:$0xff]
  %v3156 = vld [vmem:[%s15 + $0x9c] sm:$0xf]
  %v3157 = vld [vmem:[%s15 + $0xa0] sm:$0xff]
  %v3158 = vld [vmem:[%s15 + $0xa8] sm:$0xff]
  %v3159 = vld [vmem:[%s15 + $0xb0] sm:$0xf]
  %v3160 = vld [vmem:[%s15 + $0xb4] sm:$0xff]
  %v3161 = vld [vmem:[%s15 + $0xbc] sm:$0xff]
  %v3162 = vld [vmem:[%s15 + $0xc4] sm:$0xf]
  %v3163 = vld [vmem:[%s15 + $0xc8] sm:$0xff]
  %v3164 = vld [vmem:[%s15 + $0xd0] sm:$0xff]
  %v3165 = vld [vmem:[%s15 + $0xd8] sm:$0xf]
  %v3166 = vld [vmem:[%s15 + $0xdc] sm:$0xff]
  %v3167 = vld [vmem:[%s15 + $0xe4] sm:$0xff]
  %v3168 = vld [vmem:[%s15 + $0xec] sm:$0xf]
  %v3169 = vld [vmem:[%s15 + $0xf0] sm:$0xff]
  %v3170 = vld [vmem:[%s15 + $0xf8] sm:$0xff]
  %v3171 = vld [vmem:[%s15 + $0x100] sm:$0xf]
  %v3172 = vld [vmem:[%s15 + $0x104] sm:$0xff]
  %v3173 = vld [vmem:[%s15 + $0x10c] sm:$0xff]
  %v3174 = vld [vmem:[%s15 + $0x114] sm:$0xf]
  %v3175 = vld [vmem:[%s15 + $0x118] sm:$0xff]
  %v3176 = vld [vmem:[%s15 + $0x120] sm:$0xff]
  %v3177 = vld [vmem:[%s15 + $0x128] sm:$0xf]
  %v3178 = vld [vmem:[%s15 + $0x12c] sm:$0xff]
  %v3179 = vld [vmem:[%s15 + $0x134] sm:$0xff]
  %v3180 = vld [vmem:[%s15 + $0x13c] sm:$0xf]
  %v3229 = vunpack.c.l.b16 %v3133
  %v3230 = vunpack.c.h.b16 %v3133
  %v3231 = vunpack.c.l.b16 %v3134
  %v3232 = vunpack.c.h.b16 %v3134
  %v3233 = vunpack.c.l.b16 %v3135
  %v3234 = vunpack.c.l.b16 %v3136
  %v3235 = vunpack.c.h.b16 %v3136
  %v3236 = vunpack.c.l.b16 %v3137
  %v3237 = vunpack.c.h.b16 %v3137
  %v3238 = vunpack.c.l.b16 %v3138
  %v3239 = vunpack.c.l.b16 %v3139
  %v3240 = vunpack.c.h.b16 %v3139
  %v3241 = vunpack.c.l.b16 %v3140
  %v3242 = vunpack.c.h.b16 %v3140
  %v3243 = vunpack.c.l.b16 %v3141
  %v3244 = vunpack.c.l.b16 %v3142
  %v3245 = vunpack.c.h.b16 %v3142
  %v3246 = vunpack.c.l.b16 %v3143
  %v3247 = vunpack.c.h.b16 %v3143
  %v3248 = vunpack.c.l.b16 %v3144
  %v3249 = vunpack.c.l.b16 %v3145
  %v3250 = vunpack.c.h.b16 %v3145
  %v3251 = vunpack.c.l.b16 %v3146
  %v3252 = vunpack.c.h.b16 %v3146
  %v3253 = vunpack.c.l.b16 %v3147
  %v3254 = vunpack.c.l.b16 %v3148
  %v3255 = vunpack.c.h.b16 %v3148
  %v3256 = vunpack.c.l.b16 %v3149
  %v3257 = vunpack.c.h.b16 %v3149
  %v3258 = vunpack.c.l.b16 %v3150
  %v3259 = vunpack.c.l.b16 %v3151
  %v3260 = vunpack.c.h.b16 %v3151
  %v3261 = vunpack.c.l.b16 %v3152
  %v3262 = vunpack.c.h.b16 %v3152
  %v3263 = vunpack.c.l.b16 %v3153
  %v3264 = vunpack.c.l.b16 %v3154
  %v3265 = vunpack.c.h.b16 %v3154
  %v3266 = vunpack.c.l.b16 %v3155
  %v3267 = vunpack.c.h.b16 %v3155
  %v3268 = vunpack.c.l.b16 %v3156
  %v3269 = vunpack.c.l.b16 %v3157
  %v3270 = vunpack.c.h.b16 %v3157
  %v3271 = vunpack.c.l.b16 %v3158
  %v3272 = vunpack.c.h.b16 %v3158
  %v3273 = vunpack.c.l.b16 %v3159
  %v3274 = vunpack.c.l.b16 %v3160
  %v3275 = vunpack.c.h.b16 %v3160
  %v3276 = vunpack.c.l.b16 %v3161
  %v3277 = vunpack.c.h.b16 %v3161
  %v3278 = vunpack.c.l.b16 %v3162
  %v3279 = vunpack.c.l.b16 %v3163
  %v3280 = vunpack.c.h.b16 %v3163
  %v3281 = vunpack.c.l.b16 %v3164
  %v3282 = vunpack.c.h.b16 %v3164
  %v3283 = vunpack.c.l.b16 %v3165
  %v3284 = vunpack.c.l.b16 %v3166
  %v3285 = vunpack.c.h.b16 %v3166
  %v3286 = vunpack.c.l.b16 %v3167
  %v3287 = vunpack.c.h.b16 %v3167
  %v3288 = vunpack.c.l.b16 %v3168
  %v3289 = vunpack.c.l.b16 %v3169
  %v3290 = vunpack.c.h.b16 %v3169
  %v3291 = vunpack.c.l.b16 %v3170
  %v3292 = vunpack.c.h.b16 %v3170
  %v3293 = vunpack.c.l.b16 %v3171
  %v3294 = vunpack.c.l.b16 %v3172
  %v3295 = vunpack.c.h.b16 %v3172
  %v3296 = vunpack.c.l.b16 %v3173
  %v3297 = vunpack.c.h.b16 %v3173
  %v3298 = vunpack.c.l.b16 %v3174
  %v3299 = vunpack.c.l.b16 %v3175
  %v3300 = vunpack.c.h.b16 %v3175
  %v3301 = vunpack.c.l.b16 %v3176
  %v3302 = vunpack.c.h.b16 %v3176
  %v3303 = vunpack.c.l.b16 %v3177
  %v3304 = vunpack.c.l.b16 %v3178
  %v3305 = vunpack.c.h.b16 %v3178
  %v3306 = vunpack.c.l.b16 %v3179
  %v3307 = vunpack.c.h.b16 %v3179
  %v3308 = vunpack.c.l.b16 %v3180
  %v3309 = vpack.c.b16 %v3234, %v3229
  %v3310 = vpack.c.b16 %v3235, %v3230
  %v3311 = vpack.c.b16 %v3236, %v3231
  %v3312 = vpack.c.b16 %v3237, %v3232
  %v3313 = vpack.c.b16 %v3238, %v3233
  %v3314 = vpack.c.b16 %v3244, %v3239
  %v3315 = vpack.c.b16 %v3245, %v3240
  %v3316 = vpack.c.b16 %v3246, %v3241
  %v3317 = vpack.c.b16 %v3247, %v3242
  %v3318 = vpack.c.b16 %v3248, %v3243
  %v3319 = vpack.c.b16 %v3254, %v3249
  %v3320 = vpack.c.b16 %v3255, %v3250
  %v3321 = vpack.c.b16 %v3256, %v3251
  %v3322 = vpack.c.b16 %v3257, %v3252
  %v3323 = vpack.c.b16 %v3258, %v3253
  %v3324 = vpack.c.b16 %v3264, %v3259
  %v3325 = vpack.c.b16 %v3265, %v3260
  %v3326 = vpack.c.b16 %v3266, %v3261
  %v3327 = vpack.c.b16 %v3267, %v3262
  %v3328 = vpack.c.b16 %v3268, %v3263
  %v3329 = vpack.c.b16 %v3274, %v3269
  %v3330 = vpack.c.b16 %v3275, %v3270
  %v3331 = vpack.c.b16 %v3276, %v3271
  %v3332 = vpack.c.b16 %v3277, %v3272
  %v3333 = vpack.c.b16 %v3278, %v3273
  %v3334 = vpack.c.b16 %v3284, %v3279
  %v3335 = vpack.c.b16 %v3285, %v3280
  %v3336 = vpack.c.b16 %v3286, %v3281
  %v3337 = vpack.c.b16 %v3287, %v3282
  %v3338 = vpack.c.b16 %v3288, %v3283
  %v3339 = vpack.c.b16 %v3294, %v3289
  %v3340 = vpack.c.b16 %v3295, %v3290
  %v3341 = vpack.c.b16 %v3296, %v3291
  %v3342 = vpack.c.b16 %v3297, %v3292
  %v3343 = vpack.c.b16 %v3298, %v3293
  %v3344 = vpack.c.b16 %v3304, %v3299
  %v3345 = vpack.c.b16 %v3305, %v3300
  %v3346 = vpack.c.b16 %v3306, %v3301
  %v3347 = vpack.c.b16 %v3307, %v3302
  %v3348 = vpack.c.b16 %v3308, %v3303
  %3389 = vmatprep.subr.bf16.mxu0 %v3345
  %3390 = vmatpush1.bf16.msra.mxu0 %v3344
  %3391 = vmatprep.subr.bf16.mxu0 %v3340
  %3392 = vmatpush1.bf16.msra.mxu0 %v3339
  %3393 = vmatprep.subr.bf16.mxu0 %v3335
  %3394 = vmatpush1.bf16.msra.mxu0 %v3334
  %3395 = vmatprep.subr.bf16.mxu0 %v3330
  %3396 = vmatpush1.bf16.msra.mxu0 %v3329
  %3397 = vmatprep.subr.bf16.mxu0 %v3325
  %3398 = vmatpush1.bf16.msra.mxu0 %v3324
  %3399 = vmatprep.subr.bf16.mxu0 %v3320
  %3400 = vmatpush1.bf16.msra.mxu0 %v3319
  %3401 = vmatprep.subr.bf16.mxu0 %v3315
  %3402 = vmatpush1.bf16.msra.mxu0 %v3314
  %3403 = vmatprep.subr.bf16.mxu0 %v3310
  %3404 = vmatpush1.bf16.msra.mxu0 %v3309
  %3405 = vmatprep.subr.bf16.mxu0 0
  %3406 = vmatpush2.bf16.msra.mxu0 0
  %3407 = vmatprep.subr.bf16.mxu0 0
  %3408 = vmatpush2.bf16.msra.mxu0 0
  %3409 = vmatprep.subr.bf16.mxu0 0
  %3410 = vmatpush2.bf16.msra.mxu0 0
  %3411 = vmatprep.subr.bf16.mxu0 0
  %3412 = vmatpush2.bf16.msra.mxu0 0
  %3413 = vmatprep.subr.bf16.mxu0 0
  %3414 = vmatpush2.bf16.msra.mxu0 0
  %3415 = vmatprep.subr.bf16.mxu0 0
  %3416 = vmatpush2.bf16.msra.mxu0 0
  %3417 = vmatprep.subr.bf16.mxu0 0
  %3418 = vmatpush2.bf16.msra.mxu0 0
  %3419 = vmatprep.subr.bf16.mxu0 0
  %3420 = vmatpush2.bf16.msra.mxu0 0
  %3421 = vmatprep.mubr.bf16.mxu0 0
  %3422 = vmatmul.mubr.bf16.gmra.mxu0 %v3077
  %v3423 = vpop.f32.mrf.mxu0
  %v3424 = vadd.f32 0.0, %v3423
  %v3425 = vpop.f32.mrf.mxu0
  %v3426 = vadd.f32 0.0, %v3425
  %v3427 = vpop.f32.mrf.mxu0
  %v3428 = vadd.f32 0.0, %v3427
  %v3429 = vpop.f32.mrf.mxu0
  %v3430 = vadd.f32 0.0, %v3429
  %3431 = vmatprep.mubr.bf16.mxu0 0
  %3432 = vmatmul.mubr.bf16.gmra.mxu0 %v3078
  %v3433 = vpop.f32.mrf.mxu0
  %v3434 = vadd.f32 0.0, %v3433
  %v3435 = vpop.f32.mrf.mxu0
  %v3436 = vadd.f32 0.0, %v3435
  %v3437 = vpop.f32.mrf.mxu0
  %v3438 = vadd.f32 0.0, %v3437
  %v3439 = vpop.f32.mrf.mxu0
  %v3440 = vadd.f32 0.0, %v3439
  %3441 = vmatprep.mubr.bf16.mxu0 0
  %3442 = vmatmul.mubr.bf16.gmra.mxu0 %v3079
  %v3443 = vpop.f32.mrf.mxu0
  %v3444 = vadd.f32 0.0, %v3443
  %v3445 = vpop.f32.mrf.mxu0
  %v3446 = vadd.f32 0.0, %v3445
  %v3447 = vpop.f32.mrf.mxu0
  %v3448 = vadd.f32 0.0, %v3447
  %v3449 = vpop.f32.mrf.mxu0
  %v3450 = vadd.f32 0.0, %v3449
  %3451 = vmatprep.mubr.bf16.mxu0 0
  %3452 = vmatmul.mubr.bf16.gmra.mxu0 %v3080
  %v3453 = vpop.f32.mrf.mxu0
  %v3454 = vadd.f32 0.0, %v3453
  %v3455 = vpop.f32.mrf.mxu0
  %v3456 = vadd.f32 0.0, %v3455
  %v3457 = vpop.f32.mrf.mxu0
  %v3458 = vadd.f32 0.0, %v3457
  %v3459 = vpop.f32.mrf.mxu0
  %v3460 = vadd.f32 0.0, %v3459
  %3461 = vmatprep.mubr.bf16.mxu0 0
  %3462 = vmatmul.mubr.bf16.gmra.mxu0 %v3081
  %v3463 = vpop.f32.mrf.mxu0
  %v3464 = vadd.f32 0.0, %v3463
  %v3465 = vpop.f32.mrf.mxu0
  %v3466 = vadd.f32 0.0, %v3465
  %v3467 = vpop.f32.mrf.mxu0
  %v3468 = vadd.f32 0.0, %v3467
  %v3469 = vpop.f32.mrf.mxu0
  %v3470 = vadd.f32 0.0, %v3469
  %3471 = vmatprep.mubr.bf16.mxu0 0
  %3472 = vmatmul.mubr.bf16.gmra.mxu0 %v3082
  %v3473 = vpop.f32.mrf.mxu0
  %v3474 = vadd.f32 0.0, %v3473
  %v3475 = vpop.f32.mrf.mxu0
  %v3476 = vadd.f32 0.0, %v3475
  %v3477 = vpop.f32.mrf.mxu0
  %v3478 = vadd.f32 0.0, %v3477
  %v3479 = vpop.f32.mrf.mxu0
  %v3480 = vadd.f32 0.0, %v3479
  %3481 = vmatprep.mubr.bf16.mxu0 0
  %3482 = vmatmul.mubr.bf16.gmra.mxu0 %v3083
  %v3483 = vpop.f32.mrf.mxu0
  %v3484 = vadd.f32 0.0, %v3483
  %v3485 = vpop.f32.mrf.mxu0
  %v3486 = vadd.f32 0.0, %v3485
  %v3487 = vpop.f32.mrf.mxu0
  %v3488 = vadd.f32 0.0, %v3487
  %v3489 = vpop.f32.mrf.mxu0
  %v3490 = vadd.f32 0.0, %v3489
  %3491 = vmatprep.mubr.bf16.mxu0 0
  %3492 = vmatmul.mubr.bf16.gmra.mxu0 %v3084
  %v3493 = vpop.f32.mrf.mxu0
  %v3494 = vadd.f32 0.0, %v3493
  %v3495 = vpop.f32.mrf.mxu0
  %v3496 = vadd.f32 0.0, %v3495
  %v3497 = vpop.f32.mrf.mxu0
  %v3498 = vadd.f32 0.0, %v3497
  %v3499 = vpop.f32.mrf.mxu0
  %v3500 = vadd.f32 0.0, %v3499
  %3501 = vdwg.mxu0
  %3502 = vmatprep.subr.bf16.mxu0 %v3347
  %3503 = vmatpush1.bf16.msra.mxu0 %v3346
  %3504 = vmatprep.subr.bf16.mxu0 %v3342
  %3505 = vmatpush1.bf16.msra.mxu0 %v3341
  %3506 = vmatprep.subr.bf16.mxu0 %v3337
  %3507 = vmatpush1.bf16.msra.mxu0 %v3336
  %3508 = vmatprep.subr.bf16.mxu0 %v3332
  %3509 = vmatpush1.bf16.msra.mxu0 %v3331
  %3510 = vmatprep.subr.bf16.mxu0 %v3327
  %3511 = vmatpush1.bf16.msra.mxu0 %v3326
  %3512 = vmatprep.subr.bf16.mxu0 %v3322
  %3513 = vmatpush1.bf16.msra.mxu0 %v3321
  %3514 = vmatprep.subr.bf16.mxu0 %v3317
  %3515 = vmatpush1.bf16.msra.mxu0 %v3316
  %3516 = vmatprep.subr.bf16.mxu0 %v3312
  %3517 = vmatpush1.bf16.msra.mxu0 %v3311
  %3518 = vmatprep.subr.bf16.mxu0 0
  %3519 = vmatpush2.bf16.msra.mxu0 0
  %3520 = vmatprep.subr.bf16.mxu0 0
  %3521 = vmatpush2.bf16.msra.mxu0 0
  %3522 = vmatprep.subr.bf16.mxu0 0
  %3523 = vmatpush2.bf16.msra.mxu0 0
  %3524 = vmatprep.subr.bf16.mxu0 0
  %3525 = vmatpush2.bf16.msra.mxu0 0
  %3526 = vmatprep.subr.bf16.mxu0 0
  %3527 = vmatpush2.bf16.msra.mxu0 0
  %3528 = vmatprep.subr.bf16.mxu0 0
  %3529 = vmatpush2.bf16.msra.mxu0 0
  %3530 = vmatprep.subr.bf16.mxu0 0
  %3531 = vmatpush2.bf16.msra.mxu0 0
  %3532 = vmatprep.subr.bf16.mxu0 0
  %3533 = vmatpush2.bf16.msra.mxu0 0
  %3534 = vmatprep.mubr.bf16.mxu0 0
  %3535 = vmatmul.mubr.bf16.gmra.mxu0 %v3077
  %v3536 = vpop.f32.mrf.mxu0
  %v3537 = vadd.f32 0.0, %v3536
  %v3538 = vpop.f32.mrf.mxu0
  %v3539 = vadd.f32 0.0, %v3538
  %v3540 = vpop.f32.mrf.mxu0
  %v3541 = vadd.f32 0.0, %v3540
  %v3542 = vpop.f32.mrf.mxu0
  %v3543 = vadd.f32 0.0, %v3542
  %3544 = vmatprep.mubr.bf16.mxu0 0
  %3545 = vmatmul.mubr.bf16.gmra.mxu0 %v3078
  %v3546 = vpop.f32.mrf.mxu0
  %v3547 = vadd.f32 0.0, %v3546
  %v3548 = vpop.f32.mrf.mxu0
  %v3549 = vadd.f32 0.0, %v3548
  %v3550 = vpop.f32.mrf.mxu0
  %v3551 = vadd.f32 0.0, %v3550
  %v3552 = vpop.f32.mrf.mxu0
  %v3553 = vadd.f32 0.0, %v3552
  %3554 = vmatprep.mubr.bf16.mxu0 0
  %3555 = vmatmul.mubr.bf16.gmra.mxu0 %v3079
  %v3556 = vpop.f32.mrf.mxu0
  %v3557 = vadd.f32 0.0, %v3556
  %v3558 = vpop.f32.mrf.mxu0
  %v3559 = vadd.f32 0.0, %v3558
  %v3560 = vpop.f32.mrf.mxu0
  %v3561 = vadd.f32 0.0, %v3560
  %v3562 = vpop.f32.mrf.mxu0
  %v3563 = vadd.f32 0.0, %v3562
  %3564 = vmatprep.mubr.bf16.mxu0 0
  %3565 = vmatmul.mubr.bf16.gmra.mxu0 %v3080
  %v3566 = vpop.f32.mrf.mxu0
  %v3567 = vadd.f32 0.0, %v3566
  %v3568 = vpop.f32.mrf.mxu0
  %v3569 = vadd.f32 0.0, %v3568
  %v3570 = vpop.f32.mrf.mxu0
  %v3571 = vadd.f32 0.0, %v3570
  %v3572 = vpop.f32.mrf.mxu0
  %v3573 = vadd.f32 0.0, %v3572
  %3574 = vmatprep.mubr.bf16.mxu0 0
  %3575 = vmatmul.mubr.bf16.gmra.mxu0 %v3081
  %v3576 = vpop.f32.mrf.mxu0
  %v3577 = vadd.f32 0.0, %v3576
  %v3578 = vpop.f32.mrf.mxu0
  %v3579 = vadd.f32 0.0, %v3578
  %v3580 = vpop.f32.mrf.mxu0
  %v3581 = vadd.f32 0.0, %v3580
  %v3582 = vpop.f32.mrf.mxu0
  %v3583 = vadd.f32 0.0, %v3582
  %3584 = vmatprep.mubr.bf16.mxu0 0
  %3585 = vmatmul.mubr.bf16.gmra.mxu0 %v3082
  %v3586 = vpop.f32.mrf.mxu0
  %v3587 = vadd.f32 0.0, %v3586
  %v3588 = vpop.f32.mrf.mxu0
  %v3589 = vadd.f32 0.0, %v3588
  %v3590 = vpop.f32.mrf.mxu0
  %v3591 = vadd.f32 0.0, %v3590
  %v3592 = vpop.f32.mrf.mxu0
  %v3593 = vadd.f32 0.0, %v3592
  %3594 = vmatprep.mubr.bf16.mxu0 0
  %3595 = vmatmul.mubr.bf16.gmra.mxu0 %v3083
  %v3596 = vpop.f32.mrf.mxu0
  %v3597 = vadd.f32 0.0, %v3596
  %v3598 = vpop.f32.mrf.mxu0
  %v3599 = vadd.f32 0.0, %v3598
  %v3600 = vpop.f32.mrf.mxu0
  %v3601 = vadd.f32 0.0, %v3600
  %v3602 = vpop.f32.mrf.mxu0
  %v3603 = vadd.f32 0.0, %v3602
  %3604 = vmatprep.mubr.bf16.mxu0 0
  %3605 = vmatmul.mubr.bf16.gmra.mxu0 %v3084
  %v3606 = vpop.f32.mrf.mxu0
  %v3607 = vadd.f32 0.0, %v3606
  %v3608 = vpop.f32.mrf.mxu0
  %v3609 = vadd.f32 0.0, %v3608
  %v3610 = vpop.f32.mrf.mxu0
  %v3611 = vadd.f32 0.0, %v3610
  %v3612 = vpop.f32.mrf.mxu0
  %v3613 = vadd.f32 0.0, %v3612
  %3614 = vdwg.mxu0
  %3615 = vmatprep.subr.bf16.mxu0 0
  %3616 = vmatpush1.bf16.msra.mxu0 %v3348
  %3617 = vmatprep.subr.bf16.mxu0 0
  %3618 = vmatpush1.bf16.msra.mxu0 %v3343
  %3619 = vmatprep.subr.bf16.mxu0 0
  %3620 = vmatpush1.bf16.msra.mxu0 %v3338
  %3621 = vmatprep.subr.bf16.mxu0 0
  %3622 = vmatpush1.bf16.msra.mxu0 %v3333
  %3623 = vmatprep.subr.bf16.mxu0 0
  %3624 = vmatpush1.bf16.msra.mxu0 %v3328
  %3625 = vmatprep.subr.bf16.mxu0 0
  %3626 = vmatpush1.bf16.msra.mxu0 %v3323
  %3627 = vmatprep.subr.bf16.mxu0 0
  %3628 = vmatpush1.bf16.msra.mxu0 %v3318
  %3629 = vmatprep.subr.bf16.mxu0 0
  %3630 = vmatpush1.bf16.msra.mxu0 %v3313
  %3631 = vmatprep.subr.bf16.mxu0 0
  %3632 = vmatpush2.bf16.msra.mxu0 0
  %3633 = vmatprep.subr.bf16.mxu0 0
  %3634 = vmatpush2.bf16.msra.mxu0 0
  %3635 = vmatprep.subr.bf16.mxu0 0
  %3636 = vmatpush2.bf16.msra.mxu0 0
  %3637 = vmatprep.subr.bf16.mxu0 0
  %3638 = vmatpush2.bf16.msra.mxu0 0
  %3639 = vmatprep.subr.bf16.mxu0 0
  %3640 = vmatpush2.bf16.msra.mxu0 0
  %3641 = vmatprep.subr.bf16.mxu0 0
  %3642 = vmatpush2.bf16.msra.mxu0 0
  %3643 = vmatprep.subr.bf16.mxu0 0
  %3644 = vmatpush2.bf16.msra.mxu0 0
  %3645 = vmatprep.subr.bf16.mxu0 0
  %3646 = vmatpush2.bf16.msra.mxu0 0
  %3647 = vmatprep.mubr.bf16.mxu0 0
  %3648 = vmatmul.mubr.bf16.gmra.mxu0 %v3077
  %v3649 = vpop.f32.mrf.mxu0
  %v3650 = vadd.f32 0.0, %v3649
  %v3651 = vpop.f32.mrf.mxu0
  %v3652 = vpop.f32.mrf.mxu0
  %v3653 = vadd.f32 0.0, %v3652
  %v3654 = vpop.f32.mrf.mxu0
  %3655 = vmatprep.mubr.bf16.mxu0 0
  %3656 = vmatmul.mubr.bf16.gmra.mxu0 %v3078
  %v3657 = vpop.f32.mrf.mxu0
  %v3658 = vadd.f32 0.0, %v3657
  %v3659 = vpop.f32.mrf.mxu0
  %v3660 = vpop.f32.mrf.mxu0
  %v3661 = vadd.f32 0.0, %v3660
  %v3662 = vpop.f32.mrf.mxu0
  %3663 = vmatprep.mubr.bf16.mxu0 0
  %3664 = vmatmul.mubr.bf16.gmra.mxu0 %v3079
  %v3665 = vpop.f32.mrf.mxu0
  %v3666 = vadd.f32 0.0, %v3665
  %v3667 = vpop.f32.mrf.mxu0
  %v3668 = vpop.f32.mrf.mxu0
  %v3669 = vadd.f32 0.0, %v3668
  %v3670 = vpop.f32.mrf.mxu0
  %3671 = vmatprep.mubr.bf16.mxu0 0
  %3672 = vmatmul.mubr.bf16.gmra.mxu0 %v3080
  %v3673 = vpop.f32.mrf.mxu0
  %v3674 = vadd.f32 0.0, %v3673
  %v3675 = vpop.f32.mrf.mxu0
  %v3676 = vpop.f32.mrf.mxu0
  %v3677 = vadd.f32 0.0, %v3676
  %v3678 = vpop.f32.mrf.mxu0
  %3679 = vmatprep.mubr.bf16.mxu0 0
  %3680 = vmatmul.mubr.bf16.gmra.mxu0 %v3081
  %v3681 = vpop.f32.mrf.mxu0
  %v3682 = vadd.f32 0.0, %v3681
  %v3683 = vpop.f32.mrf.mxu0
  %v3684 = vpop.f32.mrf.mxu0
  %v3685 = vadd.f32 0.0, %v3684
  %v3686 = vpop.f32.mrf.mxu0
  %3687 = vmatprep.mubr.bf16.mxu0 0
  %3688 = vmatmul.mubr.bf16.gmra.mxu0 %v3082
  %v3689 = vpop.f32.mrf.mxu0
  %v3690 = vadd.f32 0.0, %v3689
  %v3691 = vpop.f32.mrf.mxu0
  %v3692 = vpop.f32.mrf.mxu0
  %v3693 = vadd.f32 0.0, %v3692
  %v3694 = vpop.f32.mrf.mxu0
  %3695 = vmatprep.mubr.bf16.mxu0 0
  %3696 = vmatmul.mubr.bf16.gmra.mxu0 %v3083
  %v3697 = vpop.f32.mrf.mxu0
  %v3698 = vadd.f32 0.0, %v3697
  %v3699 = vpop.f32.mrf.mxu0
  %v3700 = vpop.f32.mrf.mxu0
  %v3701 = vadd.f32 0.0, %v3700
  %v3702 = vpop.f32.mrf.mxu0
  %3703 = vmatprep.mubr.bf16.mxu0 0
  %3704 = vmatmul.mubr.bf16.gmra.mxu0 %v3084
  %v3705 = vpop.f32.mrf.mxu0
  %v3706 = vadd.f32 0.0, %v3705
  %v3707 = vpop.f32.mrf.mxu0
  %v3708 = vpop.f32.mrf.mxu0
  %v3709 = vadd.f32 0.0, %v3708
  %v3710 = vpop.f32.mrf.mxu0
  %3711 = vdwg.mxu0
  %v3760 = vunpack.c.l.b16 %v3085
  %v3761 = vunpack.c.h.b16 %v3085
  %v3762 = vunpack.c.l.b16 %v3086
  %v3763 = vunpack.c.h.b16 %v3086
  %v3764 = vunpack.c.l.b16 %v3087
  %v3765 = vunpack.c.l.b16 %v3088
  %v3766 = vunpack.c.h.b16 %v3088
  %v3767 = vunpack.c.l.b16 %v3089
  %v3768 = vunpack.c.h.b16 %v3089
  %v3769 = vunpack.c.l.b16 %v3090
  %v3770 = vunpack.c.l.b16 %v3091
  %v3771 = vunpack.c.h.b16 %v3091
  %v3772 = vunpack.c.l.b16 %v3092
  %v3773 = vunpack.c.h.b16 %v3092
  %v3774 = vunpack.c.l.b16 %v3093
  %v3775 = vunpack.c.l.b16 %v3094
  %v3776 = vunpack.c.h.b16 %v3094
  %v3777 = vunpack.c.l.b16 %v3095
  %v3778 = vunpack.c.h.b16 %v3095
  %v3779 = vunpack.c.l.b16 %v3096
  %v3780 = vunpack.c.l.b16 %v3097
  %v3781 = vunpack.c.h.b16 %v3097
  %v3782 = vunpack.c.l.b16 %v3098
  %v3783 = vunpack.c.h.b16 %v3098
  %v3784 = vunpack.c.l.b16 %v3099
  %v3785 = vunpack.c.l.b16 %v3100
  %v3786 = vunpack.c.h.b16 %v3100
  %v3787 = vunpack.c.l.b16 %v3101
  %v3788 = vunpack.c.h.b16 %v3101
  %v3789 = vunpack.c.l.b16 %v3102
  %v3790 = vunpack.c.l.b16 %v3103
  %v3791 = vunpack.c.h.b16 %v3103
  %v3792 = vunpack.c.l.b16 %v3104
  %v3793 = vunpack.c.h.b16 %v3104
  %v3794 = vunpack.c.l.b16 %v3105
  %v3795 = vunpack.c.l.b16 %v3106
  %v3796 = vunpack.c.h.b16 %v3106
  %v3797 = vunpack.c.l.b16 %v3107
  %v3798 = vunpack.c.h.b16 %v3107
  %v3799 = vunpack.c.l.b16 %v3108
  %v3800 = vunpack.c.l.b16 %v3109
  %v3801 = vunpack.c.h.b16 %v3109
  %v3802 = vunpack.c.l.b16 %v3110
  %v3803 = vunpack.c.h.b16 %v3110
  %v3804 = vunpack.c.l.b16 %v3111
  %v3805 = vunpack.c.l.b16 %v3112
  %v3806 = vunpack.c.h.b16 %v3112
  %v3807 = vunpack.c.l.b16 %v3113
  %v3808 = vunpack.c.h.b16 %v3113
  %v3809 = vunpack.c.l.b16 %v3114
  %v3810 = vunpack.c.l.b16 %v3115
  %v3811 = vunpack.c.h.b16 %v3115
  %v3812 = vunpack.c.l.b16 %v3116
  %v3813 = vunpack.c.h.b16 %v3116
  %v3814 = vunpack.c.l.b16 %v3117
  %v3815 = vunpack.c.l.b16 %v3118
  %v3816 = vunpack.c.h.b16 %v3118
  %v3817 = vunpack.c.l.b16 %v3119
  %v3818 = vunpack.c.h.b16 %v3119
  %v3819 = vunpack.c.l.b16 %v3120
  %v3820 = vunpack.c.l.b16 %v3121
  %v3821 = vunpack.c.h.b16 %v3121
  %v3822 = vunpack.c.l.b16 %v3122
  %v3823 = vunpack.c.h.b16 %v3122
  %v3824 = vunpack.c.l.b16 %v3123
  %v3825 = vunpack.c.l.b16 %v3124
  %v3826 = vunpack.c.h.b16 %v3124
  %v3827 = vunpack.c.l.b16 %v3125
  %v3828 = vunpack.c.h.b16 %v3125
  %v3829 = vunpack.c.l.b16 %v3126
  %v3830 = vunpack.c.l.b16 %v3127
  %v3831 = vunpack.c.h.b16 %v3127
  %v3832 = vunpack.c.l.b16 %v3128
  %v3833 = vunpack.c.h.b16 %v3128
  %v3834 = vunpack.c.l.b16 %v3129
  %v3835 = vunpack.c.l.b16 %v3130
  %v3836 = vunpack.c.h.b16 %v3130
  %v3837 = vunpack.c.l.b16 %v3131
  %v3838 = vunpack.c.h.b16 %v3131
  %v3839 = vunpack.c.l.b16 %v3132
  %v3840 = vpack.c.b16 %v3765, %v3760
  %v3841 = vpack.c.b16 %v3766, %v3761
  %v3842 = vpack.c.b16 %v3767, %v3762
  %v3843 = vpack.c.b16 %v3768, %v3763
  %v3844 = vpack.c.b16 %v3769, %v3764
  %v3845 = vpack.c.b16 %v3775, %v3770
  %v3846 = vpack.c.b16 %v3776, %v3771
  %v3847 = vpack.c.b16 %v3777, %v3772
  %v3848 = vpack.c.b16 %v3778, %v3773
  %v3849 = vpack.c.b16 %v3779, %v3774
  %v3850 = vpack.c.b16 %v3785, %v3780
  %v3851 = vpack.c.b16 %v3786, %v3781
  %v3852 = vpack.c.b16 %v3787, %v3782
  %v3853 = vpack.c.b16 %v3788, %v3783
  %v3854 = vpack.c.b16 %v3789, %v3784
  %v3855 = vpack.c.b16 %v3795, %v3790
  %v3856 = vpack.c.b16 %v3796, %v3791
  %v3857 = vpack.c.b16 %v3797, %v3792
  %v3858 = vpack.c.b16 %v3798, %v3793
  %v3859 = vpack.c.b16 %v3799, %v3794
  %v3860 = vpack.c.b16 %v3805, %v3800
  %v3861 = vpack.c.b16 %v3806, %v3801
  %v3862 = vpack.c.b16 %v3807, %v3802
  %v3863 = vpack.c.b16 %v3808, %v3803
  %v3864 = vpack.c.b16 %v3809, %v3804
  %v3865 = vpack.c.b16 %v3815, %v3810
  %v3866 = vpack.c.b16 %v3816, %v3811
  %v3867 = vpack.c.b16 %v3817, %v3812
  %v3868 = vpack.c.b16 %v3818, %v3813
  %v3869 = vpack.c.b16 %v3819, %v3814
  %v3870 = vpack.c.b16 %v3825, %v3820
  %v3871 = vpack.c.b16 %v3826, %v3821
  %v3872 = vpack.c.b16 %v3827, %v3822
  %v3873 = vpack.c.b16 %v3828, %v3823
  %v3874 = vpack.c.b16 %v3829, %v3824
  %v3875 = vpack.c.b16 %v3835, %v3830
  %v3876 = vpack.c.b16 %v3836, %v3831
  %v3877 = vpack.c.b16 %v3837, %v3832
  %v3878 = vpack.c.b16 %v3838, %v3833
  %v3879 = vpack.c.b16 %v3839, %v3834
  %3920 = vmatprep.subr.bf16.mxu0 %v3876
  %3921 = vmatpush1.bf16.msra.mxu0 %v3875
  %3922 = vmatprep.subr.bf16.mxu0 %v3871
  %3923 = vmatpush1.bf16.msra.mxu0 %v3870
  %3924 = vmatprep.subr.bf16.mxu0 %v3866
  %3925 = vmatpush1.bf16.msra.mxu0 %v3865
  %3926 = vmatprep.subr.bf16.mxu0 %v3861
  %3927 = vmatpush1.bf16.msra.mxu0 %v3860
  %3928 = vmatprep.subr.bf16.mxu0 %v3856
  %3929 = vmatpush1.bf16.msra.mxu0 %v3855
  %3930 = vmatprep.subr.bf16.mxu0 %v3851
  %3931 = vmatpush1.bf16.msra.mxu0 %v3850
  %3932 = vmatprep.subr.bf16.mxu0 %v3846
  %3933 = vmatpush1.bf16.msra.mxu0 %v3845
  %3934 = vmatprep.subr.bf16.mxu0 %v3841
  %3935 = vmatpush1.bf16.msra.mxu0 %v3840
  %3936 = vmatprep.subr.bf16.mxu0 0
  %3937 = vmatpush2.bf16.msra.mxu0 0
  %3938 = vmatprep.subr.bf16.mxu0 0
  %3939 = vmatpush2.bf16.msra.mxu0 0
  %3940 = vmatprep.subr.bf16.mxu0 0
  %3941 = vmatpush2.bf16.msra.mxu0 0
  %3942 = vmatprep.subr.bf16.mxu0 0
  %3943 = vmatpush2.bf16.msra.mxu0 0
  %3944 = vmatprep.subr.bf16.mxu0 0
  %3945 = vmatpush2.bf16.msra.mxu0 0
  %3946 = vmatprep.subr.bf16.mxu0 0
  %3947 = vmatpush2.bf16.msra.mxu0 0
  %3948 = vmatprep.subr.bf16.mxu0 0
  %3949 = vmatpush2.bf16.msra.mxu0 0
  %3950 = vmatprep.subr.bf16.mxu0 0
  %3951 = vmatpush2.bf16.msra.mxu0 0
  %3952 = vmatprep.mubr.bf16.mxu0 0
  %3953 = vmatmul.mubr.bf16.gmra.mxu0 %v1176
  %v3954 = vpop.f32.mrf.mxu0
  %v3955 = vadd.f32 %v3424, %v3954
  %v3956 = vpop.f32.mrf.mxu0
  %v3957 = vadd.f32 %v3426, %v3956
  %v3958 = vpop.f32.mrf.mxu0
  %v3959 = vadd.f32 %v3428, %v3958
  %v3960 = vpop.f32.mrf.mxu0
  %v3961 = vadd.f32 %v3430, %v3960
  %3962 = vmatprep.mubr.bf16.mxu0 0
  %3963 = vmatmul.mubr.bf16.gmra.mxu0 %v1177
  %v3964 = vpop.f32.mrf.mxu0
  %v3965 = vadd.f32 %v3434, %v3964
  %v3966 = vpop.f32.mrf.mxu0
  %v3967 = vadd.f32 %v3436, %v3966
  %v3968 = vpop.f32.mrf.mxu0
  %v3969 = vadd.f32 %v3438, %v3968
  %v3970 = vpop.f32.mrf.mxu0
  %v3971 = vadd.f32 %v3440, %v3970
  %3972 = vmatprep.mubr.bf16.mxu0 0
  %3973 = vmatmul.mubr.bf16.gmra.mxu0 %v1178
  %v3974 = vpop.f32.mrf.mxu0
  %v3975 = vadd.f32 %v3444, %v3974
  %v3976 = vpop.f32.mrf.mxu0
  %v3977 = vadd.f32 %v3446, %v3976
  %v3978 = vpop.f32.mrf.mxu0
  %v3979 = vadd.f32 %v3448, %v3978
  %v3980 = vpop.f32.mrf.mxu0
  %v3981 = vadd.f32 %v3450, %v3980
  %3982 = vmatprep.mubr.bf16.mxu0 0
  %3983 = vmatmul.mubr.bf16.gmra.mxu0 %v1179
  %v3984 = vpop.f32.mrf.mxu0
  %v3985 = vadd.f32 %v3454, %v3984
  %v3986 = vpop.f32.mrf.mxu0
  %v3987 = vadd.f32 %v3456, %v3986
  %v3988 = vpop.f32.mrf.mxu0
  %v3989 = vadd.f32 %v3458, %v3988
  %v3990 = vpop.f32.mrf.mxu0
  %v3991 = vadd.f32 %v3460, %v3990
  %3992 = vmatprep.mubr.bf16.mxu0 0
  %3993 = vmatmul.mubr.bf16.gmra.mxu0 %v1180
  %v3994 = vpop.f32.mrf.mxu0
  %v3995 = vadd.f32 %v3464, %v3994
  %v3996 = vpop.f32.mrf.mxu0
  %v3997 = vadd.f32 %v3466, %v3996
  %v3998 = vpop.f32.mrf.mxu0
  %v3999 = vadd.f32 %v3468, %v3998
  %v4000 = vpop.f32.mrf.mxu0
  %v4001 = vadd.f32 %v3470, %v4000
  %4002 = vmatprep.mubr.bf16.mxu0 0
  %4003 = vmatmul.mubr.bf16.gmra.mxu0 %v1181
  %v4004 = vpop.f32.mrf.mxu0
  %v4005 = vadd.f32 %v3474, %v4004
  %v4006 = vpop.f32.mrf.mxu0
  %v4007 = vadd.f32 %v3476, %v4006
  %v4008 = vpop.f32.mrf.mxu0
  %v4009 = vadd.f32 %v3478, %v4008
  %v4010 = vpop.f32.mrf.mxu0
  %v4011 = vadd.f32 %v3480, %v4010
  %4012 = vmatprep.mubr.bf16.mxu0 0
  %4013 = vmatmul.mubr.bf16.gmra.mxu0 %v1182
  %v4014 = vpop.f32.mrf.mxu0
  %v4015 = vadd.f32 %v3484, %v4014
  %v4016 = vpop.f32.mrf.mxu0
  %v4017 = vadd.f32 %v3486, %v4016
  %v4018 = vpop.f32.mrf.mxu0
  %v4019 = vadd.f32 %v3488, %v4018
  %v4020 = vpop.f32.mrf.mxu0
  %v4021 = vadd.f32 %v3490, %v4020
  %4022 = vmatprep.mubr.bf16.mxu0 0
  %4023 = vmatmul.mubr.bf16.gmra.mxu0 %v1183
  %v4024 = vpop.f32.mrf.mxu0
  %v4025 = vadd.f32 %v3494, %v4024
  %v4026 = vpop.f32.mrf.mxu0
  %v4027 = vadd.f32 %v3496, %v4026
  %v4028 = vpop.f32.mrf.mxu0
  %v4029 = vadd.f32 %v3498, %v4028
  %v4030 = vpop.f32.mrf.mxu0
  %v4031 = vadd.f32 %v3500, %v4030
  %4032 = vdwg.mxu0
  %4033 = vmatprep.subr.bf16.mxu0 %v3878
  %4034 = vmatpush1.bf16.msra.mxu0 %v3877
  %4035 = vmatprep.subr.bf16.mxu0 %v3873
  %4036 = vmatpush1.bf16.msra.mxu0 %v3872
  %4037 = vmatprep.subr.bf16.mxu0 %v3868
  %4038 = vmatpush1.bf16.msra.mxu0 %v3867
  %4039 = vmatprep.subr.bf16.mxu0 %v3863
  %4040 = vmatpush1.bf16.msra.mxu0 %v3862
  %4041 = vmatprep.subr.bf16.mxu0 %v3858
  %4042 = vmatpush1.bf16.msra.mxu0 %v3857
  %4043 = vmatprep.subr.bf16.mxu0 %v3853
  %4044 = vmatpush1.bf16.msra.mxu0 %v3852
  %4045 = vmatprep.subr.bf16.mxu0 %v3848
  %4046 = vmatpush1.bf16.msra.mxu0 %v3847
  %4047 = vmatprep.subr.bf16.mxu0 %v3843
  %4048 = vmatpush1.bf16.msra.mxu0 %v3842
  %4049 = vmatprep.subr.bf16.mxu0 0
  %4050 = vmatpush2.bf16.msra.mxu0 0
  %4051 = vmatprep.subr.bf16.mxu0 0
  %4052 = vmatpush2.bf16.msra.mxu0 0
  %4053 = vmatprep.subr.bf16.mxu0 0
  %4054 = vmatpush2.bf16.msra.mxu0 0
  %4055 = vmatprep.subr.bf16.mxu0 0
  %4056 = vmatpush2.bf16.msra.mxu0 0
  %4057 = vmatprep.subr.bf16.mxu0 0
  %4058 = vmatpush2.bf16.msra.mxu0 0
  %4059 = vmatprep.subr.bf16.mxu0 0
  %4060 = vmatpush2.bf16.msra.mxu0 0
  %4061 = vmatprep.subr.bf16.mxu0 0
  %4062 = vmatpush2.bf16.msra.mxu0 0
  %4063 = vmatprep.subr.bf16.mxu0 0
  %4064 = vmatpush2.bf16.msra.mxu0 0
  %4065 = vmatprep.mubr.bf16.mxu0 0
  %4066 = vmatmul.mubr.bf16.gmra.mxu0 %v1176
  %v4067 = vpop.f32.mrf.mxu0
  %v4068 = vadd.f32 %v3537, %v4067
  %v4069 = vpop.f32.mrf.mxu0
  %v4070 = vadd.f32 %v3539, %v4069
  %v4071 = vpop.f32.mrf.mxu0
  %v4072 = vadd.f32 %v3541, %v4071
  %v4073 = vpop.f32.mrf.mxu0
  %v4074 = vadd.f32 %v3543, %v4073
  %4075 = vmatprep.mubr.bf16.mxu0 0
  %4076 = vmatmul.mubr.bf16.gmra.mxu0 %v1177
  %v4077 = vpop.f32.mrf.mxu0
  %v4078 = vadd.f32 %v3547, %v4077
  %v4079 = vpop.f32.mrf.mxu0
  %v4080 = vadd.f32 %v3549, %v4079
  %v4081 = vpop.f32.mrf.mxu0
  %v4082 = vadd.f32 %v3551, %v4081
  %v4083 = vpop.f32.mrf.mxu0
  %v4084 = vadd.f32 %v3553, %v4083
  %4085 = vmatprep.mubr.bf16.mxu0 0
  %4086 = vmatmul.mubr.bf16.gmra.mxu0 %v1178
  %v4087 = vpop.f32.mrf.mxu0
  %v4088 = vadd.f32 %v3557, %v4087
  %v4089 = vpop.f32.mrf.mxu0
  %v4090 = vadd.f32 %v3559, %v4089
  %v4091 = vpop.f32.mrf.mxu0
  %v4092 = vadd.f32 %v3561, %v4091
  %v4093 = vpop.f32.mrf.mxu0
  %v4094 = vadd.f32 %v3563, %v4093
  %4095 = vmatprep.mubr.bf16.mxu0 0
  %4096 = vmatmul.mubr.bf16.gmra.mxu0 %v1179
  %v4097 = vpop.f32.mrf.mxu0
  %v4098 = vadd.f32 %v3567, %v4097
  %v4099 = vpop.f32.mrf.mxu0
  %v4100 = vadd.f32 %v3569, %v4099
  %v4101 = vpop.f32.mrf.mxu0
  %v4102 = vadd.f32 %v3571, %v4101
  %v4103 = vpop.f32.mrf.mxu0
  %v4104 = vadd.f32 %v3573, %v4103
  %4105 = vmatprep.mubr.bf16.mxu0 0
  %4106 = vmatmul.mubr.bf16.gmra.mxu0 %v1180
  %v4107 = vpop.f32.mrf.mxu0
  %v4108 = vadd.f32 %v3577, %v4107
  %v4109 = vpop.f32.mrf.mxu0
  %v4110 = vadd.f32 %v3579, %v4109
  %v4111 = vpop.f32.mrf.mxu0
  %v4112 = vadd.f32 %v3581, %v4111
  %v4113 = vpop.f32.mrf.mxu0
  %v4114 = vadd.f32 %v3583, %v4113
  %4115 = vmatprep.mubr.bf16.mxu0 0
  %4116 = vmatmul.mubr.bf16.gmra.mxu0 %v1181
  %v4117 = vpop.f32.mrf.mxu0
  %v4118 = vadd.f32 %v3587, %v4117
  %v4119 = vpop.f32.mrf.mxu0
  %v4120 = vadd.f32 %v3589, %v4119
  %v4121 = vpop.f32.mrf.mxu0
  %v4122 = vadd.f32 %v3591, %v4121
  %v4123 = vpop.f32.mrf.mxu0
  %v4124 = vadd.f32 %v3593, %v4123
  %4125 = vmatprep.mubr.bf16.mxu0 0
  %4126 = vmatmul.mubr.bf16.gmra.mxu0 %v1182
  %v4127 = vpop.f32.mrf.mxu0
  %v4128 = vadd.f32 %v3597, %v4127
  %v4129 = vpop.f32.mrf.mxu0
  %v4130 = vadd.f32 %v3599, %v4129
  %v4131 = vpop.f32.mrf.mxu0
  %v4132 = vadd.f32 %v3601, %v4131
  %v4133 = vpop.f32.mrf.mxu0
  %v4134 = vadd.f32 %v3603, %v4133
  %4135 = vmatprep.mubr.bf16.mxu0 0
  %4136 = vmatmul.mubr.bf16.gmra.mxu0 %v1183
  %v4137 = vpop.f32.mrf.mxu0
  %v4138 = vadd.f32 %v3607, %v4137
  %v4139 = vpop.f32.mrf.mxu0
  %v4140 = vadd.f32 %v3609, %v4139
  %v4141 = vpop.f32.mrf.mxu0
  %v4142 = vadd.f32 %v3611, %v4141
  %v4143 = vpop.f32.mrf.mxu0
  %v4144 = vadd.f32 %v3613, %v4143
  %4145 = vdwg.mxu0
  %4146 = vmatprep.subr.bf16.mxu0 0
  %4147 = vmatpush1.bf16.msra.mxu0 %v3879
  %4148 = vmatprep.subr.bf16.mxu0 0
  %4149 = vmatpush1.bf16.msra.mxu0 %v3874
  %4150 = vmatprep.subr.bf16.mxu0 0
  %4151 = vmatpush1.bf16.msra.mxu0 %v3869
  %4152 = vmatprep.subr.bf16.mxu0 0
  %4153 = vmatpush1.bf16.msra.mxu0 %v3864
  %4154 = vmatprep.subr.bf16.mxu0 0
  %4155 = vmatpush1.bf16.msra.mxu0 %v3859
  %4156 = vmatprep.subr.bf16.mxu0 0
  %4157 = vmatpush1.bf16.msra.mxu0 %v3854
  %4158 = vmatprep.subr.bf16.mxu0 0
  %4159 = vmatpush1.bf16.msra.mxu0 %v3849
  %4160 = vmatprep.subr.bf16.mxu0 0
  %4161 = vmatpush1.bf16.msra.mxu0 %v3844
  %4162 = vmatprep.subr.bf16.mxu0 0
  %4163 = vmatpush2.bf16.msra.mxu0 0
  %4164 = vmatprep.subr.bf16.mxu0 0
  %4165 = vmatpush2.bf16.msra.mxu0 0
  %4166 = vmatprep.subr.bf16.mxu0 0
  %4167 = vmatpush2.bf16.msra.mxu0 0
  %4168 = vmatprep.subr.bf16.mxu0 0
  %4169 = vmatpush2.bf16.msra.mxu0 0
  %4170 = vmatprep.subr.bf16.mxu0 0
  %4171 = vmatpush2.bf16.msra.mxu0 0
  %4172 = vmatprep.subr.bf16.mxu0 0
  %4173 = vmatpush2.bf16.msra.mxu0 0
  %4174 = vmatprep.subr.bf16.mxu0 0
  %4175 = vmatpush2.bf16.msra.mxu0 0
  %4176 = vmatprep.subr.bf16.mxu0 0
  %4177 = vmatpush2.bf16.msra.mxu0 0
  %4178 = vmatprep.mubr.bf16.mxu0 0
  %4179 = vmatmul.mubr.bf16.gmra.mxu0 %v1176
  %v4180 = vpop.f32.mrf.mxu0
  %v4181 = vadd.f32 %v3650, %v4180
  %v4182 = vpop.f32.mrf.mxu0
  %v4183 = vpop.f32.mrf.mxu0
  %v4184 = vadd.f32 %v3653, %v4183
  %v4185 = vpop.f32.mrf.mxu0
  %4186 = vmatprep.mubr.bf16.mxu0 0
  %4187 = vmatmul.mubr.bf16.gmra.mxu0 %v1177
  %v4188 = vpop.f32.mrf.mxu0
  %v4189 = vadd.f32 %v3658, %v4188
  %v4190 = vpop.f32.mrf.mxu0
  %v4191 = vpop.f32.mrf.mxu0
  %v4192 = vadd.f32 %v3661, %v4191
  %v4193 = vpop.f32.mrf.mxu0
  %4194 = vmatprep.mubr.bf16.mxu0 0
  %4195 = vmatmul.mubr.bf16.gmra.mxu0 %v1178
  %v4196 = vpop.f32.mrf.mxu0
  %v4197 = vadd.f32 %v3666, %v4196
  %v4198 = vpop.f32.mrf.mxu0
  %v4199 = vpop.f32.mrf.mxu0
  %v4200 = vadd.f32 %v3669, %v4199
  %v4201 = vpop.f32.mrf.mxu0
  %4202 = vmatprep.mubr.bf16.mxu0 0
  %4203 = vmatmul.mubr.bf16.gmra.mxu0 %v1179
  %v4204 = vpop.f32.mrf.mxu0
  %v4205 = vadd.f32 %v3674, %v4204
  %v4206 = vpop.f32.mrf.mxu0
  %v4207 = vpop.f32.mrf.mxu0
  %v4208 = vadd.f32 %v3677, %v4207
  %v4209 = vpop.f32.mrf.mxu0
  %4210 = vmatprep.mubr.bf16.mxu0 0
  %4211 = vmatmul.mubr.bf16.gmra.mxu0 %v1180
  %v4212 = vpop.f32.mrf.mxu0
  %v4213 = vadd.f32 %v3682, %v4212
  %v4214 = vpop.f32.mrf.mxu0
  %v4215 = vpop.f32.mrf.mxu0
  %v4216 = vadd.f32 %v3685, %v4215
  %v4217 = vpop.f32.mrf.mxu0
  %4218 = vmatprep.mubr.bf16.mxu0 0
  %4219 = vmatmul.mubr.bf16.gmra.mxu0 %v1181
  %v4220 = vpop.f32.mrf.mxu0
  %v4221 = vadd.f32 %v3690, %v4220
  %v4222 = vpop.f32.mrf.mxu0
  %v4223 = vpop.f32.mrf.mxu0
  %v4224 = vadd.f32 %v3693, %v4223
  %v4225 = vpop.f32.mrf.mxu0
  %4226 = vmatprep.mubr.bf16.mxu0 0
  %4227 = vmatmul.mubr.bf16.gmra.mxu0 %v1182
  %v4228 = vpop.f32.mrf.mxu0
  %v4229 = vadd.f32 %v3698, %v4228
  %v4230 = vpop.f32.mrf.mxu0
  %v4231 = vpop.f32.mrf.mxu0
  %v4232 = vadd.f32 %v3701, %v4231
  %v4233 = vpop.f32.mrf.mxu0
  %4234 = vmatprep.mubr.bf16.mxu0 0
  %4235 = vmatmul.mubr.bf16.gmra.mxu0 %v1183
  %v4236 = vpop.f32.mrf.mxu0
  %v4237 = vadd.f32 %v3706, %v4236
  %v4238 = vpop.f32.mrf.mxu0
  %v4239 = vpop.f32.mrf.mxu0
  %v4240 = vadd.f32 %v3709, %v4239
  %v4241 = vpop.f32.mrf.mxu0
  %4242 = vdwg.mxu0
  %v4243 = vld [vmem:[%s16] sm:$0x1f]
  %v4245 = vlaneseq
  %v4246 = vshrl.u32 %v4245, 7
  %v4247 = vsub.s32 0, %v4246
  %v4248 = vrot.slane %v4243, %v4247
  %v4249 = vlaneseq
  %v4250 = vshrl.u32 %v4249, 7
  %v4251 = vsub.s32 1, %v4250
  %v4252 = vrot.slane %v4243, %v4251
  %v4253 = vlaneseq
  %v4254 = vshrl.u32 %v4253, 7
  %v4255 = vsub.s32 2, %v4254
  %v4256 = vrot.slane %v4243, %v4255
  %v4257 = vlaneseq
  %v4258 = vshrl.u32 %v4257, 7
  %v4259 = vsub.s32 3, %v4258
  %v4260 = vrot.slane %v4243, %v4259
  %v4261 = vlaneseq
  %v4262 = vshrl.u32 %v4261, 7
  %v4263 = vsub.s32 4, %v4262
  %v4264 = vrot.slane %v4243, %v4263
  %v4270 = vmul.f32 %v3955, %v4248
  %v4271 = vmul.f32 %v3957, %v4252
  %v4272 = vmul.f32 %v4068, %v4256
  %v4273 = vmul.f32 %v4070, %v4260
  %v4274 = vmul.f32 %v4181, %v4264
  %v4275 = vmul.f32 %v3959, %v4248
  %v4276 = vmul.f32 %v3961, %v4252
  %v4277 = vmul.f32 %v4072, %v4256
  %v4278 = vmul.f32 %v4074, %v4260
  %v4279 = vmul.f32 %v4184, %v4264
  %v4280 = vmul.f32 %v3965, %v4248
  %v4281 = vmul.f32 %v3967, %v4252
  %v4282 = vmul.f32 %v4078, %v4256
  %v4283 = vmul.f32 %v4080, %v4260
  %v4284 = vmul.f32 %v4189, %v4264
  %v4285 = vmul.f32 %v3969, %v4248
  %v4286 = vmul.f32 %v3971, %v4252
  %v4287 = vmul.f32 %v4082, %v4256
  %v4288 = vmul.f32 %v4084, %v4260
  %v4289 = vmul.f32 %v4192, %v4264
  %v4290 = vmul.f32 %v3975, %v4248
  %v4291 = vmul.f32 %v3977, %v4252
  %v4292 = vmul.f32 %v4088, %v4256
  %v4293 = vmul.f32 %v4090, %v4260
  %v4294 = vmul.f32 %v4197, %v4264
  %v4295 = vmul.f32 %v3979, %v4248
  %v4296 = vmul.f32 %v3981, %v4252
  %v4297 = vmul.f32 %v4092, %v4256
  %v4298 = vmul.f32 %v4094, %v4260
  %v4299 = vmul.f32 %v4200, %v4264
  %v4300 = vmul.f32 %v3985, %v4248
  %v4301 = vmul.f32 %v3987, %v4252
  %v4302 = vmul.f32 %v4098, %v4256
  %v4303 = vmul.f32 %v4100, %v4260
  %v4304 = vmul.f32 %v4205, %v4264
  %v4305 = vmul.f32 %v3989, %v4248
  %v4306 = vmul.f32 %v3991, %v4252
  %v4307 = vmul.f32 %v4102, %v4256
  %v4308 = vmul.f32 %v4104, %v4260
  %v4309 = vmul.f32 %v4208, %v4264
  %v4310 = vmul.f32 %v3995, %v4248
  %v4311 = vmul.f32 %v3997, %v4252
  %v4312 = vmul.f32 %v4108, %v4256
  %v4313 = vmul.f32 %v4110, %v4260
  %v4314 = vmul.f32 %v4213, %v4264
  %v4315 = vmul.f32 %v3999, %v4248
  %v4316 = vmul.f32 %v4001, %v4252
  %v4317 = vmul.f32 %v4112, %v4256
  %v4318 = vmul.f32 %v4114, %v4260
  %v4319 = vmul.f32 %v4216, %v4264
  %v4320 = vmul.f32 %v4005, %v4248
  %v4321 = vmul.f32 %v4007, %v4252
  %v4322 = vmul.f32 %v4118, %v4256
  %v4323 = vmul.f32 %v4120, %v4260
  %v4324 = vmul.f32 %v4221, %v4264
  %v4325 = vmul.f32 %v4009, %v4248
  %v4326 = vmul.f32 %v4011, %v4252
  %v4327 = vmul.f32 %v4122, %v4256
  %v4328 = vmul.f32 %v4124, %v4260
  %v4329 = vmul.f32 %v4224, %v4264
  %v4330 = vmul.f32 %v4015, %v4248
  %v4331 = vmul.f32 %v4017, %v4252
  %v4332 = vmul.f32 %v4128, %v4256
  %v4333 = vmul.f32 %v4130, %v4260
  %v4334 = vmul.f32 %v4229, %v4264
  %v4335 = vmul.f32 %v4019, %v4248
  %v4336 = vmul.f32 %v4021, %v4252
  %v4337 = vmul.f32 %v4132, %v4256
  %v4338 = vmul.f32 %v4134, %v4260
  %v4339 = vmul.f32 %v4232, %v4264
  %v4340 = vmul.f32 %v4025, %v4248
  %v4341 = vmul.f32 %v4027, %v4252
  %v4342 = vmul.f32 %v4138, %v4256
  %v4343 = vmul.f32 %v4140, %v4260
  %v4344 = vmul.f32 %v4237, %v4264
  %v4345 = vmul.f32 %v4029, %v4248
  %v4346 = vmul.f32 %v4031, %v4252
  %v4347 = vmul.f32 %v4142, %v4256
  %v4348 = vmul.f32 %v4144, %v4260
  %v4349 = vmul.f32 %v4240, %v4264
  %v4350 = vld [vmem:[%s17] sm:$0x1f]
  %v4352 = vlaneseq
  %v4353 = vshrl.u32 %v4352, 7
  %v4354 = vsub.s32 0, %v4353
  %v4355 = vrot.slane %v4350, %v4354
  %v4356 = vlaneseq
  %v4357 = vshrl.u32 %v4356, 7
  %v4358 = vsub.s32 1, %v4357
  %v4359 = vrot.slane %v4350, %v4358
  %v4360 = vlaneseq
  %v4361 = vshrl.u32 %v4360, 7
  %v4362 = vsub.s32 2, %v4361
  %v4363 = vrot.slane %v4350, %v4362
  %v4364 = vlaneseq
  %v4365 = vshrl.u32 %v4364, 7
  %v4366 = vsub.s32 3, %v4365
  %v4367 = vrot.slane %v4350, %v4366
  %v4368 = vlaneseq
  %v4369 = vshrl.u32 %v4368, 7
  %v4370 = vsub.s32 4, %v4369
  %v4371 = vrot.slane %v4350, %v4370
  %v4377 = vadd.f32 %v4270, %v4355
  %v4378 = vadd.f32 %v4271, %v4359
  %v4379 = vadd.f32 %v4272, %v4363
  %v4380 = vadd.f32 %v4273, %v4367
  %v4381 = vadd.f32 %v4274, %v4371
  %v4382 = vadd.f32 %v4275, %v4355
  %v4383 = vadd.f32 %v4276, %v4359
  %v4384 = vadd.f32 %v4277, %v4363
  %v4385 = vadd.f32 %v4278, %v4367
  %v4386 = vadd.f32 %v4279, %v4371
  %v4387 = vadd.f32 %v4280, %v4355
  %v4388 = vadd.f32 %v4281, %v4359
  %v4389 = vadd.f32 %v4282, %v4363
  %v4390 = vadd.f32 %v4283, %v4367
  %v4391 = vadd.f32 %v4284, %v4371
  %v4392 = vadd.f32 %v4285, %v4355
  %v4393 = vadd.f32 %v4286, %v4359
  %v4394 = vadd.f32 %v4287, %v4363
  %v4395 = vadd.f32 %v4288, %v4367
  %v4396 = vadd.f32 %v4289, %v4371
  %v4397 = vadd.f32 %v4290, %v4355
  %v4398 = vadd.f32 %v4291, %v4359
  %v4399 = vadd.f32 %v4292, %v4363
  %v4400 = vadd.f32 %v4293, %v4367
  %v4401 = vadd.f32 %v4294, %v4371
  %v4402 = vadd.f32 %v4295, %v4355
  %v4403 = vadd.f32 %v4296, %v4359
  %v4404 = vadd.f32 %v4297, %v4363
  %v4405 = vadd.f32 %v4298, %v4367
  %v4406 = vadd.f32 %v4299, %v4371
  %v4407 = vadd.f32 %v4300, %v4355
  %v4408 = vadd.f32 %v4301, %v4359
  %v4409 = vadd.f32 %v4302, %v4363
  %v4410 = vadd.f32 %v4303, %v4367
  %v4411 = vadd.f32 %v4304, %v4371
  %v4412 = vadd.f32 %v4305, %v4355
  %v4413 = vadd.f32 %v4306, %v4359
  %v4414 = vadd.f32 %v4307, %v4363
  %v4415 = vadd.f32 %v4308, %v4367
  %v4416 = vadd.f32 %v4309, %v4371
  %v4417 = vadd.f32 %v4310, %v4355
  %v4418 = vadd.f32 %v4311, %v4359
  %v4419 = vadd.f32 %v4312, %v4363
  %v4420 = vadd.f32 %v4313, %v4367
  %v4421 = vadd.f32 %v4314, %v4371
  %v4422 = vadd.f32 %v4315, %v4355
  %v4423 = vadd.f32 %v4316, %v4359
  %v4424 = vadd.f32 %v4317, %v4363
  %v4425 = vadd.f32 %v4318, %v4367
  %v4426 = vadd.f32 %v4319, %v4371
  %v4427 = vadd.f32 %v4320, %v4355
  %v4428 = vadd.f32 %v4321, %v4359
  %v4429 = vadd.f32 %v4322, %v4363
  %v4430 = vadd.f32 %v4323, %v4367
  %v4431 = vadd.f32 %v4324, %v4371
  %v4432 = vadd.f32 %v4325, %v4355
  %v4433 = vadd.f32 %v4326, %v4359
  %v4434 = vadd.f32 %v4327, %v4363
  %v4435 = vadd.f32 %v4328, %v4367
  %v4436 = vadd.f32 %v4329, %v4371
  %v4437 = vadd.f32 %v4330, %v4355
  %v4438 = vadd.f32 %v4331, %v4359
  %v4439 = vadd.f32 %v4332, %v4363
  %v4440 = vadd.f32 %v4333, %v4367
  %v4441 = vadd.f32 %v4334, %v4371
  %v4442 = vadd.f32 %v4335, %v4355
  %v4443 = vadd.f32 %v4336, %v4359
  %v4444 = vadd.f32 %v4337, %v4363
  %v4445 = vadd.f32 %v4338, %v4367
  %v4446 = vadd.f32 %v4339, %v4371
  %v4447 = vadd.f32 %v4340, %v4355
  %v4448 = vadd.f32 %v4341, %v4359
  %v4449 = vadd.f32 %v4342, %v4363
  %v4450 = vadd.f32 %v4343, %v4367
  %v4451 = vadd.f32 %v4344, %v4371
  %v4452 = vadd.f32 %v4345, %v4355
  %v4453 = vadd.f32 %v4346, %v4359
  %v4454 = vadd.f32 %v4347, %v4363
  %v4455 = vadd.f32 %v4348, %v4367
  %v4456 = vadd.f32 %v4349, %v4371
  %v4457 = vmax.f32 %v4377, 0.0
  %v4458 = vmax.f32 %v4378, 0.0
  %v4459 = vmax.f32 %v4379, 0.0
  %v4460 = vmax.f32 %v4380, 0.0
  %v4461 = vmax.f32 %v4381, 0.0
  %v4462 = vmax.f32 %v4382, 0.0
  %v4463 = vmax.f32 %v4383, 0.0
  %v4464 = vmax.f32 %v4384, 0.0
  %v4465 = vmax.f32 %v4385, 0.0
  %v4466 = vmax.f32 %v4386, 0.0
  %v4467 = vmax.f32 %v4387, 0.0
  %v4468 = vmax.f32 %v4388, 0.0
  %v4469 = vmax.f32 %v4389, 0.0
  %v4470 = vmax.f32 %v4390, 0.0
  %v4471 = vmax.f32 %v4391, 0.0
  %v4472 = vmax.f32 %v4392, 0.0
  %v4473 = vmax.f32 %v4393, 0.0
  %v4474 = vmax.f32 %v4394, 0.0
  %v4475 = vmax.f32 %v4395, 0.0
  %v4476 = vmax.f32 %v4396, 0.0
  %v4477 = vmax.f32 %v4397, 0.0
  %v4478 = vmax.f32 %v4398, 0.0
  %v4479 = vmax.f32 %v4399, 0.0
  %v4480 = vmax.f32 %v4400, 0.0
  %v4481 = vmax.f32 %v4401, 0.0
  %v4482 = vmax.f32 %v4402, 0.0
  %v4483 = vmax.f32 %v4403, 0.0
  %v4484 = vmax.f32 %v4404, 0.0
  %v4485 = vmax.f32 %v4405, 0.0
  %v4486 = vmax.f32 %v4406, 0.0
  %v4487 = vmax.f32 %v4407, 0.0
  %v4488 = vmax.f32 %v4408, 0.0
  %v4489 = vmax.f32 %v4409, 0.0
  %v4490 = vmax.f32 %v4410, 0.0
  %v4491 = vmax.f32 %v4411, 0.0
  %v4492 = vmax.f32 %v4412, 0.0
  %v4493 = vmax.f32 %v4413, 0.0
  %v4494 = vmax.f32 %v4414, 0.0
  %v4495 = vmax.f32 %v4415, 0.0
  %v4496 = vmax.f32 %v4416, 0.0
  %v4497 = vmax.f32 %v4417, 0.0
  %v4498 = vmax.f32 %v4418, 0.0
  %v4499 = vmax.f32 %v4419, 0.0
  %v4500 = vmax.f32 %v4420, 0.0
  %v4501 = vmax.f32 %v4421, 0.0
  %v4502 = vmax.f32 %v4422, 0.0
  %v4503 = vmax.f32 %v4423, 0.0
  %v4504 = vmax.f32 %v4424, 0.0
  %v4505 = vmax.f32 %v4425, 0.0
  %v4506 = vmax.f32 %v4426, 0.0
  %v4507 = vmax.f32 %v4427, 0.0
  %v4508 = vmax.f32 %v4428, 0.0
  %v4509 = vmax.f32 %v4429, 0.0
  %v4510 = vmax.f32 %v4430, 0.0
  %v4511 = vmax.f32 %v4431, 0.0
  %v4512 = vmax.f32 %v4432, 0.0
  %v4513 = vmax.f32 %v4433, 0.0
  %v4514 = vmax.f32 %v4434, 0.0
  %v4515 = vmax.f32 %v4435, 0.0
  %v4516 = vmax.f32 %v4436, 0.0
  %v4517 = vmax.f32 %v4437, 0.0
  %v4518 = vmax.f32 %v4438, 0.0
  %v4519 = vmax.f32 %v4439, 0.0
  %v4520 = vmax.f32 %v4440, 0.0
  %v4521 = vmax.f32 %v4441, 0.0
  %v4522 = vmax.f32 %v4442, 0.0
  %v4523 = vmax.f32 %v4443, 0.0
  %v4524 = vmax.f32 %v4444, 0.0
  %v4525 = vmax.f32 %v4445, 0.0
  %v4526 = vmax.f32 %v4446, 0.0
  %v4527 = vmax.f32 %v4447, 0.0
  %v4528 = vmax.f32 %v4448, 0.0
  %v4529 = vmax.f32 %v4449, 0.0
  %v4530 = vmax.f32 %v4450, 0.0
  %v4531 = vmax.f32 %v4451, 0.0
  %v4532 = vmax.f32 %v4452, 0.0
  %v4533 = vmax.f32 %v4453, 0.0
  %v4534 = vmax.f32 %v4454, 0.0
  %v4535 = vmax.f32 %v4455, 0.0
  %v4536 = vmax.f32 %v4456, 0.0
  %v4537 = vadd.f32 %v140, %v4457
  %v4538 = vadd.f32 %v141, %v4458
  %v4539 = vadd.f32 %v142, %v4459
  %v4540 = vadd.f32 %v143, %v4460
  %v4541 = vadd.f32 %v144, %v4461
  %v4542 = vadd.f32 %v145, %v4462
  %v4543 = vadd.f32 %v146, %v4463
  %v4544 = vadd.f32 %v147, %v4464
  %v4545 = vadd.f32 %v148, %v4465
  %v4546 = vadd.f32 %v149, %v4466
  %v4547 = vadd.f32 %v150, %v4467
  %v4548 = vadd.f32 %v151, %v4468
  %v4549 = vadd.f32 %v152, %v4469
  %v4550 = vadd.f32 %v153, %v4470
  %v4551 = vadd.f32 %v154, %v4471
  %v4552 = vadd.f32 %v155, %v4472
  %v4553 = vadd.f32 %v156, %v4473
  %v4554 = vadd.f32 %v157, %v4474
  %v4555 = vadd.f32 %v158, %v4475
  %v4556 = vadd.f32 %v159, %v4476
  %v4557 = vadd.f32 %v160, %v4477
  %v4558 = vadd.f32 %v161, %v4478
  %v4559 = vadd.f32 %v162, %v4479
  %v4560 = vadd.f32 %v163, %v4480
  %v4561 = vadd.f32 %v164, %v4481
  %v4562 = vadd.f32 %v165, %v4482
  %v4563 = vadd.f32 %v166, %v4483
  %v4564 = vadd.f32 %v167, %v4484
  %v4565 = vadd.f32 %v168, %v4485
  %v4566 = vadd.f32 %v169, %v4486
  %v4567 = vadd.f32 %v170, %v4487
  %v4568 = vadd.f32 %v171, %v4488
  %v4569 = vadd.f32 %v172, %v4489
  %v4570 = vadd.f32 %v173, %v4490
  %v4571 = vadd.f32 %v174, %v4491
  %v4572 = vadd.f32 %v175, %v4492
  %v4573 = vadd.f32 %v176, %v4493
  %v4574 = vadd.f32 %v177, %v4494
  %v4575 = vadd.f32 %v178, %v4495
  %v4576 = vadd.f32 %v179, %v4496
  %v4577 = vadd.f32 %v180, %v4497
  %v4578 = vadd.f32 %v181, %v4498
  %v4579 = vadd.f32 %v182, %v4499
  %v4580 = vadd.f32 %v183, %v4500
  %v4581 = vadd.f32 %v184, %v4501
  %v4582 = vadd.f32 %v185, %v4502
  %v4583 = vadd.f32 %v186, %v4503
  %v4584 = vadd.f32 %v187, %v4504
  %v4585 = vadd.f32 %v188, %v4505
  %v4586 = vadd.f32 %v189, %v4506
  %v4587 = vadd.f32 %v190, %v4507
  %v4588 = vadd.f32 %v191, %v4508
  %v4589 = vadd.f32 %v192, %v4509
  %v4590 = vadd.f32 %v193, %v4510
  %v4591 = vadd.f32 %v194, %v4511
  %v4592 = vadd.f32 %v195, %v4512
  %v4593 = vadd.f32 %v196, %v4513
  %v4594 = vadd.f32 %v197, %v4514
  %v4595 = vadd.f32 %v198, %v4515
  %v4596 = vadd.f32 %v199, %v4516
  %v4597 = vadd.f32 %v200, %v4517
  %v4598 = vadd.f32 %v201, %v4518
  %v4599 = vadd.f32 %v202, %v4519
  %v4600 = vadd.f32 %v203, %v4520
  %v4601 = vadd.f32 %v204, %v4521
  %v4602 = vadd.f32 %v205, %v4522
  %v4603 = vadd.f32 %v206, %v4523
  %v4604 = vadd.f32 %v207, %v4524
  %v4605 = vadd.f32 %v208, %v4525
  %v4606 = vadd.f32 %v209, %v4526
  %v4607 = vadd.f32 %v210, %v4527
  %v4608 = vadd.f32 %v211, %v4528
  %v4609 = vadd.f32 %v212, %v4529
  %v4610 = vadd.f32 %v213, %v4530
  %v4611 = vadd.f32 %v214, %v4531
  %v4612 = vadd.f32 %v215, %v4532
  %v4613 = vadd.f32 %v216, %v4533
  %v4614 = vadd.f32 %v217, %v4534
  %v4615 = vadd.f32 %v218, %v4535
  %v4616 = vadd.f32 %v219, %v4536
  %4617 = vst [vmem:[%s18] sm:$0xff] %v4537
  %4618 = vst [vmem:[%s18 + $0x8] sm:$0xff] %v4538
  %4619 = vst [vmem:[%s18 + $0x10] sm:$0xff] %v4539
  %4620 = vst [vmem:[%s18 + $0x18] sm:$0xff] %v4540
  %4621 = vst.msk [vmem:[%s18 + $0x20] sm:$0xff] %vm692, %v4541
  %4622 = vst [vmem:[%s18 + $0x28] sm:$0xff] %v4542
  %4623 = vst [vmem:[%s18 + $0x30] sm:$0xff] %v4543
  %4624 = vst [vmem:[%s18 + $0x38] sm:$0xff] %v4544
  %4625 = vst [vmem:[%s18 + $0x40] sm:$0xff] %v4545
  %4626 = vst.msk [vmem:[%s18 + $0x48] sm:$0xff] %vm692, %v4546
  %4627 = vst [vmem:[%s18 + $0x50] sm:$0xff] %v4547
  %4628 = vst [vmem:[%s18 + $0x58] sm:$0xff] %v4548
  %4629 = vst [vmem:[%s18 + $0x60] sm:$0xff] %v4549
  %4630 = vst [vmem:[%s18 + $0x68] sm:$0xff] %v4550
  %4631 = vst.msk [vmem:[%s18 + $0x70] sm:$0xff] %vm692, %v4551
  %4632 = vst [vmem:[%s18 + $0x78] sm:$0xff] %v4552
  %4633 = vst [vmem:[%s18 + $0x80] sm:$0xff] %v4553
  %4634 = vst [vmem:[%s18 + $0x88] sm:$0xff] %v4554
  %4635 = vst [vmem:[%s18 + $0x90] sm:$0xff] %v4555
  %4636 = vst.msk [vmem:[%s18 + $0x98] sm:$0xff] %vm692, %v4556
  %4637 = vst [vmem:[%s18 + $0xa0] sm:$0xff] %v4557
  %4638 = vst [vmem:[%s18 + $0xa8] sm:$0xff] %v4558
  %4639 = vst [vmem:[%s18 + $0xb0] sm:$0xff] %v4559
  %4640 = vst [vmem:[%s18 + $0xb8] sm:$0xff] %v4560
  %4641 = vst.msk [vmem:[%s18 + $0xc0] sm:$0xff] %vm692, %v4561
  %4642 = vst [vmem:[%s18 + $0xc8] sm:$0xff] %v4562
  %4643 = vst [vmem:[%s18 + $0xd0] sm:$0xff] %v4563
  %4644 = vst [vmem:[%s18 + $0xd8] sm:$0xff] %v4564
  %4645 = vst [vmem:[%s18 + $0xe0] sm:$0xff] %v4565
  %4646 = vst.msk [vmem:[%s18 + $0xe8] sm:$0xff] %vm692, %v4566
  %4647 = vst [vmem:[%s18 + $0xf0] sm:$0xff] %v4567
  %4648 = vst [vmem:[%s18 + $0xf8] sm:$0xff] %v4568
  %4649 = vst [vmem:[%s18 + $0x100] sm:$0xff] %v4569
  %4650 = vst [vmem:[%s18 + $0x108] sm:$0xff] %v4570
  %4651 = vst.msk [vmem:[%s18 + $0x110] sm:$0xff] %vm692, %v4571
  %4652 = vst [vmem:[%s18 + $0x118] sm:$0xff] %v4572
  %4653 = vst [vmem:[%s18 + $0x120] sm:$0xff] %v4573
  %4654 = vst [vmem:[%s18 + $0x128] sm:$0xff] %v4574
  %4655 = vst [vmem:[%s18 + $0x130] sm:$0xff] %v4575
  %4656 = vst.msk [vmem:[%s18 + $0x138] sm:$0xff] %vm692, %v4576
  %4657 = vst [vmem:[%s18 + $0x140] sm:$0xff] %v4577
  %4658 = vst [vmem:[%s18 + $0x148] sm:$0xff] %v4578
  %4659 = vst [vmem:[%s18 + $0x150] sm:$0xff] %v4579
  %4660 = vst [vmem:[%s18 + $0x158] sm:$0xff] %v4580
  %4661 = vst.msk [vmem:[%s18 + $0x160] sm:$0xff] %vm692, %v4581
  %4662 = vst [vmem:[%s18 + $0x168] sm:$0xff] %v4582
  %4663 = vst [vmem:[%s18 + $0x170] sm:$0xff] %v4583
  %4664 = vst [vmem:[%s18 + $0x178] sm:$0xff] %v4584
  %4665 = vst [vmem:[%s18 + $0x180] sm:$0xff] %v4585
  %4666 = vst.msk [vmem:[%s18 + $0x188] sm:$0xff] %vm692, %v4586
  %4667 = vst [vmem:[%s18 + $0x190] sm:$0xff] %v4587
  %4668 = vst [vmem:[%s18 + $0x198] sm:$0xff] %v4588
  %4669 = vst [vmem:[%s18 + $0x1a0] sm:$0xff] %v4589
  %4670 = vst [vmem:[%s18 + $0x1a8] sm:$0xff] %v4590
  %4671 = vst.msk [vmem:[%s18 + $0x1b0] sm:$0xff] %vm692, %v4591
  %4672 = vst [vmem:[%s18 + $0x1b8] sm:$0xff] %v4592
  %4673 = vst [vmem:[%s18 + $0x1c0] sm:$0xff] %v4593
  %4674 = vst [vmem:[%s18 + $0x1c8] sm:$0xff] %v4594
  %4675 = vst [vmem:[%s18 + $0x1d0] sm:$0xff] %v4595
  %4676 = vst.msk [vmem:[%s18 + $0x1d8] sm:$0xff] %vm692, %v4596
  %4677 = vst [vmem:[%s18 + $0x1e0] sm:$0xff] %v4597
  %4678 = vst [vmem:[%s18 + $0x1e8] sm:$0xff] %v4598
  %4679 = vst [vmem:[%s18 + $0x1f0] sm:$0xff] %v4599
  %4680 = vst [vmem:[%s18 + $0x1f8] sm:$0xff] %v4600
  %4681 = vst.msk [vmem:[%s18 + $0x200] sm:$0xff] %vm692, %v4601
  %4682 = vst [vmem:[%s18 + $0x208] sm:$0xff] %v4602
  %4683 = vst [vmem:[%s18 + $0x210] sm:$0xff] %v4603
  %4684 = vst [vmem:[%s18 + $0x218] sm:$0xff] %v4604
  %4685 = vst [vmem:[%s18 + $0x220] sm:$0xff] %v4605
  %4686 = vst.msk [vmem:[%s18 + $0x228] sm:$0xff] %vm692, %v4606
  %4687 = vst [vmem:[%s18 + $0x230] sm:$0xff] %v4607
  %4688 = vst [vmem:[%s18 + $0x238] sm:$0xff] %v4608
  %4689 = vst [vmem:[%s18 + $0x240] sm:$0xff] %v4609
  %4690 = vst [vmem:[%s18 + $0x248] sm:$0xff] %v4610
  %4691 = vst.msk [vmem:[%s18 + $0x250] sm:$0xff] %vm692, %v4611
  %4692 = vst [vmem:[%s18 + $0x258] sm:$0xff] %v4612
  %4693 = vst [vmem:[%s18 + $0x260] sm:$0xff] %v4613
  %4694 = vst [vmem:[%s18 + $0x268] sm:$0xff] %v4614
  %4695 = vst [vmem:[%s18 + $0x270] sm:$0xff] %v4615
  %4696 = vst.msk [vmem:[%s18 + $0x278] sm:$0xff] %vm692, %v4616
  // Predicated region
  $region74: #{tpu_custom_call.1} parent=0 // pred_check
    _
  $region75: #{tpu_custom_call.1} parent=0 // pred_check_branch
    %4698 = sbr.rel (0) target = $region77
  $region76: #{tpu_custom_call.1} parent=0 // pred_region
    _
  $region77: #{tpu_custom_call.1} parent=0 // pred_fallthru
    _
  // Predicated region
  $region78: #{tpu_custom_call.1} parent=0 // pred_check
    _
  $region79: #{tpu_custom_call.1} parent=0 // pred_check_branch
    %4700 = sbr.rel (0) target = $region81
  $region80: #{tpu_custom_call.1} parent=0 // pred_region
    _
  $region81: #{tpu_custom_call.1} parent=0 // pred_fallthru
    _

</llo_original>
